<compile_context>
chip_gen: v7x
topology: tpu7x:2x2x1
jax: 0.10.0
libtpu: 0.0.40
codegen_flags: <defaults>
</compile_context>

<pallas_src>
import math

import jax
import jax.numpy as jnp
from jax.experimental import pallas as pl
from jax.experimental.pallas import tpu as pltpu


def _round_up(x, m):
    return ((x + m - 1) // m) * m


def _vmem_capacity_bytes():
    try:
        info = pltpu.get_tpu_info()
        cap = getattr(info, "vmem_capacity_bytes", None)
        if cap:
            return int(cap)
    except Exception:
        pass
    return 64 * 1024 * 1024  # conservative default = v7x per-core VMEM


def _mxu_row_align():
    try:
        kind = jax.devices()[0].device_kind.lower()
    except Exception:
        kind = ""
    return 128 if "v5" in kind else 256  # v5e MXU rows are 128, v6e/v7x 256


def _choose_query_tile(N, M, C, H, c, vmem_bytes):
    """Pick the query tile TN (and padded N) from a padding-aware VMEM model.

    Physical VMEM bytes: the last dim of a tile pads to a multiple of 128
    lanes, the second-to-last to the sublane packing of its dtype (8 for f32,
    16 for bf16); pipelined inputs/outputs are double-buffered.
    """
    budget = int(vmem_bytes * 0.70)  # headroom for compiler scratch / spills
    # Per-step costs independent of TN (k/v tiles, resident weights).
    fixed = (
        2 * 2 * H * _round_up(M, 16) * _round_up(c, 128) * 2      # k, v bf16, x2 buf
        + _round_up(H * c, 16) * _round_up(C, 128) * 2            # wo^T bf16
        + 3 * 8 * _round_up(C, 128) * 4                           # bo / ln_g / ln_b
    )
    # Costs proportional to TN (per query row).
    per_row = (
        2 * _round_up(C, 16) * _round_up(M, 128) * 2              # pos tile bf16, x2 buf
        + _round_up(C, 8) * _round_up(M, 128) * 4                 # f32 RPE product temp
        + 2 * H * (_round_up(c, 128) + _round_up(C, 128)) * 2     # q, qp bf16, x2 buf
        + 2 * 2 * _round_up(C, 128) * 4                           # x, out f32, x2 buf
        + 2 * H * _round_up(M, 128) * 4                           # probs f32, x2 buf
    )
    max_rows = max(8, (budget - fixed) // per_row)
    if max_rows >= N:
        return N, N
    align = _mxu_row_align()
    if max_rows >= align:
        tn = (max_rows // align) * align
    else:
        tn = max(16, (max_rows // 16) * 16)
    tn = min(tn, max(16, max_rows))
    n_pad = _round_up(N, tn)
    return tn, n_pad


# ---------------------------------------------------------------------------
# Fused kernel: RPE multi-head attention + output projection + residual + LN.
# Grid = (B, N_pad // TN); one step handles all heads of one query tile.
# ---------------------------------------------------------------------------
def _rpe_attention_layer_kernel(q_ref, k_ref, v_ref, qp_ref, pos_ref, x_ref,
                                wo_ref, bo_ref, g_ref, beta_ref,
                                out_ref, probs_ref):
    num_heads = q_ref.shape[1]
    d_head = q_ref.shape[3]
    inv_sqrt_d = 1.0 / math.sqrt(float(d_head))

    pos = pos_ref[0]                       # (TN, C, M) bf16: raw position tile
    acc = x_ref[0] + bo_ref[...]           # (TN, C) f32: residual + output bias

    # H is small and static -> unrolled; the big pos tile is live either way.
    for h in range(num_heads):
        q_h = q_ref[0, h]                  # (TN, c) bf16
        k_h = k_ref[0, h]                  # (M,  c) bf16
        v_h = v_ref[0, h]                  # (M,  c) bf16
        qp_h = qp_ref[0, h]                # (TN, C) bf16  (q folded through wp)

        # Dot-product term on the MXU: q . k^T  -> (TN, M), f32 accumulate.
        s_e = jax.lax.dot_general(
            q_h, k_h, (((1,), (1,)), ((), ())),
            preferred_element_type=jnp.float32)

        # RPE term on the VPU: sum_C qp[n, C] * pos[n, C, m].  C sits on the
        # sublane axis and M on lanes, so the reduce is vreg adds plus a short
        # sublane tree — no per-row MXU weight reloads, no per-output XLU
        # cross-lane reduction.  Runs in the shadow of the pos-tile DMA.
        s_p = jnp.sum(pos * qp_h[:, :, None], axis=1, dtype=jnp.float32)

        scores = (s_e + s_p) * inv_sqrt_d
        # NOTE: proj_p's bias contributes a term constant along the key axis,
        # which cancels in the softmax below, so it is omitted.
        # TODO(synk): key_weights / key_masks / attention_factors / dropout and
        # the use_grad (proj_g / embed_gk) branch default to None/False in
        # RPEAttentionLayer; only that default path is implemented.

        # Numerically stable softmax over the key axis, fp32 (v5e-safe).
        s_max = jnp.max(scores, axis=-1, keepdims=True)
        s_exp = jnp.exp(scores - s_max)
        s_sum = jnp.sum(s_exp, axis=-1, keepdims=True)
        probs = s_exp * (1.0 / s_sum)                 # exact f32 probabilities
        probs_ref[0, h] = probs.astype(probs_ref.dtype)

        # probs @ v on the MXU (bf16 in, f32 accumulate) -> (TN, c).
        o_h = jax.lax.dot_general(
            probs.astype(jnp.bfloat16), v_h, (((1,), (0,)), ((), ())),
            preferred_element_type=jnp.float32)

        # Per-head slice of the output projection, accumulated in f32 — this
        # replaces the head-merge transpose + separate linear kernel.
        acc = acc + jax.lax.dot_general(
            o_h.astype(jnp.bfloat16), wo_ref[h], (((1,), (0,)), ((), ())),
            preferred_element_type=jnp.float32)

    # LayerNorm(residual + hidden @ W_o^T + b_o), fp32.
    mean = jnp.mean(acc, axis=-1, keepdims=True)
    var = jnp.mean((acc - mean) ** 2, axis=-1, keepdims=True)
    y = (acc - mean) * jax.lax.rsqrt(var + 1e-5)
    out_ref[0] = (y * g_ref[...] + beta_ref[...]).astype(out_ref.dtype)


# ---------------------------------------------------------------------------
# Python wrapper
# ---------------------------------------------------------------------------
def rpe_attention_layer(params, input_states, memory_states, position_states):
    B, N, C = input_states.shape
    M = memory_states.shape[1]
    H = params["num_heads"]
    c = C // H
    bf16 = jnp.bfloat16

    def linear(x, w, b):
        # torch nn.Linear convention: weight is (out, in) -> y = x @ W^T + b
        return jnp.dot(x, w.T) + b

    # Q/K/V projections (small dense matmuls; XLA glue), fp32 then bf16.
    q = linear(input_states, params["wq"], params["bq"]).reshape(B, N, H, c).transpose(0, 2, 1, 3)
    k = linear(memory_states, params["wk"], params["bk"]).reshape(B, M, H, c).transpose(0, 2, 1, 3)
    v = linear(memory_states, params["wv"], params["bv"]).reshape(B, M, H, c).transpose(0, 2, 1, 3)

    # Fold proj_p's weight into q (fp32 accumulate, then bf16).  This removes
    # the (B, H, N, M, c) projected-p tensor entirely.
    wp_h = params["wp"].reshape(H, c, C)                  # (H, c, C)
    qp = jnp.einsum("bhnc,hcC->bhnC", q, wp_h)            # (B, H, N, C) fp32

    qf, kf, vf, qpf = (t.astype(bf16) for t in (q, k, v, qp))

    # Single fused cast+transpose pass over position_states -> (B, N, C, M)
    # bf16 so the kernel's reduce over C is a sublane reduce (M lane-dense).
    pos_t = jnp.swapaxes(position_states, -1, -2).astype(bf16)

    # Output projection as per-head row blocks (bf16), LN params fp32.
    woT = params["wo"].T.reshape(H, c, C).astype(bf16)    # (H, c, C)
    bo = params["bo"][None, :].astype(jnp.float32)
    ln_g = params["ln_g"][None, :].astype(jnp.float32)
    ln_b = params["ln_b"][None, :].astype(jnp.float32)

    vmem_cap = _vmem_capacity_bytes()
    TN, N_pad = _choose_query_tile(N, M, C, H, c, vmem_cap)

    x_in = input_states
    if N_pad != N:
        dp = N_pad - N
        qf = jnp.pad(qf, ((0, 0), (0, 0), (0, dp), (0, 0)))
        qpf = jnp.pad(qpf, ((0, 0), (0, 0), (0, dp), (0, 0)))
        pos_t = jnp.pad(pos_t, ((0, 0), (0, dp), (0, 0), (0, 0)))
        x_in = jnp.pad(x_in, ((0, 0), (0, dp), (0, 0)))

    flops = int(2 * B * H * N_pad * M * (2 * c + C) + 2 * B * N_pad * C * C)
    bytes_accessed = int(
        B * N_pad * C * M * 2                     # pos (bf16), dominant
        + (B * H * N_pad * c + 2 * B * H * M * c + B * H * N_pad * C) * 2
        + B * N_pad * C * 4                        # residual in
        + B * N_pad * C * 4 + B * H * N_pad * M * 4)   # outputs
    cost = pl.CostEstimate(flops=flops, transcendentals=int(B * H * N_pad * M),
                           bytes_accessed=bytes_accessed)

    out_padded, probs_padded = pl.pallas_call(
        _rpe_attention_layer_kernel,
        out_shape=(
            jax.ShapeDtypeStruct((B, N_pad, C), jnp.float32),
            jax.ShapeDtypeStruct((B, H, N_pad, M), jnp.float32),
        ),
        grid=(B, N_pad // TN),
        in_specs=[
            pl.BlockSpec((1, H, TN, c), lambda b, j: (b, 0, j, 0)),   # q
            pl.BlockSpec((1, H, M, c), lambda b, j: (b, 0, 0, 0)),    # k
            pl.BlockSpec((1, H, M, c), lambda b, j: (b, 0, 0, 0)),    # v
            pl.BlockSpec((1, H, TN, C), lambda b, j: (b, 0, j, 0)),   # qp
            pl.BlockSpec((1, TN, C, M), lambda b, j: (b, j, 0, 0)),   # pos^T
            pl.BlockSpec((1, TN, C), lambda b, j: (b, j, 0)),         # residual
            pl.BlockSpec((H, c, C), lambda b, j: (0, 0, 0)),          # wo^T
            pl.BlockSpec((1, C), lambda b, j: (0, 0)),                # bo
            pl.BlockSpec((1, C), lambda b, j: (0, 0)),                # ln gamma
            pl.BlockSpec((1, C), lambda b, j: (0, 0)),                # ln beta
        ],
        out_specs=(
            pl.BlockSpec((1, TN, C), lambda b, j: (b, j, 0)),
            pl.BlockSpec((1, H, TN, M), lambda b, j: (b, 0, j, 0)),
        ),
        compiler_params=pltpu.CompilerParams(
            dimension_semantics=("parallel", "parallel"),
            vmem_limit_bytes=int(vmem_cap * 0.9),
        ),
        cost_estimate=cost,
    )(qf, kf, vf, qpf, pos_t, x_in, woT, bo, ln_g, ln_b)

    output_states = out_padded[:, :N, :]
    attention_scores = probs_padded[:, :, :N, :]
    return output_states, attention_scores


# ---------------------------------------------------------------------------
# Pure-JAX fp32 reference (mirrors the PyTorch forward) for correctness check.
# ---------------------------------------------------------------------------
def _reference(params, input_states, memory_states, position_states):
    B, N, C = input_states.shape
    M = memory_states.shape[1]
    H = params["num_heads"]
    c = C // H

    def linear(x, w, b):
        return jnp.dot(x, w.T) + b

    q = linear(input_states, params["wq"], params["bq"]).reshape(B, N, H, c).transpose(0, 2, 1, 3)
    k = linear(memory_states, params["wk"], params["bk"]).reshape(B, M, H, c).transpose(0, 2, 1, 3)
    v = linear(memory_states, params["wv"], params["bv"]).reshape(B, M, H, c).transpose(0, 2, 1, 3)
    p = linear(position_states, params["wp"], params["bp"]).reshape(B, N, M, H, c).transpose(0, 3, 1, 2, 4)

    scores_pg = jnp.einsum("bhnc,bhnmc->bhnm", q, p)
    scores_e = jnp.einsum("bhnc,bhmc->bhnm", q, k)
    scores = (scores_e + scores_pg) / math.sqrt(c)
    scores = jax.nn.softmax(scores, axis=-1)
    hidden = jnp.einsum("bhnm,bhmc->bhnc", scores, v)
    hidden = hidden.transpose(0, 2, 1, 3).reshape(B, N, C)

    hidden = linear(hidden, params["wo"], params["bo"])
    y = hidden + input_states
    mean = jnp.mean(y, axis=-1, keepdims=True)
    var = jnp.mean((y - mean) ** 2, axis=-1, keepdims=True)
    y = (y - mean) / jnp.sqrt(var + 1e-5)
    y = y * params["ln_g"] + params["ln_b"]
    return y, scores


if __name__ == "__main__":
    B, N, M, C, H = 2, 8, 8, 32, 4

    key = jax.random.PRNGKey(0)
    ks = jax.random.split(key, 16)

    def init(k, shape, scale=0.05):
        return (jax.random.normal(k, shape, jnp.float32) * scale).astype(jnp.float32)

    params = {
        "num_heads": H,
        "wq": init(ks[0], (C, C)), "bq": init(ks[1], (C,)),
        "wk": init(ks[2], (C, C)), "bk": init(ks[3], (C,)),
        "wv": init(ks[4], (C, C)), "bv": init(ks[5], (C,)),
        "wp": init(ks[6], (C, C)), "bp": init(ks[7], (C,)),
        "wo": init(ks[8], (C, C)), "bo": init(ks[9], (C,)),
        "ln_g": jnp.ones((C,), jnp.float32),
        "ln_b": jnp.zeros((C,), jnp.float32),
    }

    input_states = jax.random.normal(ks[10], (B, N, C), jnp.float32)
    memory_states = jax.random.normal(ks[11], (B, M, C), jnp.float32)
    position_states = jax.random.normal(ks[12], (B, N, M, C), jnp.float32)

    out, scores = rpe_attention_layer(params, input_states, memory_states, position_states)
    out, scores = jax.block_until_ready((out, scores))

    ref_out, ref_scores = _reference(params, input_states, memory_states, position_states)
    assert out.shape == (B, N, C) and scores.shape == (B, H, N, M)
    # bf16 on the q/k/v/qp/pos path -> compare with bf16-appropriate tolerance.
    assert jnp.allclose(out, ref_out, atol=2e-2, rtol=2e-2)
    assert jnp.allclose(scores, ref_scores, atol=2e-2, rtol=2e-2)

    print("KERNEL_OK")
</pallas_src>

<mosaic_0001>
module attributes {stable_mosaic.version = 11 : i64} {
  func.func @_rpe_attention_layer_kernel(%arg0: i32, %arg1: i32, %arg2: memref<1x4x8x8xbf16, #tpu.memory_space<vmem>>, %arg3: memref<1x4x8x8xbf16, #tpu.memory_space<vmem>>, %arg4: memref<1x4x8x8xbf16, #tpu.memory_space<vmem>>, %arg5: memref<1x4x8x32xbf16, #tpu.memory_space<vmem>>, %arg6: memref<1x8x32x8xbf16, #tpu.memory_space<vmem>>, %arg7: memref<1x8x32xf32, #tpu.memory_space<vmem>>, %arg8: memref<4x8x32xbf16, #tpu.memory_space<vmem>>, %arg9: memref<1x32xf32, #tpu.memory_space<vmem>>, %arg10: memref<1x32xf32, #tpu.memory_space<vmem>>, %arg11: memref<1x32xf32, #tpu.memory_space<vmem>>, %arg12: memref<1x8x32xf32, #tpu.memory_space<vmem>>, %arg13: memref<1x4x8x8xf32, #tpu.memory_space<vmem>>) attributes {dimension_semantics = [#tpu.dimension_semantics<parallel>, #tpu.dimension_semantics<parallel>], iteration_bounds = array<i64: 2, 1>, scalar_prefetch = 0 : i64, scratch_operands = 0 : i64, tpu.core_type = #tpu.core_type<tc>, window_params = [{transform_indices = @transform_0, window_bounds = array<i64: 1, 4, 8, 8>}, {transform_indices = @transform_1, window_bounds = array<i64: 1, 4, 8, 8>}, {transform_indices = @transform_2, window_bounds = array<i64: 1, 4, 8, 8>}, {transform_indices = @transform_3, window_bounds = array<i64: 1, 4, 8, 32>}, {transform_indices = @transform_4, window_bounds = array<i64: 1, 8, 32, 8>}, {transform_indices = @transform_5, window_bounds = array<i64: 1, 8, 32>}, {pipeline_mode = #tpu.pipeline_mode<synchronous>, transform_indices = @transform_6, window_bounds = array<i64: 4, 8, 32>}, {pipeline_mode = #tpu.pipeline_mode<synchronous>, transform_indices = @transform_7, window_bounds = array<i64: 1, 32>}, {pipeline_mode = #tpu.pipeline_mode<synchronous>, transform_indices = @transform_8, window_bounds = array<i64: 1, 32>}, {pipeline_mode = #tpu.pipeline_mode<synchronous>, transform_indices = @transform_9, window_bounds = array<i64: 1, 32>}, {transform_indices = @transform_10, window_bounds = array<i64: 1, 8, 32>}, {transform_indices = @transform_11, window_bounds = array<i64: 1, 4, 8, 8>}]} {
    %c0 = arith.constant 0 : index
    %c0_0 = arith.constant 0 : index
    %c0_1 = arith.constant 0 : index
    %c0_2 = arith.constant 0 : index
    %0 = vector.load %arg6[%c0, %c0_0, %c0_1, %c0_2] : memref<1x8x32x8xbf16, #tpu.memory_space<vmem>>, vector<1x8x32x8xbf16>
    %1 = vector.shape_cast %0 : vector<1x8x32x8xbf16> to vector<8x32x8xbf16>
    %c0_3 = arith.constant 0 : index
    %c0_4 = arith.constant 0 : index
    %c0_5 = arith.constant 0 : index
    %2 = vector.load %arg7[%c0_3, %c0_4, %c0_5] : memref<1x8x32xf32, #tpu.memory_space<vmem>>, vector<1x8x32xf32>
    %3 = vector.shape_cast %2 : vector<1x8x32xf32> to vector<8x32xf32>
    %c0_6 = arith.constant 0 : index
    %c0_7 = arith.constant 0 : index
    %4 = vector.load %arg9[%c0_6, %c0_7] : memref<1x32xf32, #tpu.memory_space<vmem>>, vector<1x32xf32>
    %5 = vector.broadcast %4 : vector<1x32xf32> to vector<8x32xf32>
    %6 = arith.addf %3, %5 : vector<8x32xf32>
    %c0_8 = arith.constant 0 : index
    %c0_9 = arith.constant 0 : index
    %c0_10 = arith.constant 0 : index
    %c0_11 = arith.constant 0 : index
    %7 = vector.load %arg2[%c0_8, %c0_9, %c0_10, %c0_11] : memref<1x4x8x8xbf16, #tpu.memory_space<vmem>>, vector<1x1x8x8xbf16>
    %8 = vector.shape_cast %7 : vector<1x1x8x8xbf16> to vector<8x8xbf16>
    %c0_12 = arith.constant 0 : index
    %c0_13 = arith.constant 0 : index
    %c0_14 = arith.constant 0 : index
    %c0_15 = arith.constant 0 : index
    %9 = vector.load %arg3[%c0_12, %c0_13, %c0_14, %c0_15] : memref<1x4x8x8xbf16, #tpu.memory_space<vmem>>, vector<1x1x8x8xbf16>
    %10 = vector.shape_cast %9 : vector<1x1x8x8xbf16> to vector<8x8xbf16>
    %c0_16 = arith.constant 0 : index
    %c0_17 = arith.constant 0 : index
    %c0_18 = arith.constant 0 : index
    %c0_19 = arith.constant 0 : index
    %11 = vector.load %arg4[%c0_16, %c0_17, %c0_18, %c0_19] : memref<1x4x8x8xbf16, #tpu.memory_space<vmem>>, vector<1x1x8x8xbf16>
    %12 = vector.shape_cast %11 : vector<1x1x8x8xbf16> to vector<8x8xbf16>
    %c0_20 = arith.constant 0 : index
    %c0_21 = arith.constant 0 : index
    %c0_22 = arith.constant 0 : index
    %c0_23 = arith.constant 0 : index
    %13 = vector.load %arg5[%c0_20, %c0_21, %c0_22, %c0_23] : memref<1x4x8x32xbf16, #tpu.memory_space<vmem>>, vector<1x1x8x32xbf16>
    %14 = vector.shape_cast %13 : vector<1x1x8x32xbf16> to vector<8x32xbf16>
    %cst = arith.constant dense<0.000000e+00> : vector<8x8xf32>
    %15 = tpu.matmul %8, %10, %cst {dimension_numbers = #tpu.dot_dimension_numbers<[1], [1], [0], [0], [0, 0, 1, 0], [], []>} : vector<8x8xbf16>, vector<8x8xbf16>, vector<8x8xf32> -> vector<8x8xf32>
    %16 = vector.shape_cast %14 : vector<8x32xbf16> to vector<8x32x1xbf16>
    %17 = vector.broadcast %16 : vector<8x32x1xbf16> to vector<8x32x8xbf16>
    %18 = arith.mulf %1, %17 : vector<8x32x8xbf16>
    %19 = arith.extf %18 : vector<8x32x8xbf16> to vector<8x32x8xf32>
    %cst_24 = arith.constant dense<0.000000e+00> : vector<8x8xf32>
    %20 = vector.multi_reduction <add>, %19, %cst_24 [1] : vector<8x32x8xf32> to vector<8x8xf32>
    %21 = arith.addf %15, %20 : vector<8x8xf32>
    %cst_25 = arith.constant 0.353553385 : f32
    %22 = vector.broadcast %cst_25 : f32 to vector<8x8xf32>
    %23 = arith.mulf %21, %22 : vector<8x8xf32>
    %cst_26 = arith.constant dense<0xFF800000> : vector<8xf32>
    %24 = vector.multi_reduction <maximumf>, %23, %cst_26 [1] : vector<8x8xf32> to vector<8xf32>
    %25 = vector.shape_cast %24 : vector<8xf32> to vector<8x1xf32>
    %26 = vector.broadcast %25 : vector<8x1xf32> to vector<8x8xf32>
    %27 = arith.subf %23, %26 : vector<8x8xf32>
    %28 = math.exp %27 : vector<8x8xf32>
    %cst_27 = arith.constant dense<0.000000e+00> : vector<8xf32>
    %29 = vector.multi_reduction <add>, %28, %cst_27 [1] : vector<8x8xf32> to vector<8xf32>
    %30 = vector.shape_cast %29 : vector<8xf32> to vector<8x1xf32>
    %cst_28 = arith.constant 1.000000e+00 : f32
    %31 = vector.broadcast %cst_28 : f32 to vector<8x1xf32>
    %32 = arith.divf %31, %30 : vector<8x1xf32>
    %33 = vector.broadcast %32 : vector<8x1xf32> to vector<8x8xf32>
    %34 = arith.mulf %28, %33 : vector<8x8xf32>
    %c0_29 = arith.constant 0 : index
    %c0_30 = arith.constant 0 : index
    %c0_31 = arith.constant 0 : index
    %c0_32 = arith.constant 0 : index
    %35 = vector.load %arg13[%c0_29, %c0_30, %c0_31, %c0_32] : memref<1x4x8x8xf32, #tpu.memory_space<vmem>>, vector<1x1x8x8xf32>
    %36 = vector.shape_cast %35 : vector<1x1x8x8xf32> to vector<8x8xf32>
    %37 = vector.shape_cast %34 : vector<8x8xf32> to vector<1x1x8x8xf32>
    tpu.vector_store %arg13[%c0_29, %c0_30, %c0_31, %c0_32], %37 {strides = array<i32>} : memref<1x4x8x8xf32, #tpu.memory_space<vmem>>, vector<1x1x8x8xf32>,
    %38 = arith.truncf %34 : vector<8x8xf32> to vector<8x8xbf16>
    %cst_33 = arith.constant dense<0.000000e+00> : vector<8x8xf32>
    %39 = tpu.matmul %38, %12, %cst_33 {dimension_numbers = #tpu.dot_dimension_numbers<[1], [0], [0], [1], [0, 0, 1, 1], [], []>} : vector<8x8xbf16>, vector<8x8xbf16>, vector<8x8xf32> -> vector<8x8xf32>
    %40 = arith.truncf %39 : vector<8x8xf32> to vector<8x8xbf16>
    %c0_34 = arith.constant 0 : index
    %c0_35 = arith.constant 0 : index
    %c0_36 = arith.constant 0 : index
    %41 = vector.load %arg8[%c0_34, %c0_35, %c0_36] : memref<4x8x32xbf16, #tpu.memory_space<vmem>>, vector<1x8x32xbf16>
    %42 = vector.shape_cast %41 : vector<1x8x32xbf16> to vector<8x32xbf16>
    %cst_37 = arith.constant dense<0.000000e+00> : vector<8x32xf32>
    %43 = tpu.matmul %40, %42, %cst_37 {dimension_numbers = #tpu.dot_dimension_numbers<[1], [0], [0], [1], [0, 0, 1, 1], [], []>} : vector<8x8xbf16>, vector<8x32xbf16>, vector<8x32xf32> -> vector<8x32xf32>
    %44 = arith.addf %6, %43 : vector<8x32xf32>
    %c0_38 = arith.constant 0 : index
    %c1 = arith.constant 1 : index
    %c0_39 = arith.constant 0 : index
    %c0_40 = arith.constant 0 : index
    %45 = vector.load %arg2[%c0_38, %c1, %c0_39, %c0_40] : memref<1x4x8x8xbf16, #tpu.memory_space<vmem>>, vector<1x1x8x8xbf16>
    %46 = vector.shape_cast %45 : vector<1x1x8x8xbf16> to vector<8x8xbf16>
    %c0_41 = arith.constant 0 : index
    %c1_42 = arith.constant 1 : index
    %c0_43 = arith.constant 0 : index
    %c0_44 = arith.constant 0 : index
    %47 = vector.load %arg3[%c0_41, %c1_42, %c0_43, %c0_44] : memref<1x4x8x8xbf16, #tpu.memory_space<vmem>>, vector<1x1x8x8xbf16>
    %48 = vector.shape_cast %47 : vector<1x1x8x8xbf16> to vector<8x8xbf16>
    %c0_45 = arith.constant 0 : index
    %c1_46 = arith.constant 1 : index
    %c0_47 = arith.constant 0 : index
    %c0_48 = arith.constant 0 : index
    %49 = vector.load %arg4[%c0_45, %c1_46, %c0_47, %c0_48] : memref<1x4x8x8xbf16, #tpu.memory_space<vmem>>, vector<1x1x8x8xbf16>
    %50 = vector.shape_cast %49 : vector<1x1x8x8xbf16> to vector<8x8xbf16>
    %c0_49 = arith.constant 0 : index
    %c1_50 = arith.constant 1 : index
    %c0_51 = arith.constant 0 : index
    %c0_52 = arith.constant 0 : index
    %51 = vector.load %arg5[%c0_49, %c1_50, %c0_51, %c0_52] : memref<1x4x8x32xbf16, #tpu.memory_space<vmem>>, vector<1x1x8x32xbf16>
    %52 = vector.shape_cast %51 : vector<1x1x8x32xbf16> to vector<8x32xbf16>
    %cst_53 = arith.constant dense<0.000000e+00> : vector<8x8xf32>
    %53 = tpu.matmul %46, %48, %cst_53 {dimension_numbers = #tpu.dot_dimension_numbers<[1], [1], [0], [0], [0, 0, 1, 0], [], []>} : vector<8x8xbf16>, vector<8x8xbf16>, vector<8x8xf32> -> vector<8x8xf32>
    %54 = vector.shape_cast %52 : vector<8x32xbf16> to vector<8x32x1xbf16>
    %55 = vector.broadcast %54 : vector<8x32x1xbf16> to vector<8x32x8xbf16>
    %56 = arith.mulf %1, %55 : vector<8x32x8xbf16>
    %57 = arith.extf %56 : vector<8x32x8xbf16> to vector<8x32x8xf32>
    %cst_54 = arith.constant dense<0.000000e+00> : vector<8x8xf32>
    %58 = vector.multi_reduction <add>, %57, %cst_54 [1] : vector<8x32x8xf32> to vector<8x8xf32>
    %59 = arith.addf %53, %58 : vector<8x8xf32>
    %cst_55 = arith.constant 0.353553385 : f32
    %60 = vector.broadcast %cst_55 : f32 to vector<8x8xf32>
    %61 = arith.mulf %59, %60 : vector<8x8xf32>
    %cst_56 = arith.constant dense<0xFF800000> : vector<8xf32>
    %62 = vector.multi_reduction <maximumf>, %61, %cst_56 [1] : vector<8x8xf32> to vector<8xf32>
    %63 = vector.shape_cast %62 : vector<8xf32> to vector<8x1xf32>
    %64 = vector.broadcast %63 : vector<8x1xf32> to vector<8x8xf32>
    %65 = arith.subf %61, %64 : vector<8x8xf32>
    %66 = math.exp %65 : vector<8x8xf32>
    %cst_57 = arith.constant dense<0.000000e+00> : vector<8xf32>
    %67 = vector.multi_reduction <add>, %66, %cst_57 [1] : vector<8x8xf32> to vector<8xf32>
    %68 = vector.shape_cast %67 : vector<8xf32> to vector<8x1xf32>
    %cst_58 = arith.constant 1.000000e+00 : f32
    %69 = vector.broadcast %cst_58 : f32 to vector<8x1xf32>
    %70 = arith.divf %69, %68 : vector<8x1xf32>
    %71 = vector.broadcast %70 : vector<8x1xf32> to vector<8x8xf32>
    %72 = arith.mulf %66, %71 : vector<8x8xf32>
    %c0_59 = arith.constant 0 : index
    %c1_60 = arith.constant 1 : index
    %c0_61 = arith.constant 0 : index
    %c0_62 = arith.constant 0 : index
    %73 = vector.load %arg13[%c0_59, %c1_60, %c0_61, %c0_62] : memref<1x4x8x8xf32, #tpu.memory_space<vmem>>, vector<1x1x8x8xf32>
    %74 = vector.shape_cast %73 : vector<1x1x8x8xf32> to vector<8x8xf32>
    %75 = vector.shape_cast %72 : vector<8x8xf32> to vector<1x1x8x8xf32>
    tpu.vector_store %arg13[%c0_59, %c1_60, %c0_61, %c0_62], %75 {strides = array<i32>} : memref<1x4x8x8xf32, #tpu.memory_space<vmem>>, vector<1x1x8x8xf32>,
    %76 = arith.truncf %72 : vector<8x8xf32> to vector<8x8xbf16>
    %cst_63 = arith.constant dense<0.000000e+00> : vector<8x8xf32>
    %77 = tpu.matmul %76, %50, %cst_63 {dimension_numbers = #tpu.dot_dimension_numbers<[1], [0], [0], [1], [0, 0, 1, 1], [], []>} : vector<8x8xbf16>, vector<8x8xbf16>, vector<8x8xf32> -> vector<8x8xf32>
    %78 = arith.truncf %77 : vector<8x8xf32> to vector<8x8xbf16>
    %c1_64 = arith.constant 1 : index
    %c0_65 = arith.constant 0 : index
    %c0_66 = arith.constant 0 : index
    %79 = vector.load %arg8[%c1_64, %c0_65, %c0_66] : memref<4x8x32xbf16, #tpu.memory_space<vmem>>, vector<1x8x32xbf16>
    %80 = vector.shape_cast %79 : vector<1x8x32xbf16> to vector<8x32xbf16>
    %cst_67 = arith.constant dense<0.000000e+00> : vector<8x32xf32>
    %81 = tpu.matmul %78, %80, %cst_67 {dimension_numbers = #tpu.dot_dimension_numbers<[1], [0], [0], [1], [0, 0, 1, 1], [], []>} : vector<8x8xbf16>, vector<8x32xbf16>, vector<8x32xf32> -> vector<8x32xf32>
    %82 = arith.addf %44, %81 : vector<8x32xf32>
    %c0_68 = arith.constant 0 : index
    %c2 = arith.constant 2 : index
    %c0_69 = arith.constant 0 : index
    %c0_70 = arith.constant 0 : index
    %83 = vector.load %arg2[%c0_68, %c2, %c0_69, %c0_70] : memref<1x4x8x8xbf16, #tpu.memory_space<vmem>>, vector<1x1x8x8xbf16>
    %84 = vector.shape_cast %83 : vector<1x1x8x8xbf16> to vector<8x8xbf16>
    %c0_71 = arith.constant 0 : index
    %c2_72 = arith.constant 2 : index
    %c0_73 = arith.constant 0 : index
    %c0_74 = arith.constant 0 : index
    %85 = vector.load %arg3[%c0_71, %c2_72, %c0_73, %c0_74] : memref<1x4x8x8xbf16, #tpu.memory_space<vmem>>, vector<1x1x8x8xbf16>
    %86 = vector.shape_cast %85 : vector<1x1x8x8xbf16> to vector<8x8xbf16>
    %c0_75 = arith.constant 0 : index
    %c2_76 = arith.constant 2 : index
    %c0_77 = arith.constant 0 : index
    %c0_78 = arith.constant 0 : index
    %87 = vector.load %arg4[%c0_75, %c2_76, %c0_77, %c0_78] : memref<1x4x8x8xbf16, #tpu.memory_space<vmem>>, vector<1x1x8x8xbf16>
    %88 = vector.shape_cast %87 : vector<1x1x8x8xbf16> to vector<8x8xbf16>
    %c0_79 = arith.constant 0 : index
    %c2_80 = arith.constant 2 : index
    %c0_81 = arith.constant 0 : index
    %c0_82 = arith.constant 0 : index
    %89 = vector.load %arg5[%c0_79, %c2_80, %c0_81, %c0_82] : memref<1x4x8x32xbf16, #tpu.memory_space<vmem>>, vector<1x1x8x32xbf16>
    %90 = vector.shape_cast %89 : vector<1x1x8x32xbf16> to vector<8x32xbf16>
    %cst_83 = arith.constant dense<0.000000e+00> : vector<8x8xf32>
    %91 = tpu.matmul %84, %86, %cst_83 {dimension_numbers = #tpu.dot_dimension_numbers<[1], [1], [0], [0], [0, 0, 1, 0], [], []>} : vector<8x8xbf16>, vector<8x8xbf16>, vector<8x8xf32> -> vector<8x8xf32>
    %92 = vector.shape_cast %90 : vector<8x32xbf16> to vector<8x32x1xbf16>
    %93 = vector.broadcast %92 : vector<8x32x1xbf16> to vector<8x32x8xbf16>
    %94 = arith.mulf %1, %93 : vector<8x32x8xbf16>
    %95 = arith.extf %94 : vector<8x32x8xbf16> to vector<8x32x8xf32>
    %cst_84 = arith.constant dense<0.000000e+00> : vector<8x8xf32>
    %96 = vector.multi_reduction <add>, %95, %cst_84 [1] : vector<8x32x8xf32> to vector<8x8xf32>
    %97 = arith.addf %91, %96 : vector<8x8xf32>
    %cst_85 = arith.constant 0.353553385 : f32
    %98 = vector.broadcast %cst_85 : f32 to vector<8x8xf32>
    %99 = arith.mulf %97, %98 : vector<8x8xf32>
    %cst_86 = arith.constant dense<0xFF800000> : vector<8xf32>
    %100 = vector.multi_reduction <maximumf>, %99, %cst_86 [1] : vector<8x8xf32> to vector<8xf32>
    %101 = vector.shape_cast %100 : vector<8xf32> to vector<8x1xf32>
    %102 = vector.broadcast %101 : vector<8x1xf32> to vector<8x8xf32>
    %103 = arith.subf %99, %102 : vector<8x8xf32>
    %104 = math.exp %103 : vector<8x8xf32>
    %cst_87 = arith.constant dense<0.000000e+00> : vector<8xf32>
    %105 = vector.multi_reduction <add>, %104, %cst_87 [1] : vector<8x8xf32> to vector<8xf32>
    %106 = vector.shape_cast %105 : vector<8xf32> to vector<8x1xf32>
    %cst_88 = arith.constant 1.000000e+00 : f32
    %107 = vector.broadcast %cst_88 : f32 to vector<8x1xf32>
    %108 = arith.divf %107, %106 : vector<8x1xf32>
    %109 = vector.broadcast %108 : vector<8x1xf32> to vector<8x8xf32>
    %110 = arith.mulf %104, %109 : vector<8x8xf32>
    %c0_89 = arith.constant 0 : index
    %c2_90 = arith.constant 2 : index
    %c0_91 = arith.constant 0 : index
    %c0_92 = arith.constant 0 : index
    %111 = vector.load %arg13[%c0_89, %c2_90, %c0_91, %c0_92] : memref<1x4x8x8xf32, #tpu.memory_space<vmem>>, vector<1x1x8x8xf32>
    %112 = vector.shape_cast %111 : vector<1x1x8x8xf32> to vector<8x8xf32>
    %113 = vector.shape_cast %110 : vector<8x8xf32> to vector<1x1x8x8xf32>
    tpu.vector_store %arg13[%c0_89, %c2_90, %c0_91, %c0_92], %113 {strides = array<i32>} : memref<1x4x8x8xf32, #tpu.memory_space<vmem>>, vector<1x1x8x8xf32>,
    %114 = arith.truncf %110 : vector<8x8xf32> to vector<8x8xbf16>
    %cst_93 = arith.constant dense<0.000000e+00> : vector<8x8xf32>
    %115 = tpu.matmul %114, %88, %cst_93 {dimension_numbers = #tpu.dot_dimension_numbers<[1], [0], [0], [1], [0, 0, 1, 1], [], []>} : vector<8x8xbf16>, vector<8x8xbf16>, vector<8x8xf32> -> vector<8x8xf32>
    %116 = arith.truncf %115 : vector<8x8xf32> to vector<8x8xbf16>
    %c2_94 = arith.constant 2 : index
    %c0_95 = arith.constant 0 : index
    %c0_96 = arith.constant 0 : index
    %117 = vector.load %arg8[%c2_94, %c0_95, %c0_96] : memref<4x8x32xbf16, #tpu.memory_space<vmem>>, vector<1x8x32xbf16>
    %118 = vector.shape_cast %117 : vector<1x8x32xbf16> to vector<8x32xbf16>
    %cst_97 = arith.constant dense<0.000000e+00> : vector<8x32xf32>
    %119 = tpu.matmul %116, %118, %cst_97 {dimension_numbers = #tpu.dot_dimension_numbers<[1], [0], [0], [1], [0, 0, 1, 1], [], []>} : vector<8x8xbf16>, vector<8x32xbf16>, vector<8x32xf32> -> vector<8x32xf32>
    %120 = arith.addf %82, %119 : vector<8x32xf32>
    %c0_98 = arith.constant 0 : index
    %c3 = arith.constant 3 : index
    %c0_99 = arith.constant 0 : index
    %c0_100 = arith.constant 0 : index
    %121 = vector.load %arg2[%c0_98, %c3, %c0_99, %c0_100] : memref<1x4x8x8xbf16, #tpu.memory_space<vmem>>, vector<1x1x8x8xbf16>
    %122 = vector.shape_cast %121 : vector<1x1x8x8xbf16> to vector<8x8xbf16>
    %c0_101 = arith.constant 0 : index
    %c3_102 = arith.constant 3 : index
    %c0_103 = arith.constant 0 : index
    %c0_104 = arith.constant 0 : index
    %123 = vector.load %arg3[%c0_101, %c3_102, %c0_103, %c0_104] : memref<1x4x8x8xbf16, #tpu.memory_space<vmem>>, vector<1x1x8x8xbf16>
    %124 = vector.shape_cast %123 : vector<1x1x8x8xbf16> to vector<8x8xbf16>
    %c0_105 = arith.constant 0 : index
    %c3_106 = arith.constant 3 : index
    %c0_107 = arith.constant 0 : index
    %c0_108 = arith.constant 0 : index
    %125 = vector.load %arg4[%c0_105, %c3_106, %c0_107, %c0_108] : memref<1x4x8x8xbf16, #tpu.memory_space<vmem>>, vector<1x1x8x8xbf16>
    %126 = vector.shape_cast %125 : vector<1x1x8x8xbf16> to vector<8x8xbf16>
    %c0_109 = arith.constant 0 : index
    %c3_110 = arith.constant 3 : index
    %c0_111 = arith.constant 0 : index
    %c0_112 = arith.constant 0 : index
    %127 = vector.load %arg5[%c0_109, %c3_110, %c0_111, %c0_112] : memref<1x4x8x32xbf16, #tpu.memory_space<vmem>>, vector<1x1x8x32xbf16>
    %128 = vector.shape_cast %127 : vector<1x1x8x32xbf16> to vector<8x32xbf16>
    %cst_113 = arith.constant dense<0.000000e+00> : vector<8x8xf32>
    %129 = tpu.matmul %122, %124, %cst_113 {dimension_numbers = #tpu.dot_dimension_numbers<[1], [1], [0], [0], [0, 0, 1, 0], [], []>} : vector<8x8xbf16>, vector<8x8xbf16>, vector<8x8xf32> -> vector<8x8xf32>
    %130 = vector.shape_cast %128 : vector<8x32xbf16> to vector<8x32x1xbf16>
    %131 = vector.broadcast %130 : vector<8x32x1xbf16> to vector<8x32x8xbf16>
    %132 = arith.mulf %1, %131 : vector<8x32x8xbf16>
    %133 = arith.extf %132 : vector<8x32x8xbf16> to vector<8x32x8xf32>
    %cst_114 = arith.constant dense<0.000000e+00> : vector<8x8xf32>
    %134 = vector.multi_reduction <add>, %133, %cst_114 [1] : vector<8x32x8xf32> to vector<8x8xf32>
    %135 = arith.addf %129, %134 : vector<8x8xf32>
    %cst_115 = arith.constant 0.353553385 : f32
    %136 = vector.broadcast %cst_115 : f32 to vector<8x8xf32>
    %137 = arith.mulf %135, %136 : vector<8x8xf32>
    %cst_116 = arith.constant dense<0xFF800000> : vector<8xf32>
    %138 = vector.multi_reduction <maximumf>, %137, %cst_116 [1] : vector<8x8xf32> to vector<8xf32>
    %139 = vector.shape_cast %138 : vector<8xf32> to vector<8x1xf32>
    %140 = vector.broadcast %139 : vector<8x1xf32> to vector<8x8xf32>
    %141 = arith.subf %137, %140 : vector<8x8xf32>
    %142 = math.exp %141 : vector<8x8xf32>
    %cst_117 = arith.constant dense<0.000000e+00> : vector<8xf32>
    %143 = vector.multi_reduction <add>, %142, %cst_117 [1] : vector<8x8xf32> to vector<8xf32>
    %144 = vector.shape_cast %143 : vector<8xf32> to vector<8x1xf32>
    %cst_118 = arith.constant 1.000000e+00 : f32
    %145 = vector.broadcast %cst_118 : f32 to vector<8x1xf32>
    %146 = arith.divf %145, %144 : vector<8x1xf32>
    %147 = vector.broadcast %146 : vector<8x1xf32> to vector<8x8xf32>
    %148 = arith.mulf %142, %147 : vector<8x8xf32>
    %c0_119 = arith.constant 0 : index
    %c3_120 = arith.constant 3 : index
    %c0_121 = arith.constant 0 : index
    %c0_122 = arith.constant 0 : index
    %149 = vector.load %arg13[%c0_119, %c3_120, %c0_121, %c0_122] : memref<1x4x8x8xf32, #tpu.memory_space<vmem>>, vector<1x1x8x8xf32>
    %150 = vector.shape_cast %149 : vector<1x1x8x8xf32> to vector<8x8xf32>
    %151 = vector.shape_cast %148 : vector<8x8xf32> to vector<1x1x8x8xf32>
    tpu.vector_store %arg13[%c0_119, %c3_120, %c0_121, %c0_122], %151 {strides = array<i32>} : memref<1x4x8x8xf32, #tpu.memory_space<vmem>>, vector<1x1x8x8xf32>,
    %152 = arith.truncf %148 : vector<8x8xf32> to vector<8x8xbf16>
    %cst_123 = arith.constant dense<0.000000e+00> : vector<8x8xf32>
    %153 = tpu.matmul %152, %126, %cst_123 {dimension_numbers = #tpu.dot_dimension_numbers<[1], [0], [0], [1], [0, 0, 1, 1], [], []>} : vector<8x8xbf16>, vector<8x8xbf16>, vector<8x8xf32> -> vector<8x8xf32>
    %154 = arith.truncf %153 : vector<8x8xf32> to vector<8x8xbf16>
    %c3_124 = arith.constant 3 : index
    %c0_125 = arith.constant 0 : index
    %c0_126 = arith.constant 0 : index
    %155 = vector.load %arg8[%c3_124, %c0_125, %c0_126] : memref<4x8x32xbf16, #tpu.memory_space<vmem>>, vector<1x8x32xbf16>
    %156 = vector.shape_cast %155 : vector<1x8x32xbf16> to vector<8x32xbf16>
    %cst_127 = arith.constant dense<0.000000e+00> : vector<8x32xf32>
    %157 = tpu.matmul %154, %156, %cst_127 {dimension_numbers = #tpu.dot_dimension_numbers<[1], [0], [0], [1], [0, 0, 1, 1], [], []>} : vector<8x8xbf16>, vector<8x32xbf16>, vector<8x32xf32> -> vector<8x32xf32>
    %158 = arith.addf %120, %157 : vector<8x32xf32>
    %cst_128 = arith.constant dense<0.000000e+00> : vector<8xf32>
    %159 = vector.multi_reduction <add>, %158, %cst_128 [1] : vector<8x32xf32> to vector<8xf32>
    %160 = vector.shape_cast %159 : vector<8xf32> to vector<8x1xf32>
    %cst_129 = arith.constant 3.200000e+01 : f32
    %161 = vector.broadcast %cst_129 : f32 to vector<8x1xf32>
    %162 = arith.divf %160, %161 : vector<8x1xf32>
    %163 = vector.broadcast %162 : vector<8x1xf32> to vector<8x32xf32>
    %164 = arith.subf %158, %163 : vector<8x32xf32>
    %165 = arith.mulf %164, %164 : vector<8x32xf32>
    %cst_130 = arith.constant dense<0.000000e+00> : vector<8xf32>
    %166 = vector.multi_reduction <add>, %165, %cst_130 [1] : vector<8x32xf32> to vector<8xf32>
    %167 = vector.shape_cast %166 : vector<8xf32> to vector<8x1xf32>
    %cst_131 = arith.constant 3.200000e+01 : f32
    %168 = vector.broadcast %cst_131 : f32 to vector<8x1xf32>
    %169 = arith.divf %167, %168 : vector<8x1xf32>
    %170 = vector.broadcast %162 : vector<8x1xf32> to vector<8x32xf32>
    %171 = arith.subf %158, %170 : vector<8x32xf32>
    %cst_132 = arith.constant 9.99999974E-6 : f32
    %172 = vector.broadcast %cst_132 : f32 to vector<8x1xf32>
    %173 = arith.addf %169, %172 : vector<8x1xf32>
    %174 = math.rsqrt %173 : vector<8x1xf32>
    %175 = vector.broadcast %174 : vector<8x1xf32> to vector<8x32xf32>
    %176 = arith.mulf %171, %175 : vector<8x32xf32>
    %c0_133 = arith.constant 0 : index
    %c0_134 = arith.constant 0 : index
    %177 = vector.load %arg10[%c0_133, %c0_134] : memref<1x32xf32, #tpu.memory_space<vmem>>, vector<1x32xf32>
    %178 = vector.broadcast %177 : vector<1x32xf32> to vector<8x32xf32>
    %179 = arith.mulf %176, %178 : vector<8x32xf32>
    %c0_135 = arith.constant 0 : index
    %c0_136 = arith.constant 0 : index
    %180 = vector.load %arg11[%c0_135, %c0_136] : memref<1x32xf32, #tpu.memory_space<vmem>>, vector<1x32xf32>
    %181 = vector.broadcast %180 : vector<1x32xf32> to vector<8x32xf32>
    %182 = arith.addf %179, %181 : vector<8x32xf32>
    %c0_137 = arith.constant 0 : index
    %c0_138 = arith.constant 0 : index
    %c0_139 = arith.constant 0 : index
    %183 = vector.load %arg12[%c0_137, %c0_138, %c0_139] : memref<1x8x32xf32, #tpu.memory_space<vmem>>, vector<1x8x32xf32>
    %184 = vector.shape_cast %183 : vector<1x8x32xf32> to vector<8x32xf32>
    %185 = vector.shape_cast %182 : vector<8x32xf32> to vector<1x8x32xf32>
    tpu.vector_store %arg12[%c0_137, %c0_138, %c0_139], %185 {strides = array<i32>} : memref<1x8x32xf32, #tpu.memory_space<vmem>>, vector<1x8x32xf32>,
    return
  }
  func.func @transform_0(%arg0: i32, %arg1: i32) -> (i32, i32, i32, i32) {
    %c0_i32 = arith.constant 0 : i32
    %c0_i32_0 = arith.constant 0 : i32
    %c0_i32_1 = arith.constant 0 : i32
    return %arg0, %c0_i32, %arg1, %c0_i32_0 : i32, i32, i32, i32
  }
  func.func @transform_1(%arg0: i32, %arg1: i32) -> (i32, i32, i32, i32) {
    %c0_i32 = arith.constant 0 : i32
    %c0_i32_0 = arith.constant 0 : i32
    %c0_i32_1 = arith.constant 0 : i32
    %c0_i32_2 = arith.constant 0 : i32
    return %arg0, %c0_i32, %c0_i32_0, %c0_i32_1 : i32, i32, i32, i32
  }
  func.func @transform_2(%arg0: i32, %arg1: i32) -> (i32, i32, i32, i32) {
    %c0_i32 = arith.constant 0 : i32
    %c0_i32_0 = arith.constant 0 : i32
    %c0_i32_1 = arith.constant 0 : i32
    %c0_i32_2 = arith.constant 0 : i32
    return %arg0, %c0_i32, %c0_i32_0, %c0_i32_1 : i32, i32, i32, i32
  }
  func.func @transform_3(%arg0: i32, %arg1: i32) -> (i32, i32, i32, i32) {
    %c0_i32 = arith.constant 0 : i32
    %c0_i32_0 = arith.constant 0 : i32
    %c0_i32_1 = arith.constant 0 : i32
    return %arg0, %c0_i32, %arg1, %c0_i32_0 : i32, i32, i32, i32
  }
  func.func @transform_4(%arg0: i32, %arg1: i32) -> (i32, i32, i32, i32) {
    %c0_i32 = arith.constant 0 : i32
    %c0_i32_0 = arith.constant 0 : i32
    %c0_i32_1 = arith.constant 0 : i32
    return %arg0, %arg1, %c0_i32, %c0_i32_0 : i32, i32, i32, i32
  }
  func.func @transform_5(%arg0: i32, %arg1: i32) -> (i32, i32, i32) {
    %c0_i32 = arith.constant 0 : i32
    %c0_i32_0 = arith.constant 0 : i32
    return %arg0, %arg1, %c0_i32 : i32, i32, i32
  }
  func.func @transform_6(%arg0: i32, %arg1: i32) -> (i32, i32, i32) {
    %c0_i32 = arith.constant 0 : i32
    %c0_i32_0 = arith.constant 0 : i32
    %c0_i32_1 = arith.constant 0 : i32
    %c0_i32_2 = arith.constant 0 : i32
    return %c0_i32, %c0_i32_0, %c0_i32_1 : i32, i32, i32
  }
  func.func @transform_7(%arg0: i32, %arg1: i32) -> (i32, i32) {
    %c0_i32 = arith.constant 0 : i32
    %c0_i32_0 = arith.constant 0 : i32
    %c0_i32_1 = arith.constant 0 : i32
    return %c0_i32, %c0_i32_0 : i32, i32
  }
  func.func @transform_8(%arg0: i32, %arg1: i32) -> (i32, i32) {
    %c0_i32 = arith.constant 0 : i32
    %c0_i32_0 = arith.constant 0 : i32
    %c0_i32_1 = arith.constant 0 : i32
    return %c0_i32, %c0_i32_0 : i32, i32
  }
  func.func @transform_9(%arg0: i32, %arg1: i32) -> (i32, i32) {
    %c0_i32 = arith.constant 0 : i32
    %c0_i32_0 = arith.constant 0 : i32
    %c0_i32_1 = arith.constant 0 : i32
    return %c0_i32, %c0_i32_0 : i32, i32
  }
  func.func @transform_10(%arg0: i32, %arg1: i32) -> (i32, i32, i32) {
    %c0_i32 = arith.constant 0 : i32
    %c0_i32_0 = arith.constant 0 : i32
    return %arg0, %arg1, %c0_i32 : i32, i32, i32
  }
  func.func @transform_11(%arg0: i32, %arg1: i32) -> (i32, i32, i32, i32) {
    %c0_i32 = arith.constant 0 : i32
    %c0_i32_0 = arith.constant 0 : i32
    %c0_i32_1 = arith.constant 0 : i32
    return %arg0, %c0_i32, %arg1, %c0_i32_0 : i32, i32, i32, i32
  }
}

</mosaic_0001>

<llo_original>
// kernel: tpu_custom_call.1
$region0: #{tpu_custom_call.1}
  #allocation0 [shape = 'u32[]', space=smem, size = 0x4, offset = 0x4, fixed_abs, tag = 'smem constant byte address 0x4 - core index']
  #allocation1 [shape = 'u32[144,128]{1,0:T(1,128)}', space=vmem, size = 0x12000, scoped, tag = 'internal scratch']
  %s0 = inlined_call_operand.vmem [shape: bf16[2,4,8,8], index: 0, kind: input, shape index: {}]
  %s1 = inlined_call_operand.vmem [shape: bf16[2,4,8,8], index: 1, kind: input, shape index: {}]
  %s2 = inlined_call_operand.vmem [shape: bf16[2,4,8,8], index: 2, kind: input, shape index: {}]
  %s3 = inlined_call_operand.vmem [shape: bf16[2,4,8,32], index: 3, kind: input, shape index: {}]
  %s4 = inlined_call_operand.vmem [shape: bf16[2,8,32,8], index: 4, kind: input, shape index: {}]
  %s5 = inlined_call_operand.vmem [shape: f32[2,8,32], index: 5, kind: input, shape index: {}]
  %s6 = inlined_call_operand.vmem [shape: bf16[4,8,32], index: 6, kind: input, shape index: {}]
  %s7 = inlined_call_operand.vmem [shape: f32[1,32], index: 7, kind: input, shape index: {}]
  %s8 = inlined_call_operand.vmem [shape: f32[1,32], index: 8, kind: input, shape index: {}]
  %s9 = inlined_call_operand.vmem [shape: f32[1,32], index: 9, kind: input, shape index: {}]
  %s10 = inlined_call_operand.hbm [shape: f32[2,8,32], index: 10, kind: output, shape index: {0}]
  %s11 = inlined_call_operand.hbm [shape: f32[2,4,8,8], index: 11, kind: output, shape index: {1}]
  %12 = xla_tuple %s10, %s11
  %s13 = sld [smem:[#allocation0]]
  $region81: #{tpu_custom_call.1} parent=0
    _
  %s15 = ssub.s32 1, %s13
  %s16 = scalar_select 0, %s15, %s13
  $region1: #{tpu_custom_call.1} parent=0
    #allocation2 [shape = 'u8[8192]{0}', space=vmem, size = 0x2000, scoped, tag = 'output window, operand 0']
    #allocation3 [shape = 's32[2]{0}', space=sflag, size = 0x8, scoped, tag = 'scoped memory for tpu_custom_call.1']
    #allocation4 [shape = 'u8[32768]{0}', space=vmem, size = 0x8000, scoped, tag = 'output window, operand 1']
    #allocation5 [shape = 's32[2]{0}', space=sflag, size = 0x8, scoped, tag = 'scoped memory for tpu_custom_call.1']
    %17 = vsyncpa [#allocation3], 0
    %s18 = scalar_lea.sflag [#allocation3], 1
    %19 = vsyncpa %s18, 0
    %20 = vsyncpa [#allocation5], 0
    %s21 = scalar_lea.sflag [#allocation5], 1
    %22 = vsyncpa %s21, 0
    loop: start=0, step=1, limit=4
    $region2: #{tpu_custom_call.1} parent=1 // loop_pre_header
      _
    $region3: #{tpu_custom_call.1} parent=1 // loop_header
      %s24 = sphi 0, %s28
      %p25 = scmp.ge.s32.totalorder %s24, 4
      %s31 = sphi 0, %s43
      %s32 = sphi 0, %s39
      %s33 = sphi 0, %s31
      %s34 = sphi 0, %s32
      %s35 = sphi 0, %s33
      %s36 = sphi 0, %s34
      %s48 = sphi 0, %s50
      %s51 = sphi 0, %s48
      %s52 = sphi 0, %s51
      %s68 = sphi 0, %s52
      %s74 = sphi 0, %s76
      %s77 = sphi 0, %s74
      %s78 = sphi 0, %s77
      %s94 = sphi 0, %s78
      %s100 = sphi 0, %s102
      %s103 = sphi 0, %s100
      %s104 = sphi 0, %s103
      %s120 = sphi 0, %s104
      %s128 = sphi 0, %s130
      %s131 = sphi 0, %s128
      %s132 = sphi 0, %s131
      %s148 = sphi 0, %s132
      %s156 = sphi 0, %s158
      %s159 = sphi 0, %s156
      %s160 = sphi 0, %s159
      %s176 = sphi 0, %s160
      %s184 = sphi 0, %s186
      %s187 = sphi 0, %s184
      %s188 = sphi 0, %s187
      %s204 = sphi 0, %s188
      %s208 = sphi 0, %s208
      %s210 = sphi 0, %s208
      %s211 = sphi 0, %s210
      %s225 = sphi 0, %s211
      %s229 = sphi 0, %s229
      %s231 = sphi 0, %s229
      %s232 = sphi 0, %s231
      %s246 = sphi 0, %s232
      %s250 = sphi 0, %s250
      %s252 = sphi 0, %s250
      %s253 = sphi 0, %s252
      %s267 = sphi 0, %s253
      %s271 = sphi 0, %s271
      %s273 = sphi 0, %s271
      %s274 = sphi 0, %s273
      %s288 = sphi 0, %s274
      %s296 = sphi 0, %s298
      %s299 = sphi 0, %s296
      %s300 = sphi 0, %s299
      %s316 = sphi 0, %s300
      %s324 = sphi 0, %s326
      %s327 = sphi 0, %s324
      %s328 = sphi 0, %s327
      %s344 = sphi 0, %s328
    $region4: #{tpu_custom_call.1} parent=1 // loop_header_branch
      %27 = sbr.rel (%p25) target = $region8
    $region5: #{tpu_custom_call.1} parent=1 // loop_body
      %s29 = ssub.s32 %s24, 1
      %s30 = ssub.s32 %s24, 2
      %s37 = sadd.s32 1, %s32
      %p38 = scmp.ge.s32.totalorder %s37, 1
      %s39 = scalar_select %p38, 0, %s37
      %s40 = sadd.s32 1, %s31
      %s41 = scalar_select %p38, %s40, %s31
      %p42 = scmp.ge.s32.totalorder %s41, 2
      %s43 = scalar_select %p42, 0, %s41
      %s44 = ssub.s32 %s31, %s43
      %s45 = ssub.s32 %s32, %s39
      %s46 = sor.u32 %s44, %s45
      %p47 = scmp.eq.s32.totalorder %s46, 0
      %s49 = sadd.s32 %s48, 1
      %s50 = scalar_select %p47, %s48, %s49
      %p53 = pneg %p47
      %p54 = scmp.eq.s32.totalorder %s24, 1
      %p55 = por %p53, %p54
      %p56 = scmp.ne.s32.totalorder %s48, %s51
      %p57 = scmp.eq.s32.totalorder %s24, 0
      %p58 = por %p56, %p57
      %p59 = scmp.ne.s32.totalorder %s48, %s51
      %p60 = scmp.eq.s32.totalorder %s29, 1
      %p61 = por %p59, %p60
      %p62 = scmp.ne.s32.totalorder %s51, %s52
      %p63 = scmp.eq.s32.totalorder %s29, 0
      %p64 = por %p62, %p63
      %p65 = scmp.ne.s32.totalorder %s51, %s52
      %p66 = scmp.eq.s32.totalorder %s30, 1
      %p67 = por %p65, %p66
      %p69 = scmp.ne.s32.totalorder %s52, %s68
      %p70 = scmp.eq.s32.totalorder %s30, 0
      %p71 = por %p69, %p70
      %s72 = ssub.s32 %s31, %s43
      %p73 = scmp.eq.s32.totalorder %s72, 0
      %s75 = sadd.s32 %s74, 1
      %s76 = scalar_select %p73, %s74, %s75
      %p79 = pneg %p73
      %p80 = scmp.eq.s32.totalorder %s24, 1
      %p81 = por %p79, %p80
      %p82 = scmp.ne.s32.totalorder %s74, %s77
      %p83 = scmp.eq.s32.totalorder %s24, 0
      %p84 = por %p82, %p83
      %p85 = scmp.ne.s32.totalorder %s74, %s77
      %p86 = scmp.eq.s32.totalorder %s29, 1
      %p87 = por %p85, %p86
      %p88 = scmp.ne.s32.totalorder %s77, %s78
      %p89 = scmp.eq.s32.totalorder %s29, 0
      %p90 = por %p88, %p89
      %p91 = scmp.ne.s32.totalorder %s77, %s78
      %p92 = scmp.eq.s32.totalorder %s30, 1
      %p93 = por %p91, %p92
      %p95 = scmp.ne.s32.totalorder %s78, %s94
      %p96 = scmp.eq.s32.totalorder %s30, 0
      %p97 = por %p95, %p96
      %s98 = ssub.s32 %s31, %s43
      %p99 = scmp.eq.s32.totalorder %s98, 0
      %s101 = sadd.s32 %s100, 1
      %s102 = scalar_select %p99, %s100, %s101
      %p105 = pneg %p99
      %p106 = scmp.eq.s32.totalorder %s24, 1
      %p107 = por %p105, %p106
      %p108 = scmp.ne.s32.totalorder %s100, %s103
      %p109 = scmp.eq.s32.totalorder %s24, 0
      %p110 = por %p108, %p109
      %p111 = scmp.ne.s32.totalorder %s100, %s103
      %p112 = scmp.eq.s32.totalorder %s29, 1
      %p113 = por %p111, %p112
      %p114 = scmp.ne.s32.totalorder %s103, %s104
      %p115 = scmp.eq.s32.totalorder %s29, 0
      %p116 = por %p114, %p115
      %p117 = scmp.ne.s32.totalorder %s103, %s104
      %p118 = scmp.eq.s32.totalorder %s30, 1
      %p119 = por %p117, %p118
      %p121 = scmp.ne.s32.totalorder %s104, %s120
      %p122 = scmp.eq.s32.totalorder %s30, 0
      %p123 = por %p121, %p122
      %s124 = ssub.s32 %s31, %s43
      %s125 = ssub.s32 %s32, %s39
      %s126 = sor.u32 %s124, %s125
      %p127 = scmp.eq.s32.totalorder %s126, 0
      %s129 = sadd.s32 %s128, 1
      %s130 = scalar_select %p127, %s128, %s129
      %p133 = pneg %p127
      %p134 = scmp.eq.s32.totalorder %s24, 1
      %p135 = por %p133, %p134
      %p136 = scmp.ne.s32.totalorder %s128, %s131
      %p137 = scmp.eq.s32.totalorder %s24, 0
      %p138 = por %p136, %p137
      %p139 = scmp.ne.s32.totalorder %s128, %s131
      %p140 = scmp.eq.s32.totalorder %s29, 1
      %p141 = por %p139, %p140
      %p142 = scmp.ne.s32.totalorder %s131, %s132
      %p143 = scmp.eq.s32.totalorder %s29, 0
      %p144 = por %p142, %p143
      %p145 = scmp.ne.s32.totalorder %s131, %s132
      %p146 = scmp.eq.s32.totalorder %s30, 1
      %p147 = por %p145, %p146
      %p149 = scmp.ne.s32.totalorder %s132, %s148
      %p150 = scmp.eq.s32.totalorder %s30, 0
      %p151 = por %p149, %p150
      %s152 = ssub.s32 %s31, %s43
      %s153 = ssub.s32 %s32, %s39
      %s154 = sor.u32 %s152, %s153
      %p155 = scmp.eq.s32.totalorder %s154, 0
      %s157 = sadd.s32 %s156, 1
      %s158 = scalar_select %p155, %s156, %s157
      %p161 = pneg %p155
      %p162 = scmp.eq.s32.totalorder %s24, 1
      %p163 = por %p161, %p162
      %p164 = scmp.ne.s32.totalorder %s156, %s159
      %p165 = scmp.eq.s32.totalorder %s24, 0
      %p166 = por %p164, %p165
      %p167 = scmp.ne.s32.totalorder %s156, %s159
      %p168 = scmp.eq.s32.totalorder %s29, 1
      %p169 = por %p167, %p168
      %p170 = scmp.ne.s32.totalorder %s159, %s160
      %p171 = scmp.eq.s32.totalorder %s29, 0
      %p172 = por %p170, %p171
      %p173 = scmp.ne.s32.totalorder %s159, %s160
      %p174 = scmp.eq.s32.totalorder %s30, 1
      %p175 = por %p173, %p174
      %p177 = scmp.ne.s32.totalorder %s160, %s176
      %p178 = scmp.eq.s32.totalorder %s30, 0
      %p179 = por %p177, %p178
      %s180 = ssub.s32 %s31, %s43
      %s181 = ssub.s32 %s32, %s39
      %s182 = sor.u32 %s180, %s181
      %p183 = scmp.eq.s32.totalorder %s182, 0
      %s185 = sadd.s32 %s184, 1
      %s186 = scalar_select %p183, %s184, %s185
      %p189 = pneg %p183
      %p190 = scmp.eq.s32.totalorder %s24, 1
      %p191 = por %p189, %p190
      %p192 = scmp.ne.s32.totalorder %s184, %s187
      %p193 = scmp.eq.s32.totalorder %s24, 0
      %p194 = por %p192, %p193
      %p195 = scmp.ne.s32.totalorder %s184, %s187
      %p196 = scmp.eq.s32.totalorder %s29, 1
      %p197 = por %p195, %p196
      %p198 = scmp.ne.s32.totalorder %s187, %s188
      %p199 = scmp.eq.s32.totalorder %s29, 0
      %p200 = por %p198, %p199
      %p201 = scmp.ne.s32.totalorder %s187, %s188
      %p202 = scmp.eq.s32.totalorder %s30, 1
      %p203 = por %p201, %p202
      %p205 = scmp.ne.s32.totalorder %s188, %s204
      %p206 = scmp.eq.s32.totalorder %s30, 0
      %p207 = por %p205, %p206
      %s209 = sadd.s32 %s208, 1
      %p212 = scmp.eq.s32.totalorder %s24, 1
      %p213 = scmp.ne.s32.totalorder %s208, %s210
      %p214 = scmp.eq.s32.totalorder %s24, 0
      %p215 = por %p213, %p214
      %p216 = scmp.ne.s32.totalorder %s208, %s210
      %p217 = scmp.eq.s32.totalorder %s29, 1
      %p218 = por %p216, %p217
      %p219 = scmp.ne.s32.totalorder %s210, %s211
      %p220 = scmp.eq.s32.totalorder %s29, 0
      %p221 = por %p219, %p220
      %p222 = scmp.ne.s32.totalorder %s210, %s211
      %p223 = scmp.eq.s32.totalorder %s30, 1
      %p224 = por %p222, %p223
      %p226 = scmp.ne.s32.totalorder %s211, %s225
      %p227 = scmp.eq.s32.totalorder %s30, 0
      %p228 = por %p226, %p227
      %s230 = sadd.s32 %s229, 1
      %p233 = scmp.eq.s32.totalorder %s24, 1
      %p234 = scmp.ne.s32.totalorder %s229, %s231
      %p235 = scmp.eq.s32.totalorder %s24, 0
      %p236 = por %p234, %p235
      %p237 = scmp.ne.s32.totalorder %s229, %s231
      %p238 = scmp.eq.s32.totalorder %s29, 1
      %p239 = por %p237, %p238
      %p240 = scmp.ne.s32.totalorder %s231, %s232
      %p241 = scmp.eq.s32.totalorder %s29, 0
      %p242 = por %p240, %p241
      %p243 = scmp.ne.s32.totalorder %s231, %s232
      %p244 = scmp.eq.s32.totalorder %s30, 1
      %p245 = por %p243, %p244
      %p247 = scmp.ne.s32.totalorder %s232, %s246
      %p248 = scmp.eq.s32.totalorder %s30, 0
      %p249 = por %p247, %p248
      %s251 = sadd.s32 %s250, 1
      %p254 = scmp.eq.s32.totalorder %s24, 1
      %p255 = scmp.ne.s32.totalorder %s250, %s252
      %p256 = scmp.eq.s32.totalorder %s24, 0
      %p257 = por %p255, %p256
      %p258 = scmp.ne.s32.totalorder %s250, %s252
      %p259 = scmp.eq.s32.totalorder %s29, 1
      %p260 = por %p258, %p259
      %p261 = scmp.ne.s32.totalorder %s252, %s253
      %p262 = scmp.eq.s32.totalorder %s29, 0
      %p263 = por %p261, %p262
      %p264 = scmp.ne.s32.totalorder %s252, %s253
      %p265 = scmp.eq.s32.totalorder %s30, 1
      %p266 = por %p264, %p265
      %p268 = scmp.ne.s32.totalorder %s253, %s267
      %p269 = scmp.eq.s32.totalorder %s30, 0
      %p270 = por %p268, %p269
      %s272 = sadd.s32 %s271, 1
      %p275 = scmp.eq.s32.totalorder %s24, 1
      %p276 = scmp.ne.s32.totalorder %s271, %s273
      %p277 = scmp.eq.s32.totalorder %s24, 0
      %p278 = por %p276, %p277
      %p279 = scmp.ne.s32.totalorder %s271, %s273
      %p280 = scmp.eq.s32.totalorder %s29, 1
      %p281 = por %p279, %p280
      %p282 = scmp.ne.s32.totalorder %s273, %s274
      %p283 = scmp.eq.s32.totalorder %s29, 0
      %p284 = por %p282, %p283
      %p285 = scmp.ne.s32.totalorder %s273, %s274
      %p286 = scmp.eq.s32.totalorder %s30, 1
      %p287 = por %p285, %p286
      %p289 = scmp.ne.s32.totalorder %s274, %s288
      %p290 = scmp.eq.s32.totalorder %s30, 0
      %p291 = por %p289, %p290
      %s292 = ssub.s32 %s31, %s43
      %s293 = ssub.s32 %s32, %s39
      %s294 = sor.u32 %s292, %s293
      %p295 = scmp.eq.s32.totalorder %s294, 0
      %s297 = sadd.s32 %s296, 1
      %s298 = scalar_select %p295, %s296, %s297
      %p301 = pneg %p295
      %p302 = scmp.eq.s32.totalorder %s24, 1
      %p303 = por %p301, %p302
      %p304 = scmp.ne.s32.totalorder %s296, %s299
      %p305 = scmp.eq.s32.totalorder %s24, 0
      %p306 = por %p304, %p305
      %p307 = scmp.ne.s32.totalorder %s296, %s299
      %p308 = scmp.eq.s32.totalorder %s29, 1
      %p309 = por %p307, %p308
      %p310 = scmp.ne.s32.totalorder %s299, %s300
      %p311 = scmp.eq.s32.totalorder %s29, 0
      %p312 = por %p310, %p311
      %p313 = scmp.ne.s32.totalorder %s299, %s300
      %p314 = scmp.eq.s32.totalorder %s30, 1
      %p315 = por %p313, %p314
      %p317 = scmp.ne.s32.totalorder %s300, %s316
      %p318 = scmp.eq.s32.totalorder %s30, 0
      %p319 = por %p317, %p318
      %s320 = ssub.s32 %s31, %s43
      %s321 = ssub.s32 %s32, %s39
      %s322 = sor.u32 %s320, %s321
      %p323 = scmp.eq.s32.totalorder %s322, 0
      %s325 = sadd.s32 %s324, 1
      %s326 = scalar_select %p323, %s324, %s325
      %p329 = pneg %p323
      %p330 = scmp.eq.s32.totalorder %s24, 1
      %p331 = por %p329, %p330
      %p332 = scmp.ne.s32.totalorder %s324, %s327
      %p333 = scmp.eq.s32.totalorder %s24, 0
      %p334 = por %p332, %p333
      %p335 = scmp.ne.s32.totalorder %s324, %s327
      %p336 = scmp.eq.s32.totalorder %s29, 1
      %p337 = por %p335, %p336
      %p338 = scmp.ne.s32.totalorder %s327, %s328
      %p339 = scmp.eq.s32.totalorder %s29, 0
      %p340 = por %p338, %p339
      %p341 = scmp.ne.s32.totalorder %s327, %s328
      %p342 = scmp.eq.s32.totalorder %s30, 1
      %p343 = por %p341, %p342
      %p345 = scmp.ne.s32.totalorder %s328, %s344
      %p346 = scmp.eq.s32.totalorder %s30, 0
      %p347 = por %p345, %p346
      %p348 = scmp.le.s32.totalorder 1, %s24
      %p349 = scmp.lt.s32.totalorder %s24, 3
      %p350 = pnand %p348, %p349
      %p351 = pneg %p350
      // Predicated region
      $region9: #{tpu_custom_call.1} parent=5 // pred_check
        _
      $region10: #{tpu_custom_call.1} parent=5 // pred_check_branch
        %353 = sbr.rel (%p350) target = $region12
      $region11: #{tpu_custom_call.1} parent=5 // pred_region
        %s354 = ssub.s32 %s24, 1
        // Predicated region
        $region13: #{tpu_custom_call.1} parent=11 // pred_check
          %p355 = pneg %p221
        $region14: #{tpu_custom_call.1} parent=11 // pred_check_branch
          %357 = sbr.rel (%p355) target = $region16
        $region15: #{tpu_custom_call.1} parent=11 // pred_region
          _
        $region16: #{tpu_custom_call.1} parent=11 // pred_fallthru
          _
        // Predicated region
        $region17: #{tpu_custom_call.1} parent=11 // pred_check
          %p358 = pneg %p242
        $region18: #{tpu_custom_call.1} parent=11 // pred_check_branch
          %360 = sbr.rel (%p358) target = $region20
        $region19: #{tpu_custom_call.1} parent=11 // pred_region
          _
        $region20: #{tpu_custom_call.1} parent=11 // pred_fallthru
          _
        // Predicated region
        $region21: #{tpu_custom_call.1} parent=11 // pred_check
          %p361 = pneg %p263
        $region22: #{tpu_custom_call.1} parent=11 // pred_check_branch
          %363 = sbr.rel (%p361) target = $region24
        $region23: #{tpu_custom_call.1} parent=11 // pred_region
          _
        $region24: #{tpu_custom_call.1} parent=11 // pred_fallthru
          _
        // Predicated region
        $region25: #{tpu_custom_call.1} parent=11 // pred_check
          %p364 = pneg %p284
        $region26: #{tpu_custom_call.1} parent=11 // pred_check_branch
          %366 = sbr.rel (%p364) target = $region28
        $region27: #{tpu_custom_call.1} parent=11 // pred_region
          _
        $region28: #{tpu_custom_call.1} parent=11 // pred_fallthru
          _
      $region12: #{tpu_custom_call.1} parent=5 // pred_fallthru
        _
      %p367 = scmp.lt.s32.totalorder %s24, 2
      // Predicated region
      $region29: #{tpu_custom_call.1} parent=5 // pred_check
        %p368 = pneg %p367
      $region30: #{tpu_custom_call.1} parent=5 // pred_check_branch
        %370 = sbr.rel (%p368) target = $region32
      $region31: #{tpu_custom_call.1} parent=5 // pred_region
        // Predicated region
        $region33: #{tpu_custom_call.1} parent=31 // pred_check
          %p371 = pneg %p58
        $region34: #{tpu_custom_call.1} parent=31 // pred_check_branch
          %373 = sbr.rel (%p371) target = $region36
        $region35: #{tpu_custom_call.1} parent=31 // pred_region
          %p374 = scmp.lt.s32.totalorder %s31, 1
          %s375 = scalar_select %p374, %s31, 1
          %p376 = scmp.lt.s32.totalorder %s32, 0
          %s377 = scalar_select %p376, %s32, 0
          %s378 = smul.addr %s375, 4
          %s379 = sadd.s32 %s377, %s378
          %s380 = smul.addr %s379, 4
          %s381 = scalar_lea.vmem %s0, %s380
        $region36: #{tpu_custom_call.1} parent=31 // pred_fallthru
          _
        // Predicated region
        $region37: #{tpu_custom_call.1} parent=31 // pred_check
          %p382 = pneg %p84
        $region38: #{tpu_custom_call.1} parent=31 // pred_check_branch
          %384 = sbr.rel (%p382) target = $region40
        $region39: #{tpu_custom_call.1} parent=31 // pred_region
          %p385 = scmp.lt.s32.totalorder %s31, 1
          %s386 = scalar_select %p385, %s31, 1
          %s387 = smul.addr %s386, 4
          %s388 = smul.addr %s387, 4
          %s389 = scalar_lea.vmem %s1, %s388
        $region40: #{tpu_custom_call.1} parent=31 // pred_fallthru
          _
        // Predicated region
        $region41: #{tpu_custom_call.1} parent=31 // pred_check
          %p390 = pneg %p110
        $region42: #{tpu_custom_call.1} parent=31 // pred_check_branch
          %392 = sbr.rel (%p390) target = $region44
        $region43: #{tpu_custom_call.1} parent=31 // pred_region
          %p393 = scmp.lt.s32.totalorder %s31, 1
          %s394 = scalar_select %p393, %s31, 1
          %s395 = smul.addr %s394, 4
          %s396 = smul.addr %s395, 4
          %s397 = scalar_lea.vmem %s2, %s396
        $region44: #{tpu_custom_call.1} parent=31 // pred_fallthru
          _
        // Predicated region
        $region45: #{tpu_custom_call.1} parent=31 // pred_check
          %p398 = pneg %p138
        $region46: #{tpu_custom_call.1} parent=31 // pred_check_branch
          %400 = sbr.rel (%p398) target = $region48
        $region47: #{tpu_custom_call.1} parent=31 // pred_region
          %p401 = scmp.lt.s32.totalorder %s31, 1
          %s402 = scalar_select %p401, %s31, 1
          %p403 = scmp.lt.s32.totalorder %s32, 0
          %s404 = scalar_select %p403, %s32, 0
          %s405 = smul.addr %s402, 4
          %s406 = sadd.s32 %s404, %s405
          %s407 = smul.addr %s406, 4
          %s408 = scalar_lea.vmem %s3, %s407
        $region48: #{tpu_custom_call.1} parent=31 // pred_fallthru
          _
        // Predicated region
        $region49: #{tpu_custom_call.1} parent=31 // pred_check
          %p409 = pneg %p166
        $region50: #{tpu_custom_call.1} parent=31 // pred_check_branch
          %411 = sbr.rel (%p409) target = $region52
        $region51: #{tpu_custom_call.1} parent=31 // pred_region
          %s412 = smul.u32 8, %s32
          %p413 = scmp.lt.s32.totalorder %s31, 1
          %s414 = scalar_select %p413, %s31, 1
          %p415 = scmp.lt.s32.totalorder %s412, 7
          %s416 = scalar_select %p415, %s412, 7
          %s417 = smul.addr %s416, 4
          %s418 = smul.addr %s414, 32
          %s419 = sadd.s32 %s417, %s418
          %s420 = smul.addr %s419, 4
          %s421 = scalar_lea.vmem %s4, %s420
          %s422 = smul.u32 8, %s32
        $region52: #{tpu_custom_call.1} parent=31 // pred_fallthru
          _
        // Predicated region
        $region53: #{tpu_custom_call.1} parent=31 // pred_check
          %p423 = pneg %p194
        $region54: #{tpu_custom_call.1} parent=31 // pred_check_branch
          %425 = sbr.rel (%p423) target = $region56
        $region55: #{tpu_custom_call.1} parent=31 // pred_region
          %p426 = scmp.lt.s32.totalorder %s31, 1
          %s427 = scalar_select %p426, %s31, 1
          %p428 = scmp.lt.s32.totalorder %s32, 0
          %s429 = scalar_select %p428, %s32, 0
          %s430 = sadd.s32 %s429, %s427
          %s431 = smul.addr %s430, 8
          %s432 = scalar_lea.vmem %s5, %s431
        $region56: #{tpu_custom_call.1} parent=31 // pred_fallthru
          _
      $region32: #{tpu_custom_call.1} parent=5 // pred_fallthru
        _
      %p433 = scmp.le.s32.totalorder 1, %s24
      %p434 = scmp.lt.s32.totalorder %s24, 3
      %p435 = pnand %p433, %p434
      %p436 = pneg %p435
      // Predicated region
      $region57: #{tpu_custom_call.1} parent=5 // pred_check
        _
      $region58: #{tpu_custom_call.1} parent=5 // pred_check_branch
        %438 = sbr.rel (%p435) target = $region60
      $region59: #{tpu_custom_call.1} parent=5 // pred_region
        %s439 = ssub.s32 %s24, 1
        %p440 = scmp.lt.s32.totalorder %s33, 1
        %s441 = scalar_select %p440, %s33, 1
        %p442 = scmp.lt.s32.totalorder %s34, 0
        %s443 = scalar_select %p442, %s34, 0
        %s444 = smul.addr %s441, 4
        %s445 = sadd.s32 %s443, %s444
        %s446 = smul.addr %s445, 4
        %s447 = scalar_lea.vmem %s0, %s446
        %p448 = pneg %p64
        %p449 = pneg %p61
        %p450 = scmp.lt.s32.totalorder %s33, 1
        %s451 = scalar_select %p450, %s33, 1
        %s452 = smul.addr %s451, 4
        %s453 = smul.addr %s452, 4
        %s454 = scalar_lea.vmem %s1, %s453
        %p455 = pneg %p90
        %p456 = pneg %p87
        %p457 = scmp.lt.s32.totalorder %s33, 1
        %s458 = scalar_select %p457, %s33, 1
        %s459 = smul.addr %s458, 4
        %s460 = smul.addr %s459, 4
        %s461 = scalar_lea.vmem %s2, %s460
        %p462 = pneg %p116
        %p463 = pneg %p113
        %p464 = scmp.lt.s32.totalorder %s33, 1
        %s465 = scalar_select %p464, %s33, 1
        %p466 = scmp.lt.s32.totalorder %s34, 0
        %s467 = scalar_select %p466, %s34, 0
        %s468 = smul.addr %s465, 4
        %s469 = sadd.s32 %s467, %s468
        %s470 = smul.addr %s469, 4
        %s471 = scalar_lea.vmem %s3, %s470
        %p472 = pneg %p144
        %p473 = pneg %p141
        %s474 = smul.u32 8, %s34
        %p475 = scmp.lt.s32.totalorder %s33, 1
        %s476 = scalar_select %p475, %s33, 1
        %p477 = scmp.lt.s32.totalorder %s474, 7
        %s478 = scalar_select %p477, %s474, 7
        %s479 = smul.addr %s478, 4
        %s480 = smul.addr %s476, 32
        %s481 = sadd.s32 %s479, %s480
        %s482 = smul.addr %s481, 4
        %s483 = scalar_lea.vmem %s4, %s482
        %p484 = pneg %p172
        %p485 = pneg %p169
        %p486 = scmp.lt.s32.totalorder %s33, 1
        %s487 = scalar_select %p486, %s33, 1
        %p488 = scmp.lt.s32.totalorder %s34, 0
        %s489 = scalar_select %p488, %s34, 0
        %s490 = sadd.s32 %s489, %s487
        %s491 = smul.addr %s490, 8
        %s492 = scalar_lea.vmem %s5, %s491
        %p493 = pneg %p200
        %p494 = pneg %p197
        %p495 = pneg %p221
        %p496 = pneg %p218
        %p497 = pneg %p242
        %p498 = pneg %p239
        %p499 = pneg %p263
        %p500 = pneg %p260
        %p501 = pneg %p284
        %p502 = pneg %p281
        %p503 = pneg %p312
        %p504 = pneg %p309
        %s505 = sand.u32 %s299, 1
        %s506 = scalar_lea.sflag [#allocation3], %s505
        %s507 = sand.u32 %s299, 1
        %s508 = smul.addr %s507, 8
        %s509 = scalar_lea.vmem [#allocation2], %s508
        %p510 = pneg %p340
        %p511 = pneg %p337
        %s512 = sand.u32 %s327, 1
        %s513 = scalar_lea.sflag [#allocation5], %s512
        %s514 = sand.u32 %s327, 1
        %s515 = smul.addr %s514, 32
        %s516 = scalar_lea.vmem [#allocation4], %s515
        %p517 = scmp.lt.s32.totalorder %s33, 1
        %s518 = scalar_select %p517, %s33, 1
        %p519 = scmp.lt.s32.totalorder %s34, 0
        %s520 = scalar_select %p519, %s34, 0
        %s521 = smul.addr %s518, 4
        %s522 = sadd.s32 %s520, %s521
        %s523 = smul.addr %s522, 4
        %s524 = scalar_lea.vmem %s0, %s523
        %p525 = scmp.lt.s32.totalorder %s33, 1
        %s526 = scalar_select %p525, %s33, 1
        %s527 = smul.addr %s526, 4
        %s528 = smul.addr %s527, 4
        %s529 = scalar_lea.vmem %s1, %s528
        %p530 = scmp.lt.s32.totalorder %s33, 1
        %s531 = scalar_select %p530, %s33, 1
        %s532 = smul.addr %s531, 4
        %s533 = smul.addr %s532, 4
        %s534 = scalar_lea.vmem %s2, %s533
        %p535 = scmp.lt.s32.totalorder %s33, 1
        %s536 = scalar_select %p535, %s33, 1
        %p537 = scmp.lt.s32.totalorder %s34, 0
        %s538 = scalar_select %p537, %s34, 0
        %s539 = smul.addr %s536, 4
        %s540 = sadd.s32 %s538, %s539
        %s541 = smul.addr %s540, 4
        %s542 = scalar_lea.vmem %s3, %s541
        %s543 = smul.u32 8, %s34
        %p544 = scmp.lt.s32.totalorder %s33, 1
        %s545 = scalar_select %p544, %s33, 1
        %p546 = scmp.lt.s32.totalorder %s543, 7
        %s547 = scalar_select %p546, %s543, 7
        %s548 = smul.addr %s547, 4
        %s549 = smul.addr %s545, 32
        %s550 = sadd.s32 %s548, %s549
        %s551 = smul.addr %s550, 4
        %s552 = scalar_lea.vmem %s4, %s551
        %s553 = smul.u32 8, %s34
        %p554 = scmp.lt.s32.totalorder %s33, 1
        %s555 = scalar_select %p554, %s33, 1
        %p556 = scmp.lt.s32.totalorder %s34, 0
        %s557 = scalar_select %p556, %s34, 0
        %s558 = sadd.s32 %s557, %s555
        %s559 = smul.addr %s558, 8
        %s560 = scalar_lea.vmem %s5, %s559
        %v562 = vld [vmem:[%s552] sm:$0xf]
        %v563 = vld [vmem:[%s552 + $0x4] sm:$0xf]
        %v564 = vld [vmem:[%s552 + $0x8] sm:$0xf]
        %v565 = vld [vmem:[%s552 + $0xc] sm:$0xf]
        %v566 = vld [vmem:[%s552 + $0x10] sm:$0xf]
        %v567 = vld [vmem:[%s552 + $0x14] sm:$0xf]
        %v568 = vld [vmem:[%s552 + $0x18] sm:$0xf]
        %v569 = vld [vmem:[%s552 + $0x1c] sm:$0xf]
        %v570 = vld [vmem:[%s552 + $0x20] sm:$0xf]
        %v571 = vld [vmem:[%s552 + $0x24] sm:$0xf]
        %v572 = vld [vmem:[%s552 + $0x28] sm:$0xf]
        %v573 = vld [vmem:[%s552 + $0x2c] sm:$0xf]
        %v574 = vld [vmem:[%s552 + $0x30] sm:$0xf]
        %v575 = vld [vmem:[%s552 + $0x34] sm:$0xf]
        %v576 = vld [vmem:[%s552 + $0x38] sm:$0xf]
        %v577 = vld [vmem:[%s552 + $0x3c] sm:$0xf]
        %v578 = vld [vmem:[%s552 + $0x40] sm:$0xf]
        %v579 = vld [vmem:[%s552 + $0x44] sm:$0xf]
        %v580 = vld [vmem:[%s552 + $0x48] sm:$0xf]
        %v581 = vld [vmem:[%s552 + $0x4c] sm:$0xf]
        %v582 = vld [vmem:[%s552 + $0x50] sm:$0xf]
        %v583 = vld [vmem:[%s552 + $0x54] sm:$0xf]
        %v584 = vld [vmem:[%s552 + $0x58] sm:$0xf]
        %v585 = vld [vmem:[%s552 + $0x5c] sm:$0xf]
        %v586 = vld [vmem:[%s552 + $0x60] sm:$0xf]
        %v587 = vld [vmem:[%s552 + $0x64] sm:$0xf]
        %v588 = vld [vmem:[%s552 + $0x68] sm:$0xf]
        %v589 = vld [vmem:[%s552 + $0x6c] sm:$0xf]
        %v590 = vld [vmem:[%s552 + $0x70] sm:$0xf]
        %v591 = vld [vmem:[%s552 + $0x74] sm:$0xf]
        %v592 = vld [vmem:[%s552 + $0x78] sm:$0xf]
        %v593 = vld [vmem:[%s552 + $0x7c] sm:$0xf]
        %v594 = vld [vmem:[%s560] sm:$0xff]
        %v595 = vld [vmem:[%s7] sm:$0x1]
        %v597 = vlaneseq
        %v598 = vshrl.u32 %v597, 7
        %v599 = vsub.s32 0, %v598
        %v600 = vrot.slane %v595, %v599
        %v602 = vadd.f32 %v594, %v600
        %v603 = vld [vmem:[%s524] sm:$0xf]
        %v604 = vld [vmem:[%s529] sm:$0xf]
        %v605 = vld [vmem:[%s534] sm:$0xf]
        %v606 = vld [vmem:[%s542] sm:$0xf]
        %v608 = vpack.i.b16 %v606, %v606
        %v610 = vlaneseq
        %v611 = vshrl.u32 %v610, 7
        %v612 = vsub.s32 0, %v611
        %v613 = vrot.slane %v608, %v612
        %615 = vbcast.lane.c.b16.xlu0 %v613, 256
        %v616 = vpop.permute.xlu0 %615
        %s618 = sor.u32 256, 16
        %619 = vbcast.lane.c.b16.xlu0 %v613, %s618
        %v620 = vpop.permute.xlu0 %619
        %v621 = vshrl.u32 %v606, 16
        %v622 = vpack.i.b16 %v621, %v621
        %v624 = vlaneseq
        %v625 = vshrl.u32 %v624, 7
        %v626 = vsub.s32 0, %v625
        %v627 = vrot.slane %v622, %v626
        %629 = vbcast.lane.c.b16.xlu0 %v627, 256
        %v630 = vpop.permute.xlu0 %629
        %s632 = sor.u32 256, 16
        %633 = vbcast.lane.c.b16.xlu0 %v627, %s632
        %v634 = vpop.permute.xlu0 %633
        %v635 = vlaneseq
        %v636 = vshrl.u32 %v635, 7
        %v637 = vsub.s32 1, %v636
        %v638 = vrot.slane %v608, %v637
        %640 = vbcast.lane.c.b16.xlu0 %v638, 256
        %v641 = vpop.permute.xlu0 %640
        %s643 = sor.u32 256, 16
        %644 = vbcast.lane.c.b16.xlu0 %v638, %s643
        %v645 = vpop.permute.xlu0 %644
        %v646 = vlaneseq
        %v647 = vshrl.u32 %v646, 7
        %v648 = vsub.s32 1, %v647
        %v649 = vrot.slane %v622, %v648
        %651 = vbcast.lane.c.b16.xlu0 %v649, 256
        %v652 = vpop.permute.xlu0 %651
        %s654 = sor.u32 256, 16
        %655 = vbcast.lane.c.b16.xlu0 %v649, %s654
        %v656 = vpop.permute.xlu0 %655
        %v657 = vlaneseq
        %v658 = vshrl.u32 %v657, 7
        %v659 = vsub.s32 2, %v658
        %v660 = vrot.slane %v608, %v659
        %662 = vbcast.lane.c.b16.xlu0 %v660, 256
        %v663 = vpop.permute.xlu0 %662
        %s665 = sor.u32 256, 16
        %666 = vbcast.lane.c.b16.xlu0 %v660, %s665
        %v667 = vpop.permute.xlu0 %666
        %v668 = vlaneseq
        %v669 = vshrl.u32 %v668, 7
        %v670 = vsub.s32 2, %v669
        %v671 = vrot.slane %v622, %v670
        %673 = vbcast.lane.c.b16.xlu0 %v671, 256
        %v674 = vpop.permute.xlu0 %673
        %s676 = sor.u32 256, 16
        %677 = vbcast.lane.c.b16.xlu0 %v671, %s676
        %v678 = vpop.permute.xlu0 %677
        %v679 = vlaneseq
        %v680 = vshrl.u32 %v679, 7
        %v681 = vsub.s32 3, %v680
        %v682 = vrot.slane %v608, %v681
        %684 = vbcast.lane.c.b16.xlu0 %v682, 256
        %v685 = vpop.permute.xlu0 %684
        %s687 = sor.u32 256, 16
        %688 = vbcast.lane.c.b16.xlu0 %v682, %s687
        %v689 = vpop.permute.xlu0 %688
        %v690 = vlaneseq
        %v691 = vshrl.u32 %v690, 7
        %v692 = vsub.s32 3, %v691
        %v693 = vrot.slane %v622, %v692
        %695 = vbcast.lane.c.b16.xlu0 %v693, 256
        %v696 = vpop.permute.xlu0 %695
        %s698 = sor.u32 256, 16
        %699 = vbcast.lane.c.b16.xlu0 %v693, %s698
        %v700 = vpop.permute.xlu0 %699
        %v718 = vunpack.c.l.s4 839922192
        %v719 = vunpack.c.0.s8 %v718
        %v720 = vlaneseq
        %v721 = vshrl.u32 %v720, 7
        %v722 = vsub.s32 %v719, %v721
        %v723 = vrot.slane %v616, %v722
        %v725 = vunpack.c.l.s4 1985246804
        %v726 = vunpack.c.0.s8 %v725
        %v727 = vlaneseq
        %v728 = vshrl.u32 %v727, 7
        %v729 = vsub.s32 %v726, %v728
        %v730 = vrot.slane %v616, %v729
        %v732 = vunpack.c.l.s4 839922192
        %v733 = vunpack.c.0.s8 %v732
        %v734 = vlaneseq
        %v735 = vshrl.u32 %v734, 7
        %v736 = vsub.s32 %v733, %v735
        %v737 = vrot.slane %v620, %v736
        %v739 = vunpack.c.l.s4 1985246804
        %v740 = vunpack.c.0.s8 %v739
        %v741 = vlaneseq
        %v742 = vshrl.u32 %v741, 7
        %v743 = vsub.s32 %v740, %v742
        %v744 = vrot.slane %v620, %v743
        %v746 = vunpack.c.l.s4 839922192
        %v747 = vunpack.c.0.s8 %v746
        %v748 = vlaneseq
        %v749 = vshrl.u32 %v748, 7
        %v750 = vsub.s32 %v747, %v749
        %v751 = vrot.slane %v630, %v750
        %v753 = vunpack.c.l.s4 1985246804
        %v754 = vunpack.c.0.s8 %v753
        %v755 = vlaneseq
        %v756 = vshrl.u32 %v755, 7
        %v757 = vsub.s32 %v754, %v756
        %v758 = vrot.slane %v630, %v757
        %v760 = vunpack.c.l.s4 839922192
        %v761 = vunpack.c.0.s8 %v760
        %v762 = vlaneseq
        %v763 = vshrl.u32 %v762, 7
        %v764 = vsub.s32 %v761, %v763
        %v765 = vrot.slane %v634, %v764
        %v767 = vunpack.c.l.s4 1985246804
        %v768 = vunpack.c.0.s8 %v767
        %v769 = vlaneseq
        %v770 = vshrl.u32 %v769, 7
        %v771 = vsub.s32 %v768, %v770
        %v772 = vrot.slane %v634, %v771
        %v774 = vunpack.c.l.s4 839922192
        %v775 = vunpack.c.0.s8 %v774
        %v776 = vlaneseq
        %v777 = vshrl.u32 %v776, 7
        %v778 = vsub.s32 %v775, %v777
        %v779 = vrot.slane %v641, %v778
        %v781 = vunpack.c.l.s4 1985246804
        %v782 = vunpack.c.0.s8 %v781
        %v783 = vlaneseq
        %v784 = vshrl.u32 %v783, 7
        %v785 = vsub.s32 %v782, %v784
        %v786 = vrot.slane %v641, %v785
        %v788 = vunpack.c.l.s4 839922192
        %v789 = vunpack.c.0.s8 %v788
        %v790 = vlaneseq
        %v791 = vshrl.u32 %v790, 7
        %v792 = vsub.s32 %v789, %v791
        %v793 = vrot.slane %v645, %v792
        %v795 = vunpack.c.l.s4 1985246804
        %v796 = vunpack.c.0.s8 %v795
        %v797 = vlaneseq
        %v798 = vshrl.u32 %v797, 7
        %v799 = vsub.s32 %v796, %v798
        %v800 = vrot.slane %v645, %v799
        %v802 = vunpack.c.l.s4 839922192
        %v803 = vunpack.c.0.s8 %v802
        %v804 = vlaneseq
        %v805 = vshrl.u32 %v804, 7
        %v806 = vsub.s32 %v803, %v805
        %v807 = vrot.slane %v652, %v806
        %v809 = vunpack.c.l.s4 1985246804
        %v810 = vunpack.c.0.s8 %v809
        %v811 = vlaneseq
        %v812 = vshrl.u32 %v811, 7
        %v813 = vsub.s32 %v810, %v812
        %v814 = vrot.slane %v652, %v813
        %v816 = vunpack.c.l.s4 839922192
        %v817 = vunpack.c.0.s8 %v816
        %v818 = vlaneseq
        %v819 = vshrl.u32 %v818, 7
        %v820 = vsub.s32 %v817, %v819
        %v821 = vrot.slane %v656, %v820
        %v823 = vunpack.c.l.s4 1985246804
        %v824 = vunpack.c.0.s8 %v823
        %v825 = vlaneseq
        %v826 = vshrl.u32 %v825, 7
        %v827 = vsub.s32 %v824, %v826
        %v828 = vrot.slane %v656, %v827
        %v830 = vunpack.c.l.s4 839922192
        %v831 = vunpack.c.0.s8 %v830
        %v832 = vlaneseq
        %v833 = vshrl.u32 %v832, 7
        %v834 = vsub.s32 %v831, %v833
        %v835 = vrot.slane %v663, %v834
        %v837 = vunpack.c.l.s4 1985246804
        %v838 = vunpack.c.0.s8 %v837
        %v839 = vlaneseq
        %v840 = vshrl.u32 %v839, 7
        %v841 = vsub.s32 %v838, %v840
        %v842 = vrot.slane %v663, %v841
        %v844 = vunpack.c.l.s4 839922192
        %v845 = vunpack.c.0.s8 %v844
        %v846 = vlaneseq
        %v847 = vshrl.u32 %v846, 7
        %v848 = vsub.s32 %v845, %v847
        %v849 = vrot.slane %v667, %v848
        %v851 = vunpack.c.l.s4 1985246804
        %v852 = vunpack.c.0.s8 %v851
        %v853 = vlaneseq
        %v854 = vshrl.u32 %v853, 7
        %v855 = vsub.s32 %v852, %v854
        %v856 = vrot.slane %v667, %v855
        %v858 = vunpack.c.l.s4 839922192
        %v859 = vunpack.c.0.s8 %v858
        %v860 = vlaneseq
        %v861 = vshrl.u32 %v860, 7
        %v862 = vsub.s32 %v859, %v861
        %v863 = vrot.slane %v674, %v862
        %v865 = vunpack.c.l.s4 1985246804
        %v866 = vunpack.c.0.s8 %v865
        %v867 = vlaneseq
        %v868 = vshrl.u32 %v867, 7
        %v869 = vsub.s32 %v866, %v868
        %v870 = vrot.slane %v674, %v869
        %v872 = vunpack.c.l.s4 839922192
        %v873 = vunpack.c.0.s8 %v872
        %v874 = vlaneseq
        %v875 = vshrl.u32 %v874, 7
        %v876 = vsub.s32 %v873, %v875
        %v877 = vrot.slane %v678, %v876
        %v879 = vunpack.c.l.s4 1985246804
        %v880 = vunpack.c.0.s8 %v879
        %v881 = vlaneseq
        %v882 = vshrl.u32 %v881, 7
        %v883 = vsub.s32 %v880, %v882
        %v884 = vrot.slane %v678, %v883
        %v886 = vunpack.c.l.s4 839922192
        %v887 = vunpack.c.0.s8 %v886
        %v888 = vlaneseq
        %v889 = vshrl.u32 %v888, 7
        %v890 = vsub.s32 %v887, %v889
        %v891 = vrot.slane %v685, %v890
        %v893 = vunpack.c.l.s4 1985246804
        %v894 = vunpack.c.0.s8 %v893
        %v895 = vlaneseq
        %v896 = vshrl.u32 %v895, 7
        %v897 = vsub.s32 %v894, %v896
        %v898 = vrot.slane %v685, %v897
        %v900 = vunpack.c.l.s4 839922192
        %v901 = vunpack.c.0.s8 %v900
        %v902 = vlaneseq
        %v903 = vshrl.u32 %v902, 7
        %v904 = vsub.s32 %v901, %v903
        %v905 = vrot.slane %v689, %v904
        %v907 = vunpack.c.l.s4 1985246804
        %v908 = vunpack.c.0.s8 %v907
        %v909 = vlaneseq
        %v910 = vshrl.u32 %v909, 7
        %v911 = vsub.s32 %v908, %v910
        %v912 = vrot.slane %v689, %v911
        %v914 = vunpack.c.l.s4 839922192
        %v915 = vunpack.c.0.s8 %v914
        %v916 = vlaneseq
        %v917 = vshrl.u32 %v916, 7
        %v918 = vsub.s32 %v915, %v917
        %v919 = vrot.slane %v696, %v918
        %v921 = vunpack.c.l.s4 1985246804
        %v922 = vunpack.c.0.s8 %v921
        %v923 = vlaneseq
        %v924 = vshrl.u32 %v923, 7
        %v925 = vsub.s32 %v922, %v924
        %v926 = vrot.slane %v696, %v925
        %v928 = vunpack.c.l.s4 839922192
        %v929 = vunpack.c.0.s8 %v928
        %v930 = vlaneseq
        %v931 = vshrl.u32 %v930, 7
        %v932 = vsub.s32 %v929, %v931
        %v933 = vrot.slane %v700, %v932
        %v935 = vunpack.c.l.s4 1985246804
        %v936 = vunpack.c.0.s8 %v935
        %v937 = vlaneseq
        %v938 = vshrl.u32 %v937, 7
        %v939 = vsub.s32 %v936, %v938
        %v940 = vrot.slane %v700, %v939
        %v973 = vmul.bf16 %v562, %v723
        %v974 = vmul.bf16 %v563, %v730
        %v975 = vmul.bf16 %v564, %v737
        %v976 = vmul.bf16 %v565, %v744
        %v977 = vmul.bf16 %v566, %v751
        %v978 = vmul.bf16 %v567, %v758
        %v979 = vmul.bf16 %v568, %v765
        %v980 = vmul.bf16 %v569, %v772
        %v981 = vmul.bf16 %v570, %v779
        %v982 = vmul.bf16 %v571, %v786
        %v983 = vmul.bf16 %v572, %v793
        %v984 = vmul.bf16 %v573, %v800
        %v985 = vmul.bf16 %v574, %v807
        %v986 = vmul.bf16 %v575, %v814
        %v987 = vmul.bf16 %v576, %v821
        %v988 = vmul.bf16 %v577, %v828
        %v989 = vmul.bf16 %v578, %v835
        %v990 = vmul.bf16 %v579, %v842
        %v991 = vmul.bf16 %v580, %v849
        %v992 = vmul.bf16 %v581, %v856
        %v993 = vmul.bf16 %v582, %v863
        %v994 = vmul.bf16 %v583, %v870
        %v995 = vmul.bf16 %v584, %v877
        %v996 = vmul.bf16 %v585, %v884
        %v997 = vmul.bf16 %v586, %v891
        %v998 = vmul.bf16 %v587, %v898
        %v999 = vmul.bf16 %v588, %v905
        %v1000 = vmul.bf16 %v589, %v912
        %v1001 = vmul.bf16 %v590, %v919
        %v1002 = vmul.bf16 %v591, %v926
        %v1003 = vmul.bf16 %v592, %v933
        %v1004 = vmul.bf16 %v593, %v940
        %v1005 = vunpack.c.l.bf16 %v973
        %v1006 = vunpack.c.l.bf16 %v974
        %v1007 = vunpack.c.l.bf16 %v975
        %v1008 = vunpack.c.l.bf16 %v976
        %v1009 = vunpack.c.l.bf16 %v977
        %v1010 = vunpack.c.l.bf16 %v978
        %v1011 = vunpack.c.l.bf16 %v979
        %v1012 = vunpack.c.l.bf16 %v980
        %v1013 = vunpack.c.l.bf16 %v981
        %v1014 = vunpack.c.l.bf16 %v982
        %v1015 = vunpack.c.l.bf16 %v983
        %v1016 = vunpack.c.l.bf16 %v984
        %v1017 = vunpack.c.l.bf16 %v985
        %v1018 = vunpack.c.l.bf16 %v986
        %v1019 = vunpack.c.l.bf16 %v987
        %v1020 = vunpack.c.l.bf16 %v988
        %v1021 = vunpack.c.l.bf16 %v989
        %v1022 = vunpack.c.l.bf16 %v990
        %v1023 = vunpack.c.l.bf16 %v991
        %v1024 = vunpack.c.l.bf16 %v992
        %v1025 = vunpack.c.l.bf16 %v993
        %v1026 = vunpack.c.l.bf16 %v994
        %v1027 = vunpack.c.l.bf16 %v995
        %v1028 = vunpack.c.l.bf16 %v996
        %v1029 = vunpack.c.l.bf16 %v997
        %v1030 = vunpack.c.l.bf16 %v998
        %v1031 = vunpack.c.l.bf16 %v999
        %v1032 = vunpack.c.l.bf16 %v1000
        %v1033 = vunpack.c.l.bf16 %v1001
        %v1034 = vunpack.c.l.bf16 %v1002
        %v1035 = vunpack.c.l.bf16 %v1003
        %v1036 = vunpack.c.l.bf16 %v1004
        %vm1037 = vcmask 64512
        %v1038 = vsel %vm1037, %v1005, 0.0
        %v1039 = vsel %vm1037, %v1006, 0.0
        %v1040 = vadd.f32 %v1038, %v1039
        %v1041 = vsel %vm1037, %v1007, 0.0
        %v1042 = vadd.f32 %v1040, %v1041
        %v1043 = vsel %vm1037, %v1008, 0.0
        %v1044 = vadd.f32 %v1042, %v1043
        %v1045 = vrot.slane %v1044, 4
        %v1046 = vadd.f32 %v1044, %v1045
        %v1047 = vrot.slane %v1046, 2
        %v1048 = vadd.f32 %v1046, %v1047
        %v1049 = vrot.slane %v1048, 1
        %v1050 = vadd.f32 %v1048, %v1049
        %v1051 = vsel %vm1037, %v1009, 0.0
        %v1052 = vsel %vm1037, %v1010, 0.0
        %v1053 = vadd.f32 %v1051, %v1052
        %v1054 = vsel %vm1037, %v1011, 0.0
        %v1055 = vadd.f32 %v1053, %v1054
        %v1056 = vsel %vm1037, %v1012, 0.0
        %v1057 = vadd.f32 %v1055, %v1056
        %v1058 = vrot.slane %v1057, 4
        %v1059 = vadd.f32 %v1057, %v1058
        %v1060 = vrot.slane %v1059, 2
        %v1061 = vadd.f32 %v1059, %v1060
        %v1062 = vrot.slane %v1061, 1
        %v1063 = vadd.f32 %v1061, %v1062
        %v1064 = vsel %vm1037, %v1013, 0.0
        %v1065 = vsel %vm1037, %v1014, 0.0
        %v1066 = vadd.f32 %v1064, %v1065
        %v1067 = vsel %vm1037, %v1015, 0.0
        %v1068 = vadd.f32 %v1066, %v1067
        %v1069 = vsel %vm1037, %v1016, 0.0
        %v1070 = vadd.f32 %v1068, %v1069
        %v1071 = vrot.slane %v1070, 4
        %v1072 = vadd.f32 %v1070, %v1071
        %v1073 = vrot.slane %v1072, 2
        %v1074 = vadd.f32 %v1072, %v1073
        %v1075 = vrot.slane %v1074, 1
        %v1076 = vadd.f32 %v1074, %v1075
        %v1077 = vsel %vm1037, %v1017, 0.0
        %v1078 = vsel %vm1037, %v1018, 0.0
        %v1079 = vadd.f32 %v1077, %v1078
        %v1080 = vsel %vm1037, %v1019, 0.0
        %v1081 = vadd.f32 %v1079, %v1080
        %v1082 = vsel %vm1037, %v1020, 0.0
        %v1083 = vadd.f32 %v1081, %v1082
        %v1084 = vrot.slane %v1083, 4
        %v1085 = vadd.f32 %v1083, %v1084
        %v1086 = vrot.slane %v1085, 2
        %v1087 = vadd.f32 %v1085, %v1086
        %v1088 = vrot.slane %v1087, 1
        %v1089 = vadd.f32 %v1087, %v1088
        %v1090 = vsel %vm1037, %v1021, 0.0
        %v1091 = vsel %vm1037, %v1022, 0.0
        %v1092 = vadd.f32 %v1090, %v1091
        %v1093 = vsel %vm1037, %v1023, 0.0
        %v1094 = vadd.f32 %v1092, %v1093
        %v1095 = vsel %vm1037, %v1024, 0.0
        %v1096 = vadd.f32 %v1094, %v1095
        %v1097 = vrot.slane %v1096, 4
        %v1098 = vadd.f32 %v1096, %v1097
        %v1099 = vrot.slane %v1098, 2
        %v1100 = vadd.f32 %v1098, %v1099
        %v1101 = vrot.slane %v1100, 1
        %v1102 = vadd.f32 %v1100, %v1101
        %v1103 = vsel %vm1037, %v1025, 0.0
        %v1104 = vsel %vm1037, %v1026, 0.0
        %v1105 = vadd.f32 %v1103, %v1104
        %v1106 = vsel %vm1037, %v1027, 0.0
        %v1107 = vadd.f32 %v1105, %v1106
        %v1108 = vsel %vm1037, %v1028, 0.0
        %v1109 = vadd.f32 %v1107, %v1108
        %v1110 = vrot.slane %v1109, 4
        %v1111 = vadd.f32 %v1109, %v1110
        %v1112 = vrot.slane %v1111, 2
        %v1113 = vadd.f32 %v1111, %v1112
        %v1114 = vrot.slane %v1113, 1
        %v1115 = vadd.f32 %v1113, %v1114
        %v1116 = vsel %vm1037, %v1029, 0.0
        %v1117 = vsel %vm1037, %v1030, 0.0
        %v1118 = vadd.f32 %v1116, %v1117
        %v1119 = vsel %vm1037, %v1031, 0.0
        %v1120 = vadd.f32 %v1118, %v1119
        %v1121 = vsel %vm1037, %v1032, 0.0
        %v1122 = vadd.f32 %v1120, %v1121
        %v1123 = vrot.slane %v1122, 4
        %v1124 = vadd.f32 %v1122, %v1123
        %v1125 = vrot.slane %v1124, 2
        %v1126 = vadd.f32 %v1124, %v1125
        %v1127 = vrot.slane %v1126, 1
        %v1128 = vadd.f32 %v1126, %v1127
        %v1129 = vsel %vm1037, %v1033, 0.0
        %v1130 = vsel %vm1037, %v1034, 0.0
        %v1131 = vadd.f32 %v1129, %v1130
        %v1132 = vsel %vm1037, %v1035, 0.0
        %v1133 = vadd.f32 %v1131, %v1132
        %v1134 = vsel %vm1037, %v1036, 0.0
        %v1135 = vadd.f32 %v1133, %v1134
        %v1136 = vrot.slane %v1135, 4
        %v1137 = vadd.f32 %v1135, %v1136
        %v1138 = vrot.slane %v1137, 2
        %v1139 = vadd.f32 %v1137, %v1138
        %v1140 = vrot.slane %v1139, 1
        %v1141 = vadd.f32 %v1139, %v1140
        %vm1150 = vcmask 1041409
        %v1151 = vsel %vm1150, %v1063, %v1050
        %vm1152 = vcmask 1042434
        %v1153 = vsel %vm1152, %v1076, %v1151
        %vm1154 = vcmask 1043459
        %v1155 = vsel %vm1154, %v1089, %v1153
        %vm1156 = vcmask 1044484
        %v1157 = vsel %vm1156, %v1102, %v1155
        %vm1158 = vcmask 1045509
        %v1159 = vsel %vm1158, %v1115, %v1157
        %vm1160 = vcmask 1046534
        %v1161 = vsel %vm1160, %v1128, %v1159
        %vm1162 = vcmask 1047559
        %v1163 = vsel %vm1162, %v1141, %v1161
        %v1166 = vsel %vm1037, %v603, 0
        %v1169 = vsel %vm1037, %v604, 0
        %1171 = vmatprep.subr.bf16.mxu0 0
        %1172 = vmatpush1.bf16.xpose.msra.mxu0 %v1169
        %1173 = vmatprep.subr.bf16.mxu0 0
        %1174 = vmatpush1.bf16.xpose.msra.mxu0 0
        %1175 = vmatprep.subr.bf16.mxu0 0
        %1176 = vmatpush1.bf16.xpose.msra.mxu0 0
        %1177 = vmatprep.subr.bf16.mxu0 0
        %1178 = vmatpush1.bf16.xpose.msra.mxu0 0
        %1179 = vmatprep.subr.bf16.mxu0 0
        %1180 = vmatpush1.bf16.xpose.msra.mxu0 0
        %1181 = vmatprep.subr.bf16.mxu0 0
        %1182 = vmatpush1.bf16.xpose.msra.mxu0 0
        %1183 = vmatprep.subr.bf16.mxu0 0
        %1184 = vmatpush1.bf16.xpose.msra.mxu0 0
        %1185 = vmatprep.subr.bf16.mxu0 0
        %1186 = vmatpush1.bf16.xpose.msra.mxu0 0
        %1187 = vmatprep.subr.bf16.mxu0 0
        %1188 = vmatpush1.bf16.xpose.msra.mxu0 0
        %1189 = vmatprep.subr.bf16.mxu0 0
        %1190 = vmatpush1.bf16.xpose.msra.mxu0 0
        %1191 = vmatprep.subr.bf16.mxu0 0
        %1192 = vmatpush1.bf16.xpose.msra.mxu0 0
        %1193 = vmatprep.subr.bf16.mxu0 0
        %1194 = vmatpush1.bf16.xpose.msra.mxu0 0
        %1195 = vmatprep.subr.bf16.mxu0 0
        %1196 = vmatpush1.bf16.xpose.msra.mxu0 0
        %1197 = vmatprep.subr.bf16.mxu0 0
        %1198 = vmatpush1.bf16.xpose.msra.mxu0 0
        %1199 = vmatprep.subr.bf16.mxu0 0
        %1200 = vmatpush1.bf16.xpose.msra.mxu0 0
        %1201 = vmatprep.subr.bf16.mxu0 0
        %1202 = vmatpush1.bf16.xpose.msra.mxu0 0
        %1203 = vmatprep.mubr.bf16.mxu0 0
        %1204 = vmatmul.mubr.bf16.gmra.mrb[0].mxu0 %v1166
        %v1205 = vpop.f32.mrb[0].mxu0
        %v1206 = vadd.f32 %v1163, %v1205
        %v1207 = vpop.f32.mrb[0].mxu0
        %v1208 = vpop.f32.mrb[0].mxu0
        %v1209 = vpop.f32.mrb[0].mxu0
        %1210 = vdwg.mxu0
        %v1211 = vmul.f32 %v1206, 0.35355338
        %v1212 = vsel %vm1037, %v1211, -inf
        %1213 = vmax.xlane.f32.xlu0 %v1212
        %v1214 = vpop.xlane.xlu0 %1213
        %v1215 = vsub.f32 %v1211, %v1214
        %v1216 = vmul.f32 %v1215, 1.442695
        %v1217 = vpow.pop %v1216
        %v1218 = vsel %vm1037, %v1217, 0.0
        %1219 = vadd.xlane.f32.xlu0 %v1218
        %v1220 = vpop.xlane.xlu0 %1219
        %v1221 = vrcp.pop %v1220
        %v1222 = vmul.f32 1.0, %v1221
        %v1223 = vmul.f32 %v1217, %v1222
        %1224 = vst.msk [vmem:[%s516] sm:$0xff] %vm1037, %v1223
        %v1225 = vpack.c.bf16 %v1223, %v1223
        %v1227 = vsel %vm1037, %v1225, 0
        %vm1229 = vcmask 1043456
        %v1231 = vsel %vm1229, %v605, 0
        %1233 = vmatprep.subr.bf16.mxu0 0
        %1234 = vmatpush1.bf16.msra.mxu0 %v1231
        %1235 = vmatprep.subr.bf16.mxu0 0
        %1236 = vmatpush1.bf16.msra.mxu0 0
        %1237 = vmatprep.subr.bf16.mxu0 0
        %1238 = vmatpush1.bf16.msra.mxu0 0
        %1239 = vmatprep.subr.bf16.mxu0 0
        %1240 = vmatpush1.bf16.msra.mxu0 0
        %1241 = vmatprep.subr.bf16.mxu0 0
        %1242 = vmatpush1.bf16.msra.mxu0 0
        %1243 = vmatprep.subr.bf16.mxu0 0
        %1244 = vmatpush1.bf16.msra.mxu0 0
        %1245 = vmatprep.subr.bf16.mxu0 0
        %1246 = vmatpush1.bf16.msra.mxu0 0
        %1247 = vmatprep.subr.bf16.mxu0 0
        %1248 = vmatpush1.bf16.msra.mxu0 0
        %1249 = vmatprep.subr.bf16.mxu0 0
        %1250 = vmatpush1.bf16.msra.mxu0 0
        %1251 = vmatprep.subr.bf16.mxu0 0
        %1252 = vmatpush1.bf16.msra.mxu0 0
        %1253 = vmatprep.subr.bf16.mxu0 0
        %1254 = vmatpush1.bf16.msra.mxu0 0
        %1255 = vmatprep.subr.bf16.mxu0 0
        %1256 = vmatpush1.bf16.msra.mxu0 0
        %1257 = vmatprep.subr.bf16.mxu0 0
        %1258 = vmatpush1.bf16.msra.mxu0 0
        %1259 = vmatprep.subr.bf16.mxu0 0
        %1260 = vmatpush1.bf16.msra.mxu0 0
        %1261 = vmatprep.subr.bf16.mxu0 0
        %1262 = vmatpush1.bf16.msra.mxu0 0
        %1263 = vmatprep.subr.bf16.mxu0 0
        %1264 = vmatpush1.bf16.msra.mxu0 0
        %1265 = vmatprep.mubr.bf16.mxu0 0
        %1266 = vmatmul.mubr.bf16.gmra.mrb[0].mxu0 %v1227
        %v1267 = vpop.f32.mrb[0].mxu0
        %v1268 = vadd.f32 0.0, %v1267
        %v1269 = vpop.f32.mrb[0].mxu0
        %v1270 = vpop.f32.mrb[0].mxu0
        %v1271 = vpop.f32.mrb[0].mxu0
        %1272 = vdwg.mxu0
        %v1273 = vpack.c.bf16 %v1268, %v1268
        %v1274 = vld [vmem:[%s6] sm:$0xf]
        %v1276 = vsel %vm1037, %v1273, 0
        %v1279 = vsel %vm1229, %v1274, 0
        %1281 = vmatprep.subr.bf16.mxu0 0
        %1282 = vmatpush1.bf16.msra.mxu0 %v1279
        %1283 = vmatprep.subr.bf16.mxu0 0
        %1284 = vmatpush1.bf16.msra.mxu0 0
        %1285 = vmatprep.subr.bf16.mxu0 0
        %1286 = vmatpush1.bf16.msra.mxu0 0
        %1287 = vmatprep.subr.bf16.mxu0 0
        %1288 = vmatpush1.bf16.msra.mxu0 0
        %1289 = vmatprep.subr.bf16.mxu0 0
        %1290 = vmatpush1.bf16.msra.mxu0 0
        %1291 = vmatprep.subr.bf16.mxu0 0
        %1292 = vmatpush1.bf16.msra.mxu0 0
        %1293 = vmatprep.subr.bf16.mxu0 0
        %1294 = vmatpush1.bf16.msra.mxu0 0
        %1295 = vmatprep.subr.bf16.mxu0 0
        %1296 = vmatpush1.bf16.msra.mxu0 0
        %1297 = vmatprep.subr.bf16.mxu0 0
        %1298 = vmatpush1.bf16.msra.mxu0 0
        %1299 = vmatprep.subr.bf16.mxu0 0
        %1300 = vmatpush1.bf16.msra.mxu0 0
        %1301 = vmatprep.subr.bf16.mxu0 0
        %1302 = vmatpush1.bf16.msra.mxu0 0
        %1303 = vmatprep.subr.bf16.mxu0 0
        %1304 = vmatpush1.bf16.msra.mxu0 0
        %1305 = vmatprep.subr.bf16.mxu0 0
        %1306 = vmatpush1.bf16.msra.mxu0 0
        %1307 = vmatprep.subr.bf16.mxu0 0
        %1308 = vmatpush1.bf16.msra.mxu0 0
        %1309 = vmatprep.subr.bf16.mxu0 0
        %1310 = vmatpush1.bf16.msra.mxu0 0
        %1311 = vmatprep.subr.bf16.mxu0 0
        %1312 = vmatpush1.bf16.msra.mxu0 0
        %1313 = vmatprep.mubr.bf16.mxu0 0
        %1314 = vmatmul.mubr.bf16.gmra.mrb[0].mxu0 %v1276
        %v1315 = vpop.f32.mrb[0].mxu0
        %v1316 = vadd.f32 0.0, %v1315
        %v1317 = vpop.f32.mrb[0].mxu0
        %v1318 = vpop.f32.mrb[0].mxu0
        %v1319 = vpop.f32.mrb[0].mxu0
        %1320 = vdwg.mxu0
        %v1321 = vadd.f32 %v602, %v1316
        %s1322 = scalar_lea.vmem %s524, 4
        %v1323 = vld [vmem:[%s1322] sm:$0xf]
        %s1324 = scalar_lea.vmem %s529, 4
        %v1325 = vld [vmem:[%s1324] sm:$0xf]
        %s1326 = scalar_lea.vmem %s534, 4
        %v1327 = vld [vmem:[%s1326] sm:$0xf]
        %s1328 = scalar_lea.vmem %s542, 4
        %v1329 = vld [vmem:[%s1328] sm:$0xf]
        %v1331 = vpack.i.b16 %v1329, %v1329
        %v1333 = vlaneseq
        %v1334 = vshrl.u32 %v1333, 7
        %v1335 = vsub.s32 0, %v1334
        %v1336 = vrot.slane %v1331, %v1335
        %1338 = vbcast.lane.c.b16.xlu0 %v1336, 256
        %v1339 = vpop.permute.xlu0 %1338
        %s1341 = sor.u32 256, 16
        %1342 = vbcast.lane.c.b16.xlu0 %v1336, %s1341
        %v1343 = vpop.permute.xlu0 %1342
        %v1344 = vshrl.u32 %v1329, 16
        %v1345 = vpack.i.b16 %v1344, %v1344
        %v1347 = vlaneseq
        %v1348 = vshrl.u32 %v1347, 7
        %v1349 = vsub.s32 0, %v1348
        %v1350 = vrot.slane %v1345, %v1349
        %1352 = vbcast.lane.c.b16.xlu0 %v1350, 256
        %v1353 = vpop.permute.xlu0 %1352
        %s1355 = sor.u32 256, 16
        %1356 = vbcast.lane.c.b16.xlu0 %v1350, %s1355
        %v1357 = vpop.permute.xlu0 %1356
        %v1358 = vlaneseq
        %v1359 = vshrl.u32 %v1358, 7
        %v1360 = vsub.s32 1, %v1359
        %v1361 = vrot.slane %v1331, %v1360
        %1363 = vbcast.lane.c.b16.xlu0 %v1361, 256
        %v1364 = vpop.permute.xlu0 %1363
        %s1366 = sor.u32 256, 16
        %1367 = vbcast.lane.c.b16.xlu0 %v1361, %s1366
        %v1368 = vpop.permute.xlu0 %1367
        %v1369 = vlaneseq
        %v1370 = vshrl.u32 %v1369, 7
        %v1371 = vsub.s32 1, %v1370
        %v1372 = vrot.slane %v1345, %v1371
        %1374 = vbcast.lane.c.b16.xlu0 %v1372, 256
        %v1375 = vpop.permute.xlu0 %1374
        %s1377 = sor.u32 256, 16
        %1378 = vbcast.lane.c.b16.xlu0 %v1372, %s1377
        %v1379 = vpop.permute.xlu0 %1378
        %v1380 = vlaneseq
        %v1381 = vshrl.u32 %v1380, 7
        %v1382 = vsub.s32 2, %v1381
        %v1383 = vrot.slane %v1331, %v1382
        %1385 = vbcast.lane.c.b16.xlu0 %v1383, 256
        %v1386 = vpop.permute.xlu0 %1385
        %s1388 = sor.u32 256, 16
        %1389 = vbcast.lane.c.b16.xlu0 %v1383, %s1388
        %v1390 = vpop.permute.xlu0 %1389
        %v1391 = vlaneseq
        %v1392 = vshrl.u32 %v1391, 7
        %v1393 = vsub.s32 2, %v1392
        %v1394 = vrot.slane %v1345, %v1393
        %1396 = vbcast.lane.c.b16.xlu0 %v1394, 256
        %v1397 = vpop.permute.xlu0 %1396
        %s1399 = sor.u32 256, 16
        %1400 = vbcast.lane.c.b16.xlu0 %v1394, %s1399
        %v1401 = vpop.permute.xlu0 %1400
        %v1402 = vlaneseq
        %v1403 = vshrl.u32 %v1402, 7
        %v1404 = vsub.s32 3, %v1403
        %v1405 = vrot.slane %v1331, %v1404
        %1407 = vbcast.lane.c.b16.xlu0 %v1405, 256
        %v1408 = vpop.permute.xlu0 %1407
        %s1410 = sor.u32 256, 16
        %1411 = vbcast.lane.c.b16.xlu0 %v1405, %s1410
        %v1412 = vpop.permute.xlu0 %1411
        %v1413 = vlaneseq
        %v1414 = vshrl.u32 %v1413, 7
        %v1415 = vsub.s32 3, %v1414
        %v1416 = vrot.slane %v1345, %v1415
        %1418 = vbcast.lane.c.b16.xlu0 %v1416, 256
        %v1419 = vpop.permute.xlu0 %1418
        %s1421 = sor.u32 256, 16
        %1422 = vbcast.lane.c.b16.xlu0 %v1416, %s1421
        %v1423 = vpop.permute.xlu0 %1422
        %v1441 = vunpack.c.l.s4 839922192
        %v1442 = vunpack.c.0.s8 %v1441
        %v1443 = vlaneseq
        %v1444 = vshrl.u32 %v1443, 7
        %v1445 = vsub.s32 %v1442, %v1444
        %v1446 = vrot.slane %v1339, %v1445
        %v1448 = vunpack.c.l.s4 1985246804
        %v1449 = vunpack.c.0.s8 %v1448
        %v1450 = vlaneseq
        %v1451 = vshrl.u32 %v1450, 7
        %v1452 = vsub.s32 %v1449, %v1451
        %v1453 = vrot.slane %v1339, %v1452
        %v1455 = vunpack.c.l.s4 839922192
        %v1456 = vunpack.c.0.s8 %v1455
        %v1457 = vlaneseq
        %v1458 = vshrl.u32 %v1457, 7
        %v1459 = vsub.s32 %v1456, %v1458
        %v1460 = vrot.slane %v1343, %v1459
        %v1462 = vunpack.c.l.s4 1985246804
        %v1463 = vunpack.c.0.s8 %v1462
        %v1464 = vlaneseq
        %v1465 = vshrl.u32 %v1464, 7
        %v1466 = vsub.s32 %v1463, %v1465
        %v1467 = vrot.slane %v1343, %v1466
        %v1469 = vunpack.c.l.s4 839922192
        %v1470 = vunpack.c.0.s8 %v1469
        %v1471 = vlaneseq
        %v1472 = vshrl.u32 %v1471, 7
        %v1473 = vsub.s32 %v1470, %v1472
        %v1474 = vrot.slane %v1353, %v1473
        %v1476 = vunpack.c.l.s4 1985246804
        %v1477 = vunpack.c.0.s8 %v1476
        %v1478 = vlaneseq
        %v1479 = vshrl.u32 %v1478, 7
        %v1480 = vsub.s32 %v1477, %v1479
        %v1481 = vrot.slane %v1353, %v1480
        %v1483 = vunpack.c.l.s4 839922192
        %v1484 = vunpack.c.0.s8 %v1483
        %v1485 = vlaneseq
        %v1486 = vshrl.u32 %v1485, 7
        %v1487 = vsub.s32 %v1484, %v1486
        %v1488 = vrot.slane %v1357, %v1487
        %v1490 = vunpack.c.l.s4 1985246804
        %v1491 = vunpack.c.0.s8 %v1490
        %v1492 = vlaneseq
        %v1493 = vshrl.u32 %v1492, 7
        %v1494 = vsub.s32 %v1491, %v1493
        %v1495 = vrot.slane %v1357, %v1494
        %v1497 = vunpack.c.l.s4 839922192
        %v1498 = vunpack.c.0.s8 %v1497
        %v1499 = vlaneseq
        %v1500 = vshrl.u32 %v1499, 7
        %v1501 = vsub.s32 %v1498, %v1500
        %v1502 = vrot.slane %v1364, %v1501
        %v1504 = vunpack.c.l.s4 1985246804
        %v1505 = vunpack.c.0.s8 %v1504
        %v1506 = vlaneseq
        %v1507 = vshrl.u32 %v1506, 7
        %v1508 = vsub.s32 %v1505, %v1507
        %v1509 = vrot.slane %v1364, %v1508
        %v1511 = vunpack.c.l.s4 839922192
        %v1512 = vunpack.c.0.s8 %v1511
        %v1513 = vlaneseq
        %v1514 = vshrl.u32 %v1513, 7
        %v1515 = vsub.s32 %v1512, %v1514
        %v1516 = vrot.slane %v1368, %v1515
        %v1518 = vunpack.c.l.s4 1985246804
        %v1519 = vunpack.c.0.s8 %v1518
        %v1520 = vlaneseq
        %v1521 = vshrl.u32 %v1520, 7
        %v1522 = vsub.s32 %v1519, %v1521
        %v1523 = vrot.slane %v1368, %v1522
        %v1525 = vunpack.c.l.s4 839922192
        %v1526 = vunpack.c.0.s8 %v1525
        %v1527 = vlaneseq
        %v1528 = vshrl.u32 %v1527, 7
        %v1529 = vsub.s32 %v1526, %v1528
        %v1530 = vrot.slane %v1375, %v1529
        %v1532 = vunpack.c.l.s4 1985246804
        %v1533 = vunpack.c.0.s8 %v1532
        %v1534 = vlaneseq
        %v1535 = vshrl.u32 %v1534, 7
        %v1536 = vsub.s32 %v1533, %v1535
        %v1537 = vrot.slane %v1375, %v1536
        %v1539 = vunpack.c.l.s4 839922192
        %v1540 = vunpack.c.0.s8 %v1539
        %v1541 = vlaneseq
        %v1542 = vshrl.u32 %v1541, 7
        %v1543 = vsub.s32 %v1540, %v1542
        %v1544 = vrot.slane %v1379, %v1543
        %v1546 = vunpack.c.l.s4 1985246804
        %v1547 = vunpack.c.0.s8 %v1546
        %v1548 = vlaneseq
        %v1549 = vshrl.u32 %v1548, 7
        %v1550 = vsub.s32 %v1547, %v1549
        %v1551 = vrot.slane %v1379, %v1550
        %v1553 = vunpack.c.l.s4 839922192
        %v1554 = vunpack.c.0.s8 %v1553
        %v1555 = vlaneseq
        %v1556 = vshrl.u32 %v1555, 7
        %v1557 = vsub.s32 %v1554, %v1556
        %v1558 = vrot.slane %v1386, %v1557
        %v1560 = vunpack.c.l.s4 1985246804
        %v1561 = vunpack.c.0.s8 %v1560
        %v1562 = vlaneseq
        %v1563 = vshrl.u32 %v1562, 7
        %v1564 = vsub.s32 %v1561, %v1563
        %v1565 = vrot.slane %v1386, %v1564
        %v1567 = vunpack.c.l.s4 839922192
        %v1568 = vunpack.c.0.s8 %v1567
        %v1569 = vlaneseq
        %v1570 = vshrl.u32 %v1569, 7
        %v1571 = vsub.s32 %v1568, %v1570
        %v1572 = vrot.slane %v1390, %v1571
        %v1574 = vunpack.c.l.s4 1985246804
        %v1575 = vunpack.c.0.s8 %v1574
        %v1576 = vlaneseq
        %v1577 = vshrl.u32 %v1576, 7
        %v1578 = vsub.s32 %v1575, %v1577
        %v1579 = vrot.slane %v1390, %v1578
        %v1581 = vunpack.c.l.s4 839922192
        %v1582 = vunpack.c.0.s8 %v1581
        %v1583 = vlaneseq
        %v1584 = vshrl.u32 %v1583, 7
        %v1585 = vsub.s32 %v1582, %v1584
        %v1586 = vrot.slane %v1397, %v1585
        %v1588 = vunpack.c.l.s4 1985246804
        %v1589 = vunpack.c.0.s8 %v1588
        %v1590 = vlaneseq
        %v1591 = vshrl.u32 %v1590, 7
        %v1592 = vsub.s32 %v1589, %v1591
        %v1593 = vrot.slane %v1397, %v1592
        %v1595 = vunpack.c.l.s4 839922192
        %v1596 = vunpack.c.0.s8 %v1595
        %v1597 = vlaneseq
        %v1598 = vshrl.u32 %v1597, 7
        %v1599 = vsub.s32 %v1596, %v1598
        %v1600 = vrot.slane %v1401, %v1599
        %v1602 = vunpack.c.l.s4 1985246804
        %v1603 = vunpack.c.0.s8 %v1602
        %v1604 = vlaneseq
        %v1605 = vshrl.u32 %v1604, 7
        %v1606 = vsub.s32 %v1603, %v1605
        %v1607 = vrot.slane %v1401, %v1606
        %v1609 = vunpack.c.l.s4 839922192
        %v1610 = vunpack.c.0.s8 %v1609
        %v1611 = vlaneseq
        %v1612 = vshrl.u32 %v1611, 7
        %v1613 = vsub.s32 %v1610, %v1612
        %v1614 = vrot.slane %v1408, %v1613
        %v1616 = vunpack.c.l.s4 1985246804
        %v1617 = vunpack.c.0.s8 %v1616
        %v1618 = vlaneseq
        %v1619 = vshrl.u32 %v1618, 7
        %v1620 = vsub.s32 %v1617, %v1619
        %v1621 = vrot.slane %v1408, %v1620
        %v1623 = vunpack.c.l.s4 839922192
        %v1624 = vunpack.c.0.s8 %v1623
        %v1625 = vlaneseq
        %v1626 = vshrl.u32 %v1625, 7
        %v1627 = vsub.s32 %v1624, %v1626
        %v1628 = vrot.slane %v1412, %v1627
        %v1630 = vunpack.c.l.s4 1985246804
        %v1631 = vunpack.c.0.s8 %v1630
        %v1632 = vlaneseq
        %v1633 = vshrl.u32 %v1632, 7
        %v1634 = vsub.s32 %v1631, %v1633
        %v1635 = vrot.slane %v1412, %v1634
        %v1637 = vunpack.c.l.s4 839922192
        %v1638 = vunpack.c.0.s8 %v1637
        %v1639 = vlaneseq
        %v1640 = vshrl.u32 %v1639, 7
        %v1641 = vsub.s32 %v1638, %v1640
        %v1642 = vrot.slane %v1419, %v1641
        %v1644 = vunpack.c.l.s4 1985246804
        %v1645 = vunpack.c.0.s8 %v1644
        %v1646 = vlaneseq
        %v1647 = vshrl.u32 %v1646, 7
        %v1648 = vsub.s32 %v1645, %v1647
        %v1649 = vrot.slane %v1419, %v1648
        %v1651 = vunpack.c.l.s4 839922192
        %v1652 = vunpack.c.0.s8 %v1651
        %v1653 = vlaneseq
        %v1654 = vshrl.u32 %v1653, 7
        %v1655 = vsub.s32 %v1652, %v1654
        %v1656 = vrot.slane %v1423, %v1655
        %v1658 = vunpack.c.l.s4 1985246804
        %v1659 = vunpack.c.0.s8 %v1658
        %v1660 = vlaneseq
        %v1661 = vshrl.u32 %v1660, 7
        %v1662 = vsub.s32 %v1659, %v1661
        %v1663 = vrot.slane %v1423, %v1662
        %v1696 = vmul.bf16 %v562, %v1446
        %v1697 = vmul.bf16 %v563, %v1453
        %v1698 = vmul.bf16 %v564, %v1460
        %v1699 = vmul.bf16 %v565, %v1467
        %v1700 = vmul.bf16 %v566, %v1474
        %v1701 = vmul.bf16 %v567, %v1481
        %v1702 = vmul.bf16 %v568, %v1488
        %v1703 = vmul.bf16 %v569, %v1495
        %v1704 = vmul.bf16 %v570, %v1502
        %v1705 = vmul.bf16 %v571, %v1509
        %v1706 = vmul.bf16 %v572, %v1516
        %v1707 = vmul.bf16 %v573, %v1523
        %v1708 = vmul.bf16 %v574, %v1530
        %v1709 = vmul.bf16 %v575, %v1537
        %v1710 = vmul.bf16 %v576, %v1544
        %v1711 = vmul.bf16 %v577, %v1551
        %v1712 = vmul.bf16 %v578, %v1558
        %v1713 = vmul.bf16 %v579, %v1565
        %v1714 = vmul.bf16 %v580, %v1572
        %v1715 = vmul.bf16 %v581, %v1579
        %v1716 = vmul.bf16 %v582, %v1586
        %v1717 = vmul.bf16 %v583, %v1593
        %v1718 = vmul.bf16 %v584, %v1600
        %v1719 = vmul.bf16 %v585, %v1607
        %v1720 = vmul.bf16 %v586, %v1614
        %v1721 = vmul.bf16 %v587, %v1621
        %v1722 = vmul.bf16 %v588, %v1628
        %v1723 = vmul.bf16 %v589, %v1635
        %v1724 = vmul.bf16 %v590, %v1642
        %v1725 = vmul.bf16 %v591, %v1649
        %v1726 = vmul.bf16 %v592, %v1656
        %v1727 = vmul.bf16 %v593, %v1663
        %v1728 = vunpack.c.l.bf16 %v1696
        %v1729 = vunpack.c.l.bf16 %v1697
        %v1730 = vunpack.c.l.bf16 %v1698
        %v1731 = vunpack.c.l.bf16 %v1699
        %v1732 = vunpack.c.l.bf16 %v1700
        %v1733 = vunpack.c.l.bf16 %v1701
        %v1734 = vunpack.c.l.bf16 %v1702
        %v1735 = vunpack.c.l.bf16 %v1703
        %v1736 = vunpack.c.l.bf16 %v1704
        %v1737 = vunpack.c.l.bf16 %v1705
        %v1738 = vunpack.c.l.bf16 %v1706
        %v1739 = vunpack.c.l.bf16 %v1707
        %v1740 = vunpack.c.l.bf16 %v1708
        %v1741 = vunpack.c.l.bf16 %v1709
        %v1742 = vunpack.c.l.bf16 %v1710
        %v1743 = vunpack.c.l.bf16 %v1711
        %v1744 = vunpack.c.l.bf16 %v1712
        %v1745 = vunpack.c.l.bf16 %v1713
        %v1746 = vunpack.c.l.bf16 %v1714
        %v1747 = vunpack.c.l.bf16 %v1715
        %v1748 = vunpack.c.l.bf16 %v1716
        %v1749 = vunpack.c.l.bf16 %v1717
        %v1750 = vunpack.c.l.bf16 %v1718
        %v1751 = vunpack.c.l.bf16 %v1719
        %v1752 = vunpack.c.l.bf16 %v1720
        %v1753 = vunpack.c.l.bf16 %v1721
        %v1754 = vunpack.c.l.bf16 %v1722
        %v1755 = vunpack.c.l.bf16 %v1723
        %v1756 = vunpack.c.l.bf16 %v1724
        %v1757 = vunpack.c.l.bf16 %v1725
        %v1758 = vunpack.c.l.bf16 %v1726
        %v1759 = vunpack.c.l.bf16 %v1727
        %v1760 = vsel %vm1037, %v1728, 0.0
        %v1761 = vsel %vm1037, %v1729, 0.0
        %v1762 = vadd.f32 %v1760, %v1761
        %v1763 = vsel %vm1037, %v1730, 0.0
        %v1764 = vadd.f32 %v1762, %v1763
        %v1765 = vsel %vm1037, %v1731, 0.0
        %v1766 = vadd.f32 %v1764, %v1765
        %v1767 = vrot.slane %v1766, 4
        %v1768 = vadd.f32 %v1766, %v1767
        %v1769 = vrot.slane %v1768, 2
        %v1770 = vadd.f32 %v1768, %v1769
        %v1771 = vrot.slane %v1770, 1
        %v1772 = vadd.f32 %v1770, %v1771
        %v1773 = vsel %vm1037, %v1732, 0.0
        %v1774 = vsel %vm1037, %v1733, 0.0
        %v1775 = vadd.f32 %v1773, %v1774
        %v1776 = vsel %vm1037, %v1734, 0.0
        %v1777 = vadd.f32 %v1775, %v1776
        %v1778 = vsel %vm1037, %v1735, 0.0
        %v1779 = vadd.f32 %v1777, %v1778
        %v1780 = vrot.slane %v1779, 4
        %v1781 = vadd.f32 %v1779, %v1780
        %v1782 = vrot.slane %v1781, 2
        %v1783 = vadd.f32 %v1781, %v1782
        %v1784 = vrot.slane %v1783, 1
        %v1785 = vadd.f32 %v1783, %v1784
        %v1786 = vsel %vm1037, %v1736, 0.0
        %v1787 = vsel %vm1037, %v1737, 0.0
        %v1788 = vadd.f32 %v1786, %v1787
        %v1789 = vsel %vm1037, %v1738, 0.0
        %v1790 = vadd.f32 %v1788, %v1789
        %v1791 = vsel %vm1037, %v1739, 0.0
        %v1792 = vadd.f32 %v1790, %v1791
        %v1793 = vrot.slane %v1792, 4
        %v1794 = vadd.f32 %v1792, %v1793
        %v1795 = vrot.slane %v1794, 2
        %v1796 = vadd.f32 %v1794, %v1795
        %v1797 = vrot.slane %v1796, 1
        %v1798 = vadd.f32 %v1796, %v1797
        %v1799 = vsel %vm1037, %v1740, 0.0
        %v1800 = vsel %vm1037, %v1741, 0.0
        %v1801 = vadd.f32 %v1799, %v1800
        %v1802 = vsel %vm1037, %v1742, 0.0
        %v1803 = vadd.f32 %v1801, %v1802
        %v1804 = vsel %vm1037, %v1743, 0.0
        %v1805 = vadd.f32 %v1803, %v1804
        %v1806 = vrot.slane %v1805, 4
        %v1807 = vadd.f32 %v1805, %v1806
        %v1808 = vrot.slane %v1807, 2
        %v1809 = vadd.f32 %v1807, %v1808
        %v1810 = vrot.slane %v1809, 1
        %v1811 = vadd.f32 %v1809, %v1810
        %v1812 = vsel %vm1037, %v1744, 0.0
        %v1813 = vsel %vm1037, %v1745, 0.0
        %v1814 = vadd.f32 %v1812, %v1813
        %v1815 = vsel %vm1037, %v1746, 0.0
        %v1816 = vadd.f32 %v1814, %v1815
        %v1817 = vsel %vm1037, %v1747, 0.0
        %v1818 = vadd.f32 %v1816, %v1817
        %v1819 = vrot.slane %v1818, 4
        %v1820 = vadd.f32 %v1818, %v1819
        %v1821 = vrot.slane %v1820, 2
        %v1822 = vadd.f32 %v1820, %v1821
        %v1823 = vrot.slane %v1822, 1
        %v1824 = vadd.f32 %v1822, %v1823
        %v1825 = vsel %vm1037, %v1748, 0.0
        %v1826 = vsel %vm1037, %v1749, 0.0
        %v1827 = vadd.f32 %v1825, %v1826
        %v1828 = vsel %vm1037, %v1750, 0.0
        %v1829 = vadd.f32 %v1827, %v1828
        %v1830 = vsel %vm1037, %v1751, 0.0
        %v1831 = vadd.f32 %v1829, %v1830
        %v1832 = vrot.slane %v1831, 4
        %v1833 = vadd.f32 %v1831, %v1832
        %v1834 = vrot.slane %v1833, 2
        %v1835 = vadd.f32 %v1833, %v1834
        %v1836 = vrot.slane %v1835, 1
        %v1837 = vadd.f32 %v1835, %v1836
        %v1838 = vsel %vm1037, %v1752, 0.0
        %v1839 = vsel %vm1037, %v1753, 0.0
        %v1840 = vadd.f32 %v1838, %v1839
        %v1841 = vsel %vm1037, %v1754, 0.0
        %v1842 = vadd.f32 %v1840, %v1841
        %v1843 = vsel %vm1037, %v1755, 0.0
        %v1844 = vadd.f32 %v1842, %v1843
        %v1845 = vrot.slane %v1844, 4
        %v1846 = vadd.f32 %v1844, %v1845
        %v1847 = vrot.slane %v1846, 2
        %v1848 = vadd.f32 %v1846, %v1847
        %v1849 = vrot.slane %v1848, 1
        %v1850 = vadd.f32 %v1848, %v1849
        %v1851 = vsel %vm1037, %v1756, 0.0
        %v1852 = vsel %vm1037, %v1757, 0.0
        %v1853 = vadd.f32 %v1851, %v1852
        %v1854 = vsel %vm1037, %v1758, 0.0
        %v1855 = vadd.f32 %v1853, %v1854
        %v1856 = vsel %vm1037, %v1759, 0.0
        %v1857 = vadd.f32 %v1855, %v1856
        %v1858 = vrot.slane %v1857, 4
        %v1859 = vadd.f32 %v1857, %v1858
        %v1860 = vrot.slane %v1859, 2
        %v1861 = vadd.f32 %v1859, %v1860
        %v1862 = vrot.slane %v1861, 1
        %v1863 = vadd.f32 %v1861, %v1862
        %v1872 = vsel %vm1150, %v1785, %v1772
        %v1873 = vsel %vm1152, %v1798, %v1872
        %v1874 = vsel %vm1154, %v1811, %v1873
        %v1875 = vsel %vm1156, %v1824, %v1874
        %v1876 = vsel %vm1158, %v1837, %v1875
        %v1877 = vsel %vm1160, %v1850, %v1876
        %v1878 = vsel %vm1162, %v1863, %v1877
        %v1881 = vsel %vm1037, %v1323, 0
        %v1884 = vsel %vm1037, %v1325, 0
        %1886 = vmatprep.subr.bf16.mxu0 0
        %1887 = vmatpush1.bf16.xpose.msra.mxu0 %v1884
        %1888 = vmatprep.subr.bf16.mxu0 0
        %1889 = vmatpush1.bf16.xpose.msra.mxu0 0
        %1890 = vmatprep.subr.bf16.mxu0 0
        %1891 = vmatpush1.bf16.xpose.msra.mxu0 0
        %1892 = vmatprep.subr.bf16.mxu0 0
        %1893 = vmatpush1.bf16.xpose.msra.mxu0 0
        %1894 = vmatprep.subr.bf16.mxu0 0
        %1895 = vmatpush1.bf16.xpose.msra.mxu0 0
        %1896 = vmatprep.subr.bf16.mxu0 0
        %1897 = vmatpush1.bf16.xpose.msra.mxu0 0
        %1898 = vmatprep.subr.bf16.mxu0 0
        %1899 = vmatpush1.bf16.xpose.msra.mxu0 0
        %1900 = vmatprep.subr.bf16.mxu0 0
        %1901 = vmatpush1.bf16.xpose.msra.mxu0 0
        %1902 = vmatprep.subr.bf16.mxu0 0
        %1903 = vmatpush1.bf16.xpose.msra.mxu0 0
        %1904 = vmatprep.subr.bf16.mxu0 0
        %1905 = vmatpush1.bf16.xpose.msra.mxu0 0
        %1906 = vmatprep.subr.bf16.mxu0 0
        %1907 = vmatpush1.bf16.xpose.msra.mxu0 0
        %1908 = vmatprep.subr.bf16.mxu0 0
        %1909 = vmatpush1.bf16.xpose.msra.mxu0 0
        %1910 = vmatprep.subr.bf16.mxu0 0
        %1911 = vmatpush1.bf16.xpose.msra.mxu0 0
        %1912 = vmatprep.subr.bf16.mxu0 0
        %1913 = vmatpush1.bf16.xpose.msra.mxu0 0
        %1914 = vmatprep.subr.bf16.mxu0 0
        %1915 = vmatpush1.bf16.xpose.msra.mxu0 0
        %1916 = vmatprep.subr.bf16.mxu0 0
        %1917 = vmatpush1.bf16.xpose.msra.mxu0 0
        %1918 = vmatprep.mubr.bf16.mxu0 0
        %1919 = vmatmul.mubr.bf16.gmra.mrb[0].mxu0 %v1881
        %v1920 = vpop.f32.mrb[0].mxu0
        %v1921 = vadd.f32 %v1878, %v1920
        %v1922 = vpop.f32.mrb[0].mxu0
        %v1923 = vpop.f32.mrb[0].mxu0
        %v1924 = vpop.f32.mrb[0].mxu0
        %1925 = vdwg.mxu0
        %v1926 = vmul.f32 %v1921, 0.35355338
        %v1927 = vsel %vm1037, %v1926, -inf
        %1928 = vmax.xlane.f32.xlu0 %v1927
        %v1929 = vpop.xlane.xlu0 %1928
        %v1930 = vsub.f32 %v1926, %v1929
        %v1931 = vmul.f32 %v1930, 1.442695
        %v1932 = vpow.pop %v1931
        %v1933 = vsel %vm1037, %v1932, 0.0
        %1934 = vadd.xlane.f32.xlu0 %v1933
        %v1935 = vpop.xlane.xlu0 %1934
        %v1936 = vrcp.pop %v1935
        %v1937 = vmul.f32 1.0, %v1936
        %v1938 = vmul.f32 %v1932, %v1937
        %s1939 = scalar_lea.vmem %s516, 8 [#allocation4]
        %1940 = vst.msk [vmem:[%s1939] sm:$0xff] %vm1037, %v1938
        %v1941 = vpack.c.bf16 %v1938, %v1938
        %v1943 = vsel %vm1037, %v1941, 0
        %v1946 = vsel %vm1229, %v1327, 0
        %1948 = vmatprep.subr.bf16.mxu0 0
        %1949 = vmatpush1.bf16.msra.mxu0 %v1946
        %1950 = vmatprep.subr.bf16.mxu0 0
        %1951 = vmatpush1.bf16.msra.mxu0 0
        %1952 = vmatprep.subr.bf16.mxu0 0
        %1953 = vmatpush1.bf16.msra.mxu0 0
        %1954 = vmatprep.subr.bf16.mxu0 0
        %1955 = vmatpush1.bf16.msra.mxu0 0
        %1956 = vmatprep.subr.bf16.mxu0 0
        %1957 = vmatpush1.bf16.msra.mxu0 0
        %1958 = vmatprep.subr.bf16.mxu0 0
        %1959 = vmatpush1.bf16.msra.mxu0 0
        %1960 = vmatprep.subr.bf16.mxu0 0
        %1961 = vmatpush1.bf16.msra.mxu0 0
        %1962 = vmatprep.subr.bf16.mxu0 0
        %1963 = vmatpush1.bf16.msra.mxu0 0
        %1964 = vmatprep.subr.bf16.mxu0 0
        %1965 = vmatpush1.bf16.msra.mxu0 0
        %1966 = vmatprep.subr.bf16.mxu0 0
        %1967 = vmatpush1.bf16.msra.mxu0 0
        %1968 = vmatprep.subr.bf16.mxu0 0
        %1969 = vmatpush1.bf16.msra.mxu0 0
        %1970 = vmatprep.subr.bf16.mxu0 0
        %1971 = vmatpush1.bf16.msra.mxu0 0
        %1972 = vmatprep.subr.bf16.mxu0 0
        %1973 = vmatpush1.bf16.msra.mxu0 0
        %1974 = vmatprep.subr.bf16.mxu0 0
        %1975 = vmatpush1.bf16.msra.mxu0 0
        %1976 = vmatprep.subr.bf16.mxu0 0
        %1977 = vmatpush1.bf16.msra.mxu0 0
        %1978 = vmatprep.subr.bf16.mxu0 0
        %1979 = vmatpush1.bf16.msra.mxu0 0
        %1980 = vmatprep.mubr.bf16.mxu0 0
        %1981 = vmatmul.mubr.bf16.gmra.mrb[0].mxu0 %v1943
        %v1982 = vpop.f32.mrb[0].mxu0
        %v1983 = vadd.f32 0.0, %v1982
        %v1984 = vpop.f32.mrb[0].mxu0
        %v1985 = vpop.f32.mrb[0].mxu0
        %v1986 = vpop.f32.mrb[0].mxu0
        %1987 = vdwg.mxu0
        %v1988 = vpack.c.bf16 %v1983, %v1983
        %s1989 = scalar_lea.vmem %s6, 4
        %v1990 = vld [vmem:[%s1989] sm:$0xf]
        %v1992 = vsel %vm1037, %v1988, 0
        %v1995 = vsel %vm1229, %v1990, 0
        %1997 = vmatprep.subr.bf16.mxu0 0
        %1998 = vmatpush1.bf16.msra.mxu0 %v1995
        %1999 = vmatprep.subr.bf16.mxu0 0
        %2000 = vmatpush1.bf16.msra.mxu0 0
        %2001 = vmatprep.subr.bf16.mxu0 0
        %2002 = vmatpush1.bf16.msra.mxu0 0
        %2003 = vmatprep.subr.bf16.mxu0 0
        %2004 = vmatpush1.bf16.msra.mxu0 0
        %2005 = vmatprep.subr.bf16.mxu0 0
        %2006 = vmatpush1.bf16.msra.mxu0 0
        %2007 = vmatprep.subr.bf16.mxu0 0
        %2008 = vmatpush1.bf16.msra.mxu0 0
        %2009 = vmatprep.subr.bf16.mxu0 0
        %2010 = vmatpush1.bf16.msra.mxu0 0
        %2011 = vmatprep.subr.bf16.mxu0 0
        %2012 = vmatpush1.bf16.msra.mxu0 0
        %2013 = vmatprep.subr.bf16.mxu0 0
        %2014 = vmatpush1.bf16.msra.mxu0 0
        %2015 = vmatprep.subr.bf16.mxu0 0
        %2016 = vmatpush1.bf16.msra.mxu0 0
        %2017 = vmatprep.subr.bf16.mxu0 0
        %2018 = vmatpush1.bf16.msra.mxu0 0
        %2019 = vmatprep.subr.bf16.mxu0 0
        %2020 = vmatpush1.bf16.msra.mxu0 0
        %2021 = vmatprep.subr.bf16.mxu0 0
        %2022 = vmatpush1.bf16.msra.mxu0 0
        %2023 = vmatprep.subr.bf16.mxu0 0
        %2024 = vmatpush1.bf16.msra.mxu0 0
        %2025 = vmatprep.subr.bf16.mxu0 0
        %2026 = vmatpush1.bf16.msra.mxu0 0
        %2027 = vmatprep.subr.bf16.mxu0 0
        %2028 = vmatpush1.bf16.msra.mxu0 0
        %2029 = vmatprep.mubr.bf16.mxu0 0
        %2030 = vmatmul.mubr.bf16.gmra.mrb[0].mxu0 %v1992
        %v2031 = vpop.f32.mrb[0].mxu0
        %v2032 = vadd.f32 0.0, %v2031
        %v2033 = vpop.f32.mrb[0].mxu0
        %v2034 = vpop.f32.mrb[0].mxu0
        %v2035 = vpop.f32.mrb[0].mxu0
        %2036 = vdwg.mxu0
        %v2037 = vadd.f32 %v1321, %v2032
        %s2038 = scalar_lea.vmem %s524, 8
        %v2039 = vld [vmem:[%s2038] sm:$0xf]
        %s2040 = scalar_lea.vmem %s529, 8
        %v2041 = vld [vmem:[%s2040] sm:$0xf]
        %s2042 = scalar_lea.vmem %s534, 8
        %v2043 = vld [vmem:[%s2042] sm:$0xf]
        %s2044 = scalar_lea.vmem %s542, 8
        %v2045 = vld [vmem:[%s2044] sm:$0xf]
        %v2047 = vpack.i.b16 %v2045, %v2045
        %v2049 = vlaneseq
        %v2050 = vshrl.u32 %v2049, 7
        %v2051 = vsub.s32 0, %v2050
        %v2052 = vrot.slane %v2047, %v2051
        %2054 = vbcast.lane.c.b16.xlu0 %v2052, 256
        %v2055 = vpop.permute.xlu0 %2054
        %s2057 = sor.u32 256, 16
        %2058 = vbcast.lane.c.b16.xlu0 %v2052, %s2057
        %v2059 = vpop.permute.xlu0 %2058
        %v2060 = vshrl.u32 %v2045, 16
        %v2061 = vpack.i.b16 %v2060, %v2060
        %v2063 = vlaneseq
        %v2064 = vshrl.u32 %v2063, 7
        %v2065 = vsub.s32 0, %v2064
        %v2066 = vrot.slane %v2061, %v2065
        %2068 = vbcast.lane.c.b16.xlu0 %v2066, 256
        %v2069 = vpop.permute.xlu0 %2068
        %s2071 = sor.u32 256, 16
        %2072 = vbcast.lane.c.b16.xlu0 %v2066, %s2071
        %v2073 = vpop.permute.xlu0 %2072
        %v2074 = vlaneseq
        %v2075 = vshrl.u32 %v2074, 7
        %v2076 = vsub.s32 1, %v2075
        %v2077 = vrot.slane %v2047, %v2076
        %2079 = vbcast.lane.c.b16.xlu0 %v2077, 256
        %v2080 = vpop.permute.xlu0 %2079
        %s2082 = sor.u32 256, 16
        %2083 = vbcast.lane.c.b16.xlu0 %v2077, %s2082
        %v2084 = vpop.permute.xlu0 %2083
        %v2085 = vlaneseq
        %v2086 = vshrl.u32 %v2085, 7
        %v2087 = vsub.s32 1, %v2086
        %v2088 = vrot.slane %v2061, %v2087
        %2090 = vbcast.lane.c.b16.xlu0 %v2088, 256
        %v2091 = vpop.permute.xlu0 %2090
        %s2093 = sor.u32 256, 16
        %2094 = vbcast.lane.c.b16.xlu0 %v2088, %s2093
        %v2095 = vpop.permute.xlu0 %2094
        %v2096 = vlaneseq
        %v2097 = vshrl.u32 %v2096, 7
        %v2098 = vsub.s32 2, %v2097
        %v2099 = vrot.slane %v2047, %v2098
        %2101 = vbcast.lane.c.b16.xlu0 %v2099, 256
        %v2102 = vpop.permute.xlu0 %2101
        %s2104 = sor.u32 256, 16
        %2105 = vbcast.lane.c.b16.xlu0 %v2099, %s2104
        %v2106 = vpop.permute.xlu0 %2105
        %v2107 = vlaneseq
        %v2108 = vshrl.u32 %v2107, 7
        %v2109 = vsub.s32 2, %v2108
        %v2110 = vrot.slane %v2061, %v2109
        %2112 = vbcast.lane.c.b16.xlu0 %v2110, 256
        %v2113 = vpop.permute.xlu0 %2112
        %s2115 = sor.u32 256, 16
        %2116 = vbcast.lane.c.b16.xlu0 %v2110, %s2115
        %v2117 = vpop.permute.xlu0 %2116
        %v2118 = vlaneseq
        %v2119 = vshrl.u32 %v2118, 7
        %v2120 = vsub.s32 3, %v2119
        %v2121 = vrot.slane %v2047, %v2120
        %2123 = vbcast.lane.c.b16.xlu0 %v2121, 256
        %v2124 = vpop.permute.xlu0 %2123
        %s2126 = sor.u32 256, 16
        %2127 = vbcast.lane.c.b16.xlu0 %v2121, %s2126
        %v2128 = vpop.permute.xlu0 %2127
        %v2129 = vlaneseq
        %v2130 = vshrl.u32 %v2129, 7
        %v2131 = vsub.s32 3, %v2130
        %v2132 = vrot.slane %v2061, %v2131
        %2134 = vbcast.lane.c.b16.xlu0 %v2132, 256
        %v2135 = vpop.permute.xlu0 %2134
        %s2137 = sor.u32 256, 16
        %2138 = vbcast.lane.c.b16.xlu0 %v2132, %s2137
        %v2139 = vpop.permute.xlu0 %2138
        %v2157 = vunpack.c.l.s4 839922192
        %v2158 = vunpack.c.0.s8 %v2157
        %v2159 = vlaneseq
        %v2160 = vshrl.u32 %v2159, 7
        %v2161 = vsub.s32 %v2158, %v2160
        %v2162 = vrot.slane %v2055, %v2161
        %v2164 = vunpack.c.l.s4 1985246804
        %v2165 = vunpack.c.0.s8 %v2164
        %v2166 = vlaneseq
        %v2167 = vshrl.u32 %v2166, 7
        %v2168 = vsub.s32 %v2165, %v2167
        %v2169 = vrot.slane %v2055, %v2168
        %v2171 = vunpack.c.l.s4 839922192
        %v2172 = vunpack.c.0.s8 %v2171
        %v2173 = vlaneseq
        %v2174 = vshrl.u32 %v2173, 7
        %v2175 = vsub.s32 %v2172, %v2174
        %v2176 = vrot.slane %v2059, %v2175
        %v2178 = vunpack.c.l.s4 1985246804
        %v2179 = vunpack.c.0.s8 %v2178
        %v2180 = vlaneseq
        %v2181 = vshrl.u32 %v2180, 7
        %v2182 = vsub.s32 %v2179, %v2181
        %v2183 = vrot.slane %v2059, %v2182
        %v2185 = vunpack.c.l.s4 839922192
        %v2186 = vunpack.c.0.s8 %v2185
        %v2187 = vlaneseq
        %v2188 = vshrl.u32 %v2187, 7
        %v2189 = vsub.s32 %v2186, %v2188
        %v2190 = vrot.slane %v2069, %v2189
        %v2192 = vunpack.c.l.s4 1985246804
        %v2193 = vunpack.c.0.s8 %v2192
        %v2194 = vlaneseq
        %v2195 = vshrl.u32 %v2194, 7
        %v2196 = vsub.s32 %v2193, %v2195
        %v2197 = vrot.slane %v2069, %v2196
        %v2199 = vunpack.c.l.s4 839922192
        %v2200 = vunpack.c.0.s8 %v2199
        %v2201 = vlaneseq
        %v2202 = vshrl.u32 %v2201, 7
        %v2203 = vsub.s32 %v2200, %v2202
        %v2204 = vrot.slane %v2073, %v2203
        %v2206 = vunpack.c.l.s4 1985246804
        %v2207 = vunpack.c.0.s8 %v2206
        %v2208 = vlaneseq
        %v2209 = vshrl.u32 %v2208, 7
        %v2210 = vsub.s32 %v2207, %v2209
        %v2211 = vrot.slane %v2073, %v2210
        %v2213 = vunpack.c.l.s4 839922192
        %v2214 = vunpack.c.0.s8 %v2213
        %v2215 = vlaneseq
        %v2216 = vshrl.u32 %v2215, 7
        %v2217 = vsub.s32 %v2214, %v2216
        %v2218 = vrot.slane %v2080, %v2217
        %v2220 = vunpack.c.l.s4 1985246804
        %v2221 = vunpack.c.0.s8 %v2220
        %v2222 = vlaneseq
        %v2223 = vshrl.u32 %v2222, 7
        %v2224 = vsub.s32 %v2221, %v2223
        %v2225 = vrot.slane %v2080, %v2224
        %v2227 = vunpack.c.l.s4 839922192
        %v2228 = vunpack.c.0.s8 %v2227
        %v2229 = vlaneseq
        %v2230 = vshrl.u32 %v2229, 7
        %v2231 = vsub.s32 %v2228, %v2230
        %v2232 = vrot.slane %v2084, %v2231
        %v2234 = vunpack.c.l.s4 1985246804
        %v2235 = vunpack.c.0.s8 %v2234
        %v2236 = vlaneseq
        %v2237 = vshrl.u32 %v2236, 7
        %v2238 = vsub.s32 %v2235, %v2237
        %v2239 = vrot.slane %v2084, %v2238
        %v2241 = vunpack.c.l.s4 839922192
        %v2242 = vunpack.c.0.s8 %v2241
        %v2243 = vlaneseq
        %v2244 = vshrl.u32 %v2243, 7
        %v2245 = vsub.s32 %v2242, %v2244
        %v2246 = vrot.slane %v2091, %v2245
        %v2248 = vunpack.c.l.s4 1985246804
        %v2249 = vunpack.c.0.s8 %v2248
        %v2250 = vlaneseq
        %v2251 = vshrl.u32 %v2250, 7
        %v2252 = vsub.s32 %v2249, %v2251
        %v2253 = vrot.slane %v2091, %v2252
        %v2255 = vunpack.c.l.s4 839922192
        %v2256 = vunpack.c.0.s8 %v2255
        %v2257 = vlaneseq
        %v2258 = vshrl.u32 %v2257, 7
        %v2259 = vsub.s32 %v2256, %v2258
        %v2260 = vrot.slane %v2095, %v2259
        %v2262 = vunpack.c.l.s4 1985246804
        %v2263 = vunpack.c.0.s8 %v2262
        %v2264 = vlaneseq
        %v2265 = vshrl.u32 %v2264, 7
        %v2266 = vsub.s32 %v2263, %v2265
        %v2267 = vrot.slane %v2095, %v2266
        %v2269 = vunpack.c.l.s4 839922192
        %v2270 = vunpack.c.0.s8 %v2269
        %v2271 = vlaneseq
        %v2272 = vshrl.u32 %v2271, 7
        %v2273 = vsub.s32 %v2270, %v2272
        %v2274 = vrot.slane %v2102, %v2273
        %v2276 = vunpack.c.l.s4 1985246804
        %v2277 = vunpack.c.0.s8 %v2276
        %v2278 = vlaneseq
        %v2279 = vshrl.u32 %v2278, 7
        %v2280 = vsub.s32 %v2277, %v2279
        %v2281 = vrot.slane %v2102, %v2280
        %v2283 = vunpack.c.l.s4 839922192
        %v2284 = vunpack.c.0.s8 %v2283
        %v2285 = vlaneseq
        %v2286 = vshrl.u32 %v2285, 7
        %v2287 = vsub.s32 %v2284, %v2286
        %v2288 = vrot.slane %v2106, %v2287
        %v2290 = vunpack.c.l.s4 1985246804
        %v2291 = vunpack.c.0.s8 %v2290
        %v2292 = vlaneseq
        %v2293 = vshrl.u32 %v2292, 7
        %v2294 = vsub.s32 %v2291, %v2293
        %v2295 = vrot.slane %v2106, %v2294
        %v2297 = vunpack.c.l.s4 839922192
        %v2298 = vunpack.c.0.s8 %v2297
        %v2299 = vlaneseq
        %v2300 = vshrl.u32 %v2299, 7
        %v2301 = vsub.s32 %v2298, %v2300
        %v2302 = vrot.slane %v2113, %v2301
        %v2304 = vunpack.c.l.s4 1985246804
        %v2305 = vunpack.c.0.s8 %v2304
        %v2306 = vlaneseq
        %v2307 = vshrl.u32 %v2306, 7
        %v2308 = vsub.s32 %v2305, %v2307
        %v2309 = vrot.slane %v2113, %v2308
        %v2311 = vunpack.c.l.s4 839922192
        %v2312 = vunpack.c.0.s8 %v2311
        %v2313 = vlaneseq
        %v2314 = vshrl.u32 %v2313, 7
        %v2315 = vsub.s32 %v2312, %v2314
        %v2316 = vrot.slane %v2117, %v2315
        %v2318 = vunpack.c.l.s4 1985246804
        %v2319 = vunpack.c.0.s8 %v2318
        %v2320 = vlaneseq
        %v2321 = vshrl.u32 %v2320, 7
        %v2322 = vsub.s32 %v2319, %v2321
        %v2323 = vrot.slane %v2117, %v2322
        %v2325 = vunpack.c.l.s4 839922192
        %v2326 = vunpack.c.0.s8 %v2325
        %v2327 = vlaneseq
        %v2328 = vshrl.u32 %v2327, 7
        %v2329 = vsub.s32 %v2326, %v2328
        %v2330 = vrot.slane %v2124, %v2329
        %v2332 = vunpack.c.l.s4 1985246804
        %v2333 = vunpack.c.0.s8 %v2332
        %v2334 = vlaneseq
        %v2335 = vshrl.u32 %v2334, 7
        %v2336 = vsub.s32 %v2333, %v2335
        %v2337 = vrot.slane %v2124, %v2336
        %v2339 = vunpack.c.l.s4 839922192
        %v2340 = vunpack.c.0.s8 %v2339
        %v2341 = vlaneseq
        %v2342 = vshrl.u32 %v2341, 7
        %v2343 = vsub.s32 %v2340, %v2342
        %v2344 = vrot.slane %v2128, %v2343
        %v2346 = vunpack.c.l.s4 1985246804
        %v2347 = vunpack.c.0.s8 %v2346
        %v2348 = vlaneseq
        %v2349 = vshrl.u32 %v2348, 7
        %v2350 = vsub.s32 %v2347, %v2349
        %v2351 = vrot.slane %v2128, %v2350
        %v2353 = vunpack.c.l.s4 839922192
        %v2354 = vunpack.c.0.s8 %v2353
        %v2355 = vlaneseq
        %v2356 = vshrl.u32 %v2355, 7
        %v2357 = vsub.s32 %v2354, %v2356
        %v2358 = vrot.slane %v2135, %v2357
        %v2360 = vunpack.c.l.s4 1985246804
        %v2361 = vunpack.c.0.s8 %v2360
        %v2362 = vlaneseq
        %v2363 = vshrl.u32 %v2362, 7
        %v2364 = vsub.s32 %v2361, %v2363
        %v2365 = vrot.slane %v2135, %v2364
        %v2367 = vunpack.c.l.s4 839922192
        %v2368 = vunpack.c.0.s8 %v2367
        %v2369 = vlaneseq
        %v2370 = vshrl.u32 %v2369, 7
        %v2371 = vsub.s32 %v2368, %v2370
        %v2372 = vrot.slane %v2139, %v2371
        %v2374 = vunpack.c.l.s4 1985246804
        %v2375 = vunpack.c.0.s8 %v2374
        %v2376 = vlaneseq
        %v2377 = vshrl.u32 %v2376, 7
        %v2378 = vsub.s32 %v2375, %v2377
        %v2379 = vrot.slane %v2139, %v2378
        %v2412 = vmul.bf16 %v562, %v2162
        %v2413 = vmul.bf16 %v563, %v2169
        %v2414 = vmul.bf16 %v564, %v2176
        %v2415 = vmul.bf16 %v565, %v2183
        %v2416 = vmul.bf16 %v566, %v2190
        %v2417 = vmul.bf16 %v567, %v2197
        %v2418 = vmul.bf16 %v568, %v2204
        %v2419 = vmul.bf16 %v569, %v2211
        %v2420 = vmul.bf16 %v570, %v2218
        %v2421 = vmul.bf16 %v571, %v2225
        %v2422 = vmul.bf16 %v572, %v2232
        %v2423 = vmul.bf16 %v573, %v2239
        %v2424 = vmul.bf16 %v574, %v2246
        %v2425 = vmul.bf16 %v575, %v2253
        %v2426 = vmul.bf16 %v576, %v2260
        %v2427 = vmul.bf16 %v577, %v2267
        %v2428 = vmul.bf16 %v578, %v2274
        %v2429 = vmul.bf16 %v579, %v2281
        %v2430 = vmul.bf16 %v580, %v2288
        %v2431 = vmul.bf16 %v581, %v2295
        %v2432 = vmul.bf16 %v582, %v2302
        %v2433 = vmul.bf16 %v583, %v2309
        %v2434 = vmul.bf16 %v584, %v2316
        %v2435 = vmul.bf16 %v585, %v2323
        %v2436 = vmul.bf16 %v586, %v2330
        %v2437 = vmul.bf16 %v587, %v2337
        %v2438 = vmul.bf16 %v588, %v2344
        %v2439 = vmul.bf16 %v589, %v2351
        %v2440 = vmul.bf16 %v590, %v2358
        %v2441 = vmul.bf16 %v591, %v2365
        %v2442 = vmul.bf16 %v592, %v2372
        %v2443 = vmul.bf16 %v593, %v2379
        %v2444 = vunpack.c.l.bf16 %v2412
        %v2445 = vunpack.c.l.bf16 %v2413
        %v2446 = vunpack.c.l.bf16 %v2414
        %v2447 = vunpack.c.l.bf16 %v2415
        %v2448 = vunpack.c.l.bf16 %v2416
        %v2449 = vunpack.c.l.bf16 %v2417
        %v2450 = vunpack.c.l.bf16 %v2418
        %v2451 = vunpack.c.l.bf16 %v2419
        %v2452 = vunpack.c.l.bf16 %v2420
        %v2453 = vunpack.c.l.bf16 %v2421
        %v2454 = vunpack.c.l.bf16 %v2422
        %v2455 = vunpack.c.l.bf16 %v2423
        %v2456 = vunpack.c.l.bf16 %v2424
        %v2457 = vunpack.c.l.bf16 %v2425
        %v2458 = vunpack.c.l.bf16 %v2426
        %v2459 = vunpack.c.l.bf16 %v2427
        %v2460 = vunpack.c.l.bf16 %v2428
        %v2461 = vunpack.c.l.bf16 %v2429
        %v2462 = vunpack.c.l.bf16 %v2430
        %v2463 = vunpack.c.l.bf16 %v2431
        %v2464 = vunpack.c.l.bf16 %v2432
        %v2465 = vunpack.c.l.bf16 %v2433
        %v2466 = vunpack.c.l.bf16 %v2434
        %v2467 = vunpack.c.l.bf16 %v2435
        %v2468 = vunpack.c.l.bf16 %v2436
        %v2469 = vunpack.c.l.bf16 %v2437
        %v2470 = vunpack.c.l.bf16 %v2438
        %v2471 = vunpack.c.l.bf16 %v2439
        %v2472 = vunpack.c.l.bf16 %v2440
        %v2473 = vunpack.c.l.bf16 %v2441
        %v2474 = vunpack.c.l.bf16 %v2442
        %v2475 = vunpack.c.l.bf16 %v2443
        %v2476 = vsel %vm1037, %v2444, 0.0
        %v2477 = vsel %vm1037, %v2445, 0.0
        %v2478 = vadd.f32 %v2476, %v2477
        %v2479 = vsel %vm1037, %v2446, 0.0
        %v2480 = vadd.f32 %v2478, %v2479
        %v2481 = vsel %vm1037, %v2447, 0.0
        %v2482 = vadd.f32 %v2480, %v2481
        %v2483 = vrot.slane %v2482, 4
        %v2484 = vadd.f32 %v2482, %v2483
        %v2485 = vrot.slane %v2484, 2
        %v2486 = vadd.f32 %v2484, %v2485
        %v2487 = vrot.slane %v2486, 1
        %v2488 = vadd.f32 %v2486, %v2487
        %v2489 = vsel %vm1037, %v2448, 0.0
        %v2490 = vsel %vm1037, %v2449, 0.0
        %v2491 = vadd.f32 %v2489, %v2490
        %v2492 = vsel %vm1037, %v2450, 0.0
        %v2493 = vadd.f32 %v2491, %v2492
        %v2494 = vsel %vm1037, %v2451, 0.0
        %v2495 = vadd.f32 %v2493, %v2494
        %v2496 = vrot.slane %v2495, 4
        %v2497 = vadd.f32 %v2495, %v2496
        %v2498 = vrot.slane %v2497, 2
        %v2499 = vadd.f32 %v2497, %v2498
        %v2500 = vrot.slane %v2499, 1
        %v2501 = vadd.f32 %v2499, %v2500
        %v2502 = vsel %vm1037, %v2452, 0.0
        %v2503 = vsel %vm1037, %v2453, 0.0
        %v2504 = vadd.f32 %v2502, %v2503
        %v2505 = vsel %vm1037, %v2454, 0.0
        %v2506 = vadd.f32 %v2504, %v2505
        %v2507 = vsel %vm1037, %v2455, 0.0
        %v2508 = vadd.f32 %v2506, %v2507
        %v2509 = vrot.slane %v2508, 4
        %v2510 = vadd.f32 %v2508, %v2509
        %v2511 = vrot.slane %v2510, 2
        %v2512 = vadd.f32 %v2510, %v2511
        %v2513 = vrot.slane %v2512, 1
        %v2514 = vadd.f32 %v2512, %v2513
        %v2515 = vsel %vm1037, %v2456, 0.0
        %v2516 = vsel %vm1037, %v2457, 0.0
        %v2517 = vadd.f32 %v2515, %v2516
        %v2518 = vsel %vm1037, %v2458, 0.0
        %v2519 = vadd.f32 %v2517, %v2518
        %v2520 = vsel %vm1037, %v2459, 0.0
        %v2521 = vadd.f32 %v2519, %v2520
        %v2522 = vrot.slane %v2521, 4
        %v2523 = vadd.f32 %v2521, %v2522
        %v2524 = vrot.slane %v2523, 2
        %v2525 = vadd.f32 %v2523, %v2524
        %v2526 = vrot.slane %v2525, 1
        %v2527 = vadd.f32 %v2525, %v2526
        %v2528 = vsel %vm1037, %v2460, 0.0
        %v2529 = vsel %vm1037, %v2461, 0.0
        %v2530 = vadd.f32 %v2528, %v2529
        %v2531 = vsel %vm1037, %v2462, 0.0
        %v2532 = vadd.f32 %v2530, %v2531
        %v2533 = vsel %vm1037, %v2463, 0.0
        %v2534 = vadd.f32 %v2532, %v2533
        %v2535 = vrot.slane %v2534, 4
        %v2536 = vadd.f32 %v2534, %v2535
        %v2537 = vrot.slane %v2536, 2
        %v2538 = vadd.f32 %v2536, %v2537
        %v2539 = vrot.slane %v2538, 1
        %v2540 = vadd.f32 %v2538, %v2539
        %v2541 = vsel %vm1037, %v2464, 0.0
        %v2542 = vsel %vm1037, %v2465, 0.0
        %v2543 = vadd.f32 %v2541, %v2542
        %v2544 = vsel %vm1037, %v2466, 0.0
        %v2545 = vadd.f32 %v2543, %v2544
        %v2546 = vsel %vm1037, %v2467, 0.0
        %v2547 = vadd.f32 %v2545, %v2546
        %v2548 = vrot.slane %v2547, 4
        %v2549 = vadd.f32 %v2547, %v2548
        %v2550 = vrot.slane %v2549, 2
        %v2551 = vadd.f32 %v2549, %v2550
        %v2552 = vrot.slane %v2551, 1
        %v2553 = vadd.f32 %v2551, %v2552
        %v2554 = vsel %vm1037, %v2468, 0.0
        %v2555 = vsel %vm1037, %v2469, 0.0
        %v2556 = vadd.f32 %v2554, %v2555
        %v2557 = vsel %vm1037, %v2470, 0.0
        %v2558 = vadd.f32 %v2556, %v2557
        %v2559 = vsel %vm1037, %v2471, 0.0
        %v2560 = vadd.f32 %v2558, %v2559
        %v2561 = vrot.slane %v2560, 4
        %v2562 = vadd.f32 %v2560, %v2561
        %v2563 = vrot.slane %v2562, 2
        %v2564 = vadd.f32 %v2562, %v2563
        %v2565 = vrot.slane %v2564, 1
        %v2566 = vadd.f32 %v2564, %v2565
        %v2567 = vsel %vm1037, %v2472, 0.0
        %v2568 = vsel %vm1037, %v2473, 0.0
        %v2569 = vadd.f32 %v2567, %v2568
        %v2570 = vsel %vm1037, %v2474, 0.0
        %v2571 = vadd.f32 %v2569, %v2570
        %v2572 = vsel %vm1037, %v2475, 0.0
        %v2573 = vadd.f32 %v2571, %v2572
        %v2574 = vrot.slane %v2573, 4
        %v2575 = vadd.f32 %v2573, %v2574
        %v2576 = vrot.slane %v2575, 2
        %v2577 = vadd.f32 %v2575, %v2576
        %v2578 = vrot.slane %v2577, 1
        %v2579 = vadd.f32 %v2577, %v2578
        %v2588 = vsel %vm1150, %v2501, %v2488
        %v2589 = vsel %vm1152, %v2514, %v2588
        %v2590 = vsel %vm1154, %v2527, %v2589
        %v2591 = vsel %vm1156, %v2540, %v2590
        %v2592 = vsel %vm1158, %v2553, %v2591
        %v2593 = vsel %vm1160, %v2566, %v2592
        %v2594 = vsel %vm1162, %v2579, %v2593
        %v2597 = vsel %vm1037, %v2039, 0
        %v2600 = vsel %vm1037, %v2041, 0
        %2602 = vmatprep.subr.bf16.mxu0 0
        %2603 = vmatpush1.bf16.xpose.msra.mxu0 %v2600
        %2604 = vmatprep.subr.bf16.mxu0 0
        %2605 = vmatpush1.bf16.xpose.msra.mxu0 0
        %2606 = vmatprep.subr.bf16.mxu0 0
        %2607 = vmatpush1.bf16.xpose.msra.mxu0 0
        %2608 = vmatprep.subr.bf16.mxu0 0
        %2609 = vmatpush1.bf16.xpose.msra.mxu0 0
        %2610 = vmatprep.subr.bf16.mxu0 0
        %2611 = vmatpush1.bf16.xpose.msra.mxu0 0
        %2612 = vmatprep.subr.bf16.mxu0 0
        %2613 = vmatpush1.bf16.xpose.msra.mxu0 0
        %2614 = vmatprep.subr.bf16.mxu0 0
        %2615 = vmatpush1.bf16.xpose.msra.mxu0 0
        %2616 = vmatprep.subr.bf16.mxu0 0
        %2617 = vmatpush1.bf16.xpose.msra.mxu0 0
        %2618 = vmatprep.subr.bf16.mxu0 0
        %2619 = vmatpush1.bf16.xpose.msra.mxu0 0
        %2620 = vmatprep.subr.bf16.mxu0 0
        %2621 = vmatpush1.bf16.xpose.msra.mxu0 0
        %2622 = vmatprep.subr.bf16.mxu0 0
        %2623 = vmatpush1.bf16.xpose.msra.mxu0 0
        %2624 = vmatprep.subr.bf16.mxu0 0
        %2625 = vmatpush1.bf16.xpose.msra.mxu0 0
        %2626 = vmatprep.subr.bf16.mxu0 0
        %2627 = vmatpush1.bf16.xpose.msra.mxu0 0
        %2628 = vmatprep.subr.bf16.mxu0 0
        %2629 = vmatpush1.bf16.xpose.msra.mxu0 0
        %2630 = vmatprep.subr.bf16.mxu0 0
        %2631 = vmatpush1.bf16.xpose.msra.mxu0 0
        %2632 = vmatprep.subr.bf16.mxu0 0
        %2633 = vmatpush1.bf16.xpose.msra.mxu0 0
        %2634 = vmatprep.mubr.bf16.mxu0 0
        %2635 = vmatmul.mubr.bf16.gmra.mrb[0].mxu0 %v2597
        %v2636 = vpop.f32.mrb[0].mxu0
        %v2637 = vadd.f32 %v2594, %v2636
        %v2638 = vpop.f32.mrb[0].mxu0
        %v2639 = vpop.f32.mrb[0].mxu0
        %v2640 = vpop.f32.mrb[0].mxu0
        %2641 = vdwg.mxu0
        %v2642 = vmul.f32 %v2637, 0.35355338
        %v2643 = vsel %vm1037, %v2642, -inf
        %2644 = vmax.xlane.f32.xlu0 %v2643
        %v2645 = vpop.xlane.xlu0 %2644
        %v2646 = vsub.f32 %v2642, %v2645
        %v2647 = vmul.f32 %v2646, 1.442695
        %v2648 = vpow.pop %v2647
        %v2649 = vsel %vm1037, %v2648, 0.0
        %2650 = vadd.xlane.f32.xlu0 %v2649
        %v2651 = vpop.xlane.xlu0 %2650
        %v2652 = vrcp.pop %v2651
        %v2653 = vmul.f32 1.0, %v2652
        %v2654 = vmul.f32 %v2648, %v2653
        %s2655 = scalar_lea.vmem %s516, 16 [#allocation4]
        %2656 = vst.msk [vmem:[%s2655] sm:$0xff] %vm1037, %v2654
        %v2657 = vpack.c.bf16 %v2654, %v2654
        %v2659 = vsel %vm1037, %v2657, 0
        %v2662 = vsel %vm1229, %v2043, 0
        %2664 = vmatprep.subr.bf16.mxu0 0
        %2665 = vmatpush1.bf16.msra.mxu0 %v2662
        %2666 = vmatprep.subr.bf16.mxu0 0
        %2667 = vmatpush1.bf16.msra.mxu0 0
        %2668 = vmatprep.subr.bf16.mxu0 0
        %2669 = vmatpush1.bf16.msra.mxu0 0
        %2670 = vmatprep.subr.bf16.mxu0 0
        %2671 = vmatpush1.bf16.msra.mxu0 0
        %2672 = vmatprep.subr.bf16.mxu0 0
        %2673 = vmatpush1.bf16.msra.mxu0 0
        %2674 = vmatprep.subr.bf16.mxu0 0
        %2675 = vmatpush1.bf16.msra.mxu0 0
        %2676 = vmatprep.subr.bf16.mxu0 0
        %2677 = vmatpush1.bf16.msra.mxu0 0
        %2678 = vmatprep.subr.bf16.mxu0 0
        %2679 = vmatpush1.bf16.msra.mxu0 0
        %2680 = vmatprep.subr.bf16.mxu0 0
        %2681 = vmatpush1.bf16.msra.mxu0 0
        %2682 = vmatprep.subr.bf16.mxu0 0
        %2683 = vmatpush1.bf16.msra.mxu0 0
        %2684 = vmatprep.subr.bf16.mxu0 0
        %2685 = vmatpush1.bf16.msra.mxu0 0
        %2686 = vmatprep.subr.bf16.mxu0 0
        %2687 = vmatpush1.bf16.msra.mxu0 0
        %2688 = vmatprep.subr.bf16.mxu0 0
        %2689 = vmatpush1.bf16.msra.mxu0 0
        %2690 = vmatprep.subr.bf16.mxu0 0
        %2691 = vmatpush1.bf16.msra.mxu0 0
        %2692 = vmatprep.subr.bf16.mxu0 0
        %2693 = vmatpush1.bf16.msra.mxu0 0
        %2694 = vmatprep.subr.bf16.mxu0 0
        %2695 = vmatpush1.bf16.msra.mxu0 0
        %2696 = vmatprep.mubr.bf16.mxu0 0
        %2697 = vmatmul.mubr.bf16.gmra.mrb[0].mxu0 %v2659
        %v2698 = vpop.f32.mrb[0].mxu0
        %v2699 = vadd.f32 0.0, %v2698
        %v2700 = vpop.f32.mrb[0].mxu0
        %v2701 = vpop.f32.mrb[0].mxu0
        %v2702 = vpop.f32.mrb[0].mxu0
        %2703 = vdwg.mxu0
        %v2704 = vpack.c.bf16 %v2699, %v2699
        %s2705 = scalar_lea.vmem %s6, 8
        %v2706 = vld [vmem:[%s2705] sm:$0xf]
        %v2708 = vsel %vm1037, %v2704, 0
        %v2711 = vsel %vm1229, %v2706, 0
        %2713 = vmatprep.subr.bf16.mxu0 0
        %2714 = vmatpush1.bf16.msra.mxu0 %v2711
        %2715 = vmatprep.subr.bf16.mxu0 0
        %2716 = vmatpush1.bf16.msra.mxu0 0
        %2717 = vmatprep.subr.bf16.mxu0 0
        %2718 = vmatpush1.bf16.msra.mxu0 0
        %2719 = vmatprep.subr.bf16.mxu0 0
        %2720 = vmatpush1.bf16.msra.mxu0 0
        %2721 = vmatprep.subr.bf16.mxu0 0
        %2722 = vmatpush1.bf16.msra.mxu0 0
        %2723 = vmatprep.subr.bf16.mxu0 0
        %2724 = vmatpush1.bf16.msra.mxu0 0
        %2725 = vmatprep.subr.bf16.mxu0 0
        %2726 = vmatpush1.bf16.msra.mxu0 0
        %2727 = vmatprep.subr.bf16.mxu0 0
        %2728 = vmatpush1.bf16.msra.mxu0 0
        %2729 = vmatprep.subr.bf16.mxu0 0
        %2730 = vmatpush1.bf16.msra.mxu0 0
        %2731 = vmatprep.subr.bf16.mxu0 0
        %2732 = vmatpush1.bf16.msra.mxu0 0
        %2733 = vmatprep.subr.bf16.mxu0 0
        %2734 = vmatpush1.bf16.msra.mxu0 0
        %2735 = vmatprep.subr.bf16.mxu0 0
        %2736 = vmatpush1.bf16.msra.mxu0 0
        %2737 = vmatprep.subr.bf16.mxu0 0
        %2738 = vmatpush1.bf16.msra.mxu0 0
        %2739 = vmatprep.subr.bf16.mxu0 0
        %2740 = vmatpush1.bf16.msra.mxu0 0
        %2741 = vmatprep.subr.bf16.mxu0 0
        %2742 = vmatpush1.bf16.msra.mxu0 0
        %2743 = vmatprep.subr.bf16.mxu0 0
        %2744 = vmatpush1.bf16.msra.mxu0 0
        %2745 = vmatprep.mubr.bf16.mxu0 0
        %2746 = vmatmul.mubr.bf16.gmra.mrb[0].mxu0 %v2708
        %v2747 = vpop.f32.mrb[0].mxu0
        %v2748 = vadd.f32 0.0, %v2747
        %v2749 = vpop.f32.mrb[0].mxu0
        %v2750 = vpop.f32.mrb[0].mxu0
        %v2751 = vpop.f32.mrb[0].mxu0
        %2752 = vdwg.mxu0
        %v2753 = vadd.f32 %v2037, %v2748
        %s2754 = scalar_lea.vmem %s524, 12
        %v2755 = vld [vmem:[%s2754] sm:$0xf]
        %s2756 = scalar_lea.vmem %s529, 12
        %v2757 = vld [vmem:[%s2756] sm:$0xf]
        %s2758 = scalar_lea.vmem %s534, 12
        %v2759 = vld [vmem:[%s2758] sm:$0xf]
        %s2760 = scalar_lea.vmem %s542, 12
        %v2761 = vld [vmem:[%s2760] sm:$0xf]
        %v2763 = vpack.i.b16 %v2761, %v2761
        %v2765 = vlaneseq
        %v2766 = vshrl.u32 %v2765, 7
        %v2767 = vsub.s32 0, %v2766
        %v2768 = vrot.slane %v2763, %v2767
        %2770 = vbcast.lane.c.b16.xlu0 %v2768, 256
        %v2771 = vpop.permute.xlu0 %2770
        %s2773 = sor.u32 256, 16
        %2774 = vbcast.lane.c.b16.xlu0 %v2768, %s2773
        %v2775 = vpop.permute.xlu0 %2774
        %v2776 = vshrl.u32 %v2761, 16
        %v2777 = vpack.i.b16 %v2776, %v2776
        %v2779 = vlaneseq
        %v2780 = vshrl.u32 %v2779, 7
        %v2781 = vsub.s32 0, %v2780
        %v2782 = vrot.slane %v2777, %v2781
        %2784 = vbcast.lane.c.b16.xlu0 %v2782, 256
        %v2785 = vpop.permute.xlu0 %2784
        %s2787 = sor.u32 256, 16
        %2788 = vbcast.lane.c.b16.xlu0 %v2782, %s2787
        %v2789 = vpop.permute.xlu0 %2788
        %v2790 = vlaneseq
        %v2791 = vshrl.u32 %v2790, 7
        %v2792 = vsub.s32 1, %v2791
        %v2793 = vrot.slane %v2763, %v2792
        %2795 = vbcast.lane.c.b16.xlu0 %v2793, 256
        %v2796 = vpop.permute.xlu0 %2795
        %s2798 = sor.u32 256, 16
        %2799 = vbcast.lane.c.b16.xlu0 %v2793, %s2798
        %v2800 = vpop.permute.xlu0 %2799
        %v2801 = vlaneseq
        %v2802 = vshrl.u32 %v2801, 7
        %v2803 = vsub.s32 1, %v2802
        %v2804 = vrot.slane %v2777, %v2803
        %2806 = vbcast.lane.c.b16.xlu0 %v2804, 256
        %v2807 = vpop.permute.xlu0 %2806
        %s2809 = sor.u32 256, 16
        %2810 = vbcast.lane.c.b16.xlu0 %v2804, %s2809
        %v2811 = vpop.permute.xlu0 %2810
        %v2812 = vlaneseq
        %v2813 = vshrl.u32 %v2812, 7
        %v2814 = vsub.s32 2, %v2813
        %v2815 = vrot.slane %v2763, %v2814
        %2817 = vbcast.lane.c.b16.xlu0 %v2815, 256
        %v2818 = vpop.permute.xlu0 %2817
        %s2820 = sor.u32 256, 16
        %2821 = vbcast.lane.c.b16.xlu0 %v2815, %s2820
        %v2822 = vpop.permute.xlu0 %2821
        %v2823 = vlaneseq
        %v2824 = vshrl.u32 %v2823, 7
        %v2825 = vsub.s32 2, %v2824
        %v2826 = vrot.slane %v2777, %v2825
        %2828 = vbcast.lane.c.b16.xlu0 %v2826, 256
        %v2829 = vpop.permute.xlu0 %2828
        %s2831 = sor.u32 256, 16
        %2832 = vbcast.lane.c.b16.xlu0 %v2826, %s2831
        %v2833 = vpop.permute.xlu0 %2832
        %v2834 = vlaneseq
        %v2835 = vshrl.u32 %v2834, 7
        %v2836 = vsub.s32 3, %v2835
        %v2837 = vrot.slane %v2763, %v2836
        %2839 = vbcast.lane.c.b16.xlu0 %v2837, 256
        %v2840 = vpop.permute.xlu0 %2839
        %s2842 = sor.u32 256, 16
        %2843 = vbcast.lane.c.b16.xlu0 %v2837, %s2842
        %v2844 = vpop.permute.xlu0 %2843
        %v2845 = vlaneseq
        %v2846 = vshrl.u32 %v2845, 7
        %v2847 = vsub.s32 3, %v2846
        %v2848 = vrot.slane %v2777, %v2847
        %2850 = vbcast.lane.c.b16.xlu0 %v2848, 256
        %v2851 = vpop.permute.xlu0 %2850
        %s2853 = sor.u32 256, 16
        %2854 = vbcast.lane.c.b16.xlu0 %v2848, %s2853
        %v2855 = vpop.permute.xlu0 %2854
        %v2873 = vunpack.c.l.s4 839922192
        %v2874 = vunpack.c.0.s8 %v2873
        %v2875 = vlaneseq
        %v2876 = vshrl.u32 %v2875, 7
        %v2877 = vsub.s32 %v2874, %v2876
        %v2878 = vrot.slane %v2771, %v2877
        %v2880 = vunpack.c.l.s4 1985246804
        %v2881 = vunpack.c.0.s8 %v2880
        %v2882 = vlaneseq
        %v2883 = vshrl.u32 %v2882, 7
        %v2884 = vsub.s32 %v2881, %v2883
        %v2885 = vrot.slane %v2771, %v2884
        %v2887 = vunpack.c.l.s4 839922192
        %v2888 = vunpack.c.0.s8 %v2887
        %v2889 = vlaneseq
        %v2890 = vshrl.u32 %v2889, 7
        %v2891 = vsub.s32 %v2888, %v2890
        %v2892 = vrot.slane %v2775, %v2891
        %v2894 = vunpack.c.l.s4 1985246804
        %v2895 = vunpack.c.0.s8 %v2894
        %v2896 = vlaneseq
        %v2897 = vshrl.u32 %v2896, 7
        %v2898 = vsub.s32 %v2895, %v2897
        %v2899 = vrot.slane %v2775, %v2898
        %v2901 = vunpack.c.l.s4 839922192
        %v2902 = vunpack.c.0.s8 %v2901
        %v2903 = vlaneseq
        %v2904 = vshrl.u32 %v2903, 7
        %v2905 = vsub.s32 %v2902, %v2904
        %v2906 = vrot.slane %v2785, %v2905
        %v2908 = vunpack.c.l.s4 1985246804
        %v2909 = vunpack.c.0.s8 %v2908
        %v2910 = vlaneseq
        %v2911 = vshrl.u32 %v2910, 7
        %v2912 = vsub.s32 %v2909, %v2911
        %v2913 = vrot.slane %v2785, %v2912
        %v2915 = vunpack.c.l.s4 839922192
        %v2916 = vunpack.c.0.s8 %v2915
        %v2917 = vlaneseq
        %v2918 = vshrl.u32 %v2917, 7
        %v2919 = vsub.s32 %v2916, %v2918
        %v2920 = vrot.slane %v2789, %v2919
        %v2922 = vunpack.c.l.s4 1985246804
        %v2923 = vunpack.c.0.s8 %v2922
        %v2924 = vlaneseq
        %v2925 = vshrl.u32 %v2924, 7
        %v2926 = vsub.s32 %v2923, %v2925
        %v2927 = vrot.slane %v2789, %v2926
        %v2929 = vunpack.c.l.s4 839922192
        %v2930 = vunpack.c.0.s8 %v2929
        %v2931 = vlaneseq
        %v2932 = vshrl.u32 %v2931, 7
        %v2933 = vsub.s32 %v2930, %v2932
        %v2934 = vrot.slane %v2796, %v2933
        %v2936 = vunpack.c.l.s4 1985246804
        %v2937 = vunpack.c.0.s8 %v2936
        %v2938 = vlaneseq
        %v2939 = vshrl.u32 %v2938, 7
        %v2940 = vsub.s32 %v2937, %v2939
        %v2941 = vrot.slane %v2796, %v2940
        %v2943 = vunpack.c.l.s4 839922192
        %v2944 = vunpack.c.0.s8 %v2943
        %v2945 = vlaneseq
        %v2946 = vshrl.u32 %v2945, 7
        %v2947 = vsub.s32 %v2944, %v2946
        %v2948 = vrot.slane %v2800, %v2947
        %v2950 = vunpack.c.l.s4 1985246804
        %v2951 = vunpack.c.0.s8 %v2950
        %v2952 = vlaneseq
        %v2953 = vshrl.u32 %v2952, 7
        %v2954 = vsub.s32 %v2951, %v2953
        %v2955 = vrot.slane %v2800, %v2954
        %v2957 = vunpack.c.l.s4 839922192
        %v2958 = vunpack.c.0.s8 %v2957
        %v2959 = vlaneseq
        %v2960 = vshrl.u32 %v2959, 7
        %v2961 = vsub.s32 %v2958, %v2960
        %v2962 = vrot.slane %v2807, %v2961
        %v2964 = vunpack.c.l.s4 1985246804
        %v2965 = vunpack.c.0.s8 %v2964
        %v2966 = vlaneseq
        %v2967 = vshrl.u32 %v2966, 7
        %v2968 = vsub.s32 %v2965, %v2967
        %v2969 = vrot.slane %v2807, %v2968
        %v2971 = vunpack.c.l.s4 839922192
        %v2972 = vunpack.c.0.s8 %v2971
        %v2973 = vlaneseq
        %v2974 = vshrl.u32 %v2973, 7
        %v2975 = vsub.s32 %v2972, %v2974
        %v2976 = vrot.slane %v2811, %v2975
        %v2978 = vunpack.c.l.s4 1985246804
        %v2979 = vunpack.c.0.s8 %v2978
        %v2980 = vlaneseq
        %v2981 = vshrl.u32 %v2980, 7
        %v2982 = vsub.s32 %v2979, %v2981
        %v2983 = vrot.slane %v2811, %v2982
        %v2985 = vunpack.c.l.s4 839922192
        %v2986 = vunpack.c.0.s8 %v2985
        %v2987 = vlaneseq
        %v2988 = vshrl.u32 %v2987, 7
        %v2989 = vsub.s32 %v2986, %v2988
        %v2990 = vrot.slane %v2818, %v2989
        %v2992 = vunpack.c.l.s4 1985246804
        %v2993 = vunpack.c.0.s8 %v2992
        %v2994 = vlaneseq
        %v2995 = vshrl.u32 %v2994, 7
        %v2996 = vsub.s32 %v2993, %v2995
        %v2997 = vrot.slane %v2818, %v2996
        %v2999 = vunpack.c.l.s4 839922192
        %v3000 = vunpack.c.0.s8 %v2999
        %v3001 = vlaneseq
        %v3002 = vshrl.u32 %v3001, 7
        %v3003 = vsub.s32 %v3000, %v3002
        %v3004 = vrot.slane %v2822, %v3003
        %v3006 = vunpack.c.l.s4 1985246804
        %v3007 = vunpack.c.0.s8 %v3006
        %v3008 = vlaneseq
        %v3009 = vshrl.u32 %v3008, 7
        %v3010 = vsub.s32 %v3007, %v3009
        %v3011 = vrot.slane %v2822, %v3010
        %v3013 = vunpack.c.l.s4 839922192
        %v3014 = vunpack.c.0.s8 %v3013
        %v3015 = vlaneseq
        %v3016 = vshrl.u32 %v3015, 7
        %v3017 = vsub.s32 %v3014, %v3016
        %v3018 = vrot.slane %v2829, %v3017
        %v3020 = vunpack.c.l.s4 1985246804
        %v3021 = vunpack.c.0.s8 %v3020
        %v3022 = vlaneseq
        %v3023 = vshrl.u32 %v3022, 7
        %v3024 = vsub.s32 %v3021, %v3023
        %v3025 = vrot.slane %v2829, %v3024
        %v3027 = vunpack.c.l.s4 839922192
        %v3028 = vunpack.c.0.s8 %v3027
        %v3029 = vlaneseq
        %v3030 = vshrl.u32 %v3029, 7
        %v3031 = vsub.s32 %v3028, %v3030
        %v3032 = vrot.slane %v2833, %v3031
        %v3034 = vunpack.c.l.s4 1985246804
        %v3035 = vunpack.c.0.s8 %v3034
        %v3036 = vlaneseq
        %v3037 = vshrl.u32 %v3036, 7
        %v3038 = vsub.s32 %v3035, %v3037
        %v3039 = vrot.slane %v2833, %v3038
        %v3041 = vunpack.c.l.s4 839922192
        %v3042 = vunpack.c.0.s8 %v3041
        %v3043 = vlaneseq
        %v3044 = vshrl.u32 %v3043, 7
        %v3045 = vsub.s32 %v3042, %v3044
        %v3046 = vrot.slane %v2840, %v3045
        %v3048 = vunpack.c.l.s4 1985246804
        %v3049 = vunpack.c.0.s8 %v3048
        %v3050 = vlaneseq
        %v3051 = vshrl.u32 %v3050, 7
        %v3052 = vsub.s32 %v3049, %v3051
        %v3053 = vrot.slane %v2840, %v3052
        %v3055 = vunpack.c.l.s4 839922192
        %v3056 = vunpack.c.0.s8 %v3055
        %v3057 = vlaneseq
        %v3058 = vshrl.u32 %v3057, 7
        %v3059 = vsub.s32 %v3056, %v3058
        %v3060 = vrot.slane %v2844, %v3059
        %v3062 = vunpack.c.l.s4 1985246804
        %v3063 = vunpack.c.0.s8 %v3062
        %v3064 = vlaneseq
        %v3065 = vshrl.u32 %v3064, 7
        %v3066 = vsub.s32 %v3063, %v3065
        %v3067 = vrot.slane %v2844, %v3066
        %v3069 = vunpack.c.l.s4 839922192
        %v3070 = vunpack.c.0.s8 %v3069
        %v3071 = vlaneseq
        %v3072 = vshrl.u32 %v3071, 7
        %v3073 = vsub.s32 %v3070, %v3072
        %v3074 = vrot.slane %v2851, %v3073
        %v3076 = vunpack.c.l.s4 1985246804
        %v3077 = vunpack.c.0.s8 %v3076
        %v3078 = vlaneseq
        %v3079 = vshrl.u32 %v3078, 7
        %v3080 = vsub.s32 %v3077, %v3079
        %v3081 = vrot.slane %v2851, %v3080
        %v3083 = vunpack.c.l.s4 839922192
        %v3084 = vunpack.c.0.s8 %v3083
        %v3085 = vlaneseq
        %v3086 = vshrl.u32 %v3085, 7
        %v3087 = vsub.s32 %v3084, %v3086
        %v3088 = vrot.slane %v2855, %v3087
        %v3090 = vunpack.c.l.s4 1985246804
        %v3091 = vunpack.c.0.s8 %v3090
        %v3092 = vlaneseq
        %v3093 = vshrl.u32 %v3092, 7
        %v3094 = vsub.s32 %v3091, %v3093
        %v3095 = vrot.slane %v2855, %v3094
        %v3128 = vmul.bf16 %v562, %v2878
        %v3129 = vmul.bf16 %v563, %v2885
        %v3130 = vmul.bf16 %v564, %v2892
        %v3131 = vmul.bf16 %v565, %v2899
        %v3132 = vmul.bf16 %v566, %v2906
        %v3133 = vmul.bf16 %v567, %v2913
        %v3134 = vmul.bf16 %v568, %v2920
        %v3135 = vmul.bf16 %v569, %v2927
        %v3136 = vmul.bf16 %v570, %v2934
        %v3137 = vmul.bf16 %v571, %v2941
        %v3138 = vmul.bf16 %v572, %v2948
        %v3139 = vmul.bf16 %v573, %v2955
        %v3140 = vmul.bf16 %v574, %v2962
        %v3141 = vmul.bf16 %v575, %v2969
        %v3142 = vmul.bf16 %v576, %v2976
        %v3143 = vmul.bf16 %v577, %v2983
        %v3144 = vmul.bf16 %v578, %v2990
        %v3145 = vmul.bf16 %v579, %v2997
        %v3146 = vmul.bf16 %v580, %v3004
        %v3147 = vmul.bf16 %v581, %v3011
        %v3148 = vmul.bf16 %v582, %v3018
        %v3149 = vmul.bf16 %v583, %v3025
        %v3150 = vmul.bf16 %v584, %v3032
        %v3151 = vmul.bf16 %v585, %v3039
        %v3152 = vmul.bf16 %v586, %v3046
        %v3153 = vmul.bf16 %v587, %v3053
        %v3154 = vmul.bf16 %v588, %v3060
        %v3155 = vmul.bf16 %v589, %v3067
        %v3156 = vmul.bf16 %v590, %v3074
        %v3157 = vmul.bf16 %v591, %v3081
        %v3158 = vmul.bf16 %v592, %v3088
        %v3159 = vmul.bf16 %v593, %v3095
        %v3160 = vunpack.c.l.bf16 %v3128
        %v3161 = vunpack.c.l.bf16 %v3129
        %v3162 = vunpack.c.l.bf16 %v3130
        %v3163 = vunpack.c.l.bf16 %v3131
        %v3164 = vunpack.c.l.bf16 %v3132
        %v3165 = vunpack.c.l.bf16 %v3133
        %v3166 = vunpack.c.l.bf16 %v3134
        %v3167 = vunpack.c.l.bf16 %v3135
        %v3168 = vunpack.c.l.bf16 %v3136
        %v3169 = vunpack.c.l.bf16 %v3137
        %v3170 = vunpack.c.l.bf16 %v3138
        %v3171 = vunpack.c.l.bf16 %v3139
        %v3172 = vunpack.c.l.bf16 %v3140
        %v3173 = vunpack.c.l.bf16 %v3141
        %v3174 = vunpack.c.l.bf16 %v3142
        %v3175 = vunpack.c.l.bf16 %v3143
        %v3176 = vunpack.c.l.bf16 %v3144
        %v3177 = vunpack.c.l.bf16 %v3145
        %v3178 = vunpack.c.l.bf16 %v3146
        %v3179 = vunpack.c.l.bf16 %v3147
        %v3180 = vunpack.c.l.bf16 %v3148
        %v3181 = vunpack.c.l.bf16 %v3149
        %v3182 = vunpack.c.l.bf16 %v3150
        %v3183 = vunpack.c.l.bf16 %v3151
        %v3184 = vunpack.c.l.bf16 %v3152
        %v3185 = vunpack.c.l.bf16 %v3153
        %v3186 = vunpack.c.l.bf16 %v3154
        %v3187 = vunpack.c.l.bf16 %v3155
        %v3188 = vunpack.c.l.bf16 %v3156
        %v3189 = vunpack.c.l.bf16 %v3157
        %v3190 = vunpack.c.l.bf16 %v3158
        %v3191 = vunpack.c.l.bf16 %v3159
        %v3192 = vsel %vm1037, %v3160, 0.0
        %v3193 = vsel %vm1037, %v3161, 0.0
        %v3194 = vadd.f32 %v3192, %v3193
        %v3195 = vsel %vm1037, %v3162, 0.0
        %v3196 = vadd.f32 %v3194, %v3195
        %v3197 = vsel %vm1037, %v3163, 0.0
        %v3198 = vadd.f32 %v3196, %v3197
        %v3199 = vrot.slane %v3198, 4
        %v3200 = vadd.f32 %v3198, %v3199
        %v3201 = vrot.slane %v3200, 2
        %v3202 = vadd.f32 %v3200, %v3201
        %v3203 = vrot.slane %v3202, 1
        %v3204 = vadd.f32 %v3202, %v3203
        %v3205 = vsel %vm1037, %v3164, 0.0
        %v3206 = vsel %vm1037, %v3165, 0.0
        %v3207 = vadd.f32 %v3205, %v3206
        %v3208 = vsel %vm1037, %v3166, 0.0
        %v3209 = vadd.f32 %v3207, %v3208
        %v3210 = vsel %vm1037, %v3167, 0.0
        %v3211 = vadd.f32 %v3209, %v3210
        %v3212 = vrot.slane %v3211, 4
        %v3213 = vadd.f32 %v3211, %v3212
        %v3214 = vrot.slane %v3213, 2
        %v3215 = vadd.f32 %v3213, %v3214
        %v3216 = vrot.slane %v3215, 1
        %v3217 = vadd.f32 %v3215, %v3216
        %v3218 = vsel %vm1037, %v3168, 0.0
        %v3219 = vsel %vm1037, %v3169, 0.0
        %v3220 = vadd.f32 %v3218, %v3219
        %v3221 = vsel %vm1037, %v3170, 0.0
        %v3222 = vadd.f32 %v3220, %v3221
        %v3223 = vsel %vm1037, %v3171, 0.0
        %v3224 = vadd.f32 %v3222, %v3223
        %v3225 = vrot.slane %v3224, 4
        %v3226 = vadd.f32 %v3224, %v3225
        %v3227 = vrot.slane %v3226, 2
        %v3228 = vadd.f32 %v3226, %v3227
        %v3229 = vrot.slane %v3228, 1
        %v3230 = vadd.f32 %v3228, %v3229
        %v3231 = vsel %vm1037, %v3172, 0.0
        %v3232 = vsel %vm1037, %v3173, 0.0
        %v3233 = vadd.f32 %v3231, %v3232
        %v3234 = vsel %vm1037, %v3174, 0.0
        %v3235 = vadd.f32 %v3233, %v3234
        %v3236 = vsel %vm1037, %v3175, 0.0
        %v3237 = vadd.f32 %v3235, %v3236
        %v3238 = vrot.slane %v3237, 4
        %v3239 = vadd.f32 %v3237, %v3238
        %v3240 = vrot.slane %v3239, 2
        %v3241 = vadd.f32 %v3239, %v3240
        %v3242 = vrot.slane %v3241, 1
        %v3243 = vadd.f32 %v3241, %v3242
        %v3244 = vsel %vm1037, %v3176, 0.0
        %v3245 = vsel %vm1037, %v3177, 0.0
        %v3246 = vadd.f32 %v3244, %v3245
        %v3247 = vsel %vm1037, %v3178, 0.0
        %v3248 = vadd.f32 %v3246, %v3247
        %v3249 = vsel %vm1037, %v3179, 0.0
        %v3250 = vadd.f32 %v3248, %v3249
        %v3251 = vrot.slane %v3250, 4
        %v3252 = vadd.f32 %v3250, %v3251
        %v3253 = vrot.slane %v3252, 2
        %v3254 = vadd.f32 %v3252, %v3253
        %v3255 = vrot.slane %v3254, 1
        %v3256 = vadd.f32 %v3254, %v3255
        %v3257 = vsel %vm1037, %v3180, 0.0
        %v3258 = vsel %vm1037, %v3181, 0.0
        %v3259 = vadd.f32 %v3257, %v3258
        %v3260 = vsel %vm1037, %v3182, 0.0
        %v3261 = vadd.f32 %v3259, %v3260
        %v3262 = vsel %vm1037, %v3183, 0.0
        %v3263 = vadd.f32 %v3261, %v3262
        %v3264 = vrot.slane %v3263, 4
        %v3265 = vadd.f32 %v3263, %v3264
        %v3266 = vrot.slane %v3265, 2
        %v3267 = vadd.f32 %v3265, %v3266
        %v3268 = vrot.slane %v3267, 1
        %v3269 = vadd.f32 %v3267, %v3268
        %v3270 = vsel %vm1037, %v3184, 0.0
        %v3271 = vsel %vm1037, %v3185, 0.0
        %v3272 = vadd.f32 %v3270, %v3271
        %v3273 = vsel %vm1037, %v3186, 0.0
        %v3274 = vadd.f32 %v3272, %v3273
        %v3275 = vsel %vm1037, %v3187, 0.0
        %v3276 = vadd.f32 %v3274, %v3275
        %v3277 = vrot.slane %v3276, 4
        %v3278 = vadd.f32 %v3276, %v3277
        %v3279 = vrot.slane %v3278, 2
        %v3280 = vadd.f32 %v3278, %v3279
        %v3281 = vrot.slane %v3280, 1
        %v3282 = vadd.f32 %v3280, %v3281
        %v3283 = vsel %vm1037, %v3188, 0.0
        %v3284 = vsel %vm1037, %v3189, 0.0
        %v3285 = vadd.f32 %v3283, %v3284
        %v3286 = vsel %vm1037, %v3190, 0.0
        %v3287 = vadd.f32 %v3285, %v3286
        %v3288 = vsel %vm1037, %v3191, 0.0
        %v3289 = vadd.f32 %v3287, %v3288
        %v3290 = vrot.slane %v3289, 4
        %v3291 = vadd.f32 %v3289, %v3290
        %v3292 = vrot.slane %v3291, 2
        %v3293 = vadd.f32 %v3291, %v3292
        %v3294 = vrot.slane %v3293, 1
        %v3295 = vadd.f32 %v3293, %v3294
        %v3304 = vsel %vm1150, %v3217, %v3204
        %v3305 = vsel %vm1152, %v3230, %v3304
        %v3306 = vsel %vm1154, %v3243, %v3305
        %v3307 = vsel %vm1156, %v3256, %v3306
        %v3308 = vsel %vm1158, %v3269, %v3307
        %v3309 = vsel %vm1160, %v3282, %v3308
        %v3310 = vsel %vm1162, %v3295, %v3309
        %v3313 = vsel %vm1037, %v2755, 0
        %v3316 = vsel %vm1037, %v2757, 0
        %3318 = vmatprep.subr.bf16.mxu0 0
        %3319 = vmatpush1.bf16.xpose.msra.mxu0 %v3316
        %3320 = vmatprep.subr.bf16.mxu0 0
        %3321 = vmatpush1.bf16.xpose.msra.mxu0 0
        %3322 = vmatprep.subr.bf16.mxu0 0
        %3323 = vmatpush1.bf16.xpose.msra.mxu0 0
        %3324 = vmatprep.subr.bf16.mxu0 0
        %3325 = vmatpush1.bf16.xpose.msra.mxu0 0
        %3326 = vmatprep.subr.bf16.mxu0 0
        %3327 = vmatpush1.bf16.xpose.msra.mxu0 0
        %3328 = vmatprep.subr.bf16.mxu0 0
        %3329 = vmatpush1.bf16.xpose.msra.mxu0 0
        %3330 = vmatprep.subr.bf16.mxu0 0
        %3331 = vmatpush1.bf16.xpose.msra.mxu0 0
        %3332 = vmatprep.subr.bf16.mxu0 0
        %3333 = vmatpush1.bf16.xpose.msra.mxu0 0
        %3334 = vmatprep.subr.bf16.mxu0 0
        %3335 = vmatpush1.bf16.xpose.msra.mxu0 0
        %3336 = vmatprep.subr.bf16.mxu0 0
        %3337 = vmatpush1.bf16.xpose.msra.mxu0 0
        %3338 = vmatprep.subr.bf16.mxu0 0
        %3339 = vmatpush1.bf16.xpose.msra.mxu0 0
        %3340 = vmatprep.subr.bf16.mxu0 0
        %3341 = vmatpush1.bf16.xpose.msra.mxu0 0
        %3342 = vmatprep.subr.bf16.mxu0 0
        %3343 = vmatpush1.bf16.xpose.msra.mxu0 0
        %3344 = vmatprep.subr.bf16.mxu0 0
        %3345 = vmatpush1.bf16.xpose.msra.mxu0 0
        %3346 = vmatprep.subr.bf16.mxu0 0
        %3347 = vmatpush1.bf16.xpose.msra.mxu0 0
        %3348 = vmatprep.subr.bf16.mxu0 0
        %3349 = vmatpush1.bf16.xpose.msra.mxu0 0
        %3350 = vmatprep.mubr.bf16.mxu0 0
        %3351 = vmatmul.mubr.bf16.gmra.mrb[0].mxu0 %v3313
        %v3352 = vpop.f32.mrb[0].mxu0
        %v3353 = vadd.f32 %v3310, %v3352
        %v3354 = vpop.f32.mrb[0].mxu0
        %v3355 = vpop.f32.mrb[0].mxu0
        %v3356 = vpop.f32.mrb[0].mxu0
        %3357 = vdwg.mxu0
        %v3358 = vmul.f32 %v3353, 0.35355338
        %v3359 = vsel %vm1037, %v3358, -inf
        %3360 = vmax.xlane.f32.xlu0 %v3359
        %v3361 = vpop.xlane.xlu0 %3360
        %v3362 = vsub.f32 %v3358, %v3361
        %v3363 = vmul.f32 %v3362, 1.442695
        %v3364 = vpow.pop %v3363
        %v3365 = vsel %vm1037, %v3364, 0.0
        %3366 = vadd.xlane.f32.xlu0 %v3365
        %v3367 = vpop.xlane.xlu0 %3366
        %v3368 = vrcp.pop %v3367
        %v3369 = vmul.f32 1.0, %v3368
        %v3370 = vmul.f32 %v3364, %v3369
        %s3371 = scalar_lea.vmem %s516, 24 [#allocation4]
        %3372 = vst.msk [vmem:[%s3371] sm:$0xff] %vm1037, %v3370
        %v3373 = vpack.c.bf16 %v3370, %v3370
        %v3375 = vsel %vm1037, %v3373, 0
        %v3378 = vsel %vm1229, %v2759, 0
        %3380 = vmatprep.subr.bf16.mxu0 0
        %3381 = vmatpush1.bf16.msra.mxu0 %v3378
        %3382 = vmatprep.subr.bf16.mxu0 0
        %3383 = vmatpush1.bf16.msra.mxu0 0
        %3384 = vmatprep.subr.bf16.mxu0 0
        %3385 = vmatpush1.bf16.msra.mxu0 0
        %3386 = vmatprep.subr.bf16.mxu0 0
        %3387 = vmatpush1.bf16.msra.mxu0 0
        %3388 = vmatprep.subr.bf16.mxu0 0
        %3389 = vmatpush1.bf16.msra.mxu0 0
        %3390 = vmatprep.subr.bf16.mxu0 0
        %3391 = vmatpush1.bf16.msra.mxu0 0
        %3392 = vmatprep.subr.bf16.mxu0 0
        %3393 = vmatpush1.bf16.msra.mxu0 0
        %3394 = vmatprep.subr.bf16.mxu0 0
        %3395 = vmatpush1.bf16.msra.mxu0 0
        %3396 = vmatprep.subr.bf16.mxu0 0
        %3397 = vmatpush1.bf16.msra.mxu0 0
        %3398 = vmatprep.subr.bf16.mxu0 0
        %3399 = vmatpush1.bf16.msra.mxu0 0
        %3400 = vmatprep.subr.bf16.mxu0 0
        %3401 = vmatpush1.bf16.msra.mxu0 0
        %3402 = vmatprep.subr.bf16.mxu0 0
        %3403 = vmatpush1.bf16.msra.mxu0 0
        %3404 = vmatprep.subr.bf16.mxu0 0
        %3405 = vmatpush1.bf16.msra.mxu0 0
        %3406 = vmatprep.subr.bf16.mxu0 0
        %3407 = vmatpush1.bf16.msra.mxu0 0
        %3408 = vmatprep.subr.bf16.mxu0 0
        %3409 = vmatpush1.bf16.msra.mxu0 0
        %3410 = vmatprep.subr.bf16.mxu0 0
        %3411 = vmatpush1.bf16.msra.mxu0 0
        %3412 = vmatprep.mubr.bf16.mxu0 0
        %3413 = vmatmul.mubr.bf16.gmra.mrb[0].mxu0 %v3375
        %v3414 = vpop.f32.mrb[0].mxu0
        %v3415 = vadd.f32 0.0, %v3414
        %v3416 = vpop.f32.mrb[0].mxu0
        %v3417 = vpop.f32.mrb[0].mxu0
        %v3418 = vpop.f32.mrb[0].mxu0
        %3419 = vdwg.mxu0
        %v3420 = vpack.c.bf16 %v3415, %v3415
        %s3421 = scalar_lea.vmem %s6, 12
        %v3422 = vld [vmem:[%s3421] sm:$0xf]
        %v3424 = vsel %vm1037, %v3420, 0
        %v3427 = vsel %vm1229, %v3422, 0
        %3429 = vmatprep.subr.bf16.mxu0 0
        %3430 = vmatpush1.bf16.msra.mxu0 %v3427
        %3431 = vmatprep.subr.bf16.mxu0 0
        %3432 = vmatpush1.bf16.msra.mxu0 0
        %3433 = vmatprep.subr.bf16.mxu0 0
        %3434 = vmatpush1.bf16.msra.mxu0 0
        %3435 = vmatprep.subr.bf16.mxu0 0
        %3436 = vmatpush1.bf16.msra.mxu0 0
        %3437 = vmatprep.subr.bf16.mxu0 0
        %3438 = vmatpush1.bf16.msra.mxu0 0
        %3439 = vmatprep.subr.bf16.mxu0 0
        %3440 = vmatpush1.bf16.msra.mxu0 0
        %3441 = vmatprep.subr.bf16.mxu0 0
        %3442 = vmatpush1.bf16.msra.mxu0 0
        %3443 = vmatprep.subr.bf16.mxu0 0
        %3444 = vmatpush1.bf16.msra.mxu0 0
        %3445 = vmatprep.subr.bf16.mxu0 0
        %3446 = vmatpush1.bf16.msra.mxu0 0
        %3447 = vmatprep.subr.bf16.mxu0 0
        %3448 = vmatpush1.bf16.msra.mxu0 0
        %3449 = vmatprep.subr.bf16.mxu0 0
        %3450 = vmatpush1.bf16.msra.mxu0 0
        %3451 = vmatprep.subr.bf16.mxu0 0
        %3452 = vmatpush1.bf16.msra.mxu0 0
        %3453 = vmatprep.subr.bf16.mxu0 0
        %3454 = vmatpush1.bf16.msra.mxu0 0
        %3455 = vmatprep.subr.bf16.mxu0 0
        %3456 = vmatpush1.bf16.msra.mxu0 0
        %3457 = vmatprep.subr.bf16.mxu0 0
        %3458 = vmatpush1.bf16.msra.mxu0 0
        %3459 = vmatprep.subr.bf16.mxu0 0
        %3460 = vmatpush1.bf16.msra.mxu0 0
        %3461 = vmatprep.mubr.bf16.mxu0 0
        %3462 = vmatmul.mubr.bf16.gmra.mrb[0].mxu0 %v3424
        %v3463 = vpop.f32.mrb[0].mxu0
        %v3464 = vadd.f32 0.0, %v3463
        %v3465 = vpop.f32.mrb[0].mxu0
        %v3466 = vpop.f32.mrb[0].mxu0
        %v3467 = vpop.f32.mrb[0].mxu0
        %3468 = vdwg.mxu0
        %v3469 = vadd.f32 %v2753, %v3464
        %vm3470 = vcmask 261120
        %v3471 = vsel %vm3470, %v3469, 0.0
        %3472 = vadd.xlane.f32.xlu0 %v3471
        %v3473 = vpop.xlane.xlu0 %3472
        %v3474 = vrcp.pop 32.0
        %v3475 = vmul.f32 %v3473, %v3474
        %v3476 = vsub.f32 %v3469, %v3475
        %v3477 = vmul.f32 %v3476, %v3476
        %v3478 = vsel %vm3470, %v3477, 0.0
        %3479 = vadd.xlane.f32.xlu0 %v3478
        %v3480 = vpop.xlane.xlu0 %3479
        %v3481 = vmul.f32 %v3480, %v3474
        %v3482 = vadd.f32 %v3481, 1e-05
        %v3483 = vrsqrt.pop %v3482
        %v3484 = vmul.f32 %v3476, %v3483
        %v3485 = vld [vmem:[%s8] sm:$0x1]
        %v3487 = vlaneseq
        %v3488 = vshrl.u32 %v3487, 7
        %v3489 = vsub.s32 0, %v3488
        %v3490 = vrot.slane %v3485, %v3489
        %v3492 = vmul.f32 %v3484, %v3490
        %v3493 = vld [vmem:[%s9] sm:$0x1]
        %v3495 = vlaneseq
        %v3496 = vshrl.u32 %v3495, 7
        %v3497 = vsub.s32 0, %v3496
        %v3498 = vrot.slane %v3493, %v3497
        %v3500 = vadd.f32 %v3492, %v3498
        %3501 = vst.msk [vmem:[%s509] sm:$0xff] %vm3470, %v3500
        %s3502 = sand.u32 %s299, 1
        %s3503 = scalar_lea.sflag [#allocation3], %s3502
        %s3504 = sand.u32 %s299, 1
        %s3505 = smul.addr %s3504, 8
        %s3506 = scalar_lea.vmem [#allocation2], %s3505
        %s3507 = sand.u32 %s327, 1
        %s3508 = scalar_lea.sflag [#allocation5], %s3507
        %s3509 = sand.u32 %s327, 1
        %s3510 = smul.addr %s3509, 32
        %s3511 = scalar_lea.vmem [#allocation4], %s3510
        // Predicated region
        $region61: #{tpu_custom_call.1} parent=59 // pred_check
          %p3512 = pneg %p309
        $region62: #{tpu_custom_call.1} parent=59 // pred_check_branch
          %3514 = sbr.rel (%p3512) target = $region64
        $region63: #{tpu_custom_call.1} parent=59 // pred_region
          %s3516 = ssub.s32 128, 128
          %3517 = vsyncadd %s3503, %s3516
          %s3518 = sadd.s32 %s34, %s33
          %s3519 = smul.addr %s3518, 128
          %s3520 = scalar_lea.hbm %s10, %s3519
          %s3522 = sshll.u32 %s3506, 4
          %s3523 = int_to_ptr.vmem [resolvable:$true] %s3522
          %3525 = dma.vmem_to_hbm [thread:$0]  %s3523, 128, %s3520, %s3503
        $region64: #{tpu_custom_call.1} parent=59 // pred_fallthru
          _
        // Predicated region
        $region65: #{tpu_custom_call.1} parent=59 // pred_check
          %p3526 = pneg %p337
        $region66: #{tpu_custom_call.1} parent=59 // pred_check_branch
          %3528 = sbr.rel (%p3526) target = $region68
        $region67: #{tpu_custom_call.1} parent=59 // pred_region
          %s3530 = ssub.s32 512, 512
          %3531 = vsyncadd %s3508, %s3530
          %s3532 = smul.addr %s33, 4
          %s3533 = sadd.s32 %s34, %s3532
          %s3534 = smul.addr %s3533, 128
          %s3535 = scalar_lea.hbm %s11, %s3534
          %s3536 = sshll.u32 %s3511, 4
          %s3537 = int_to_ptr.vmem [resolvable:$true] %s3536
          %3542 = dma.vmem_to_hbm [thread:$0]  %s3537, 512, %s3535, %s3508, 128, 128, 8
        $region68: #{tpu_custom_call.1} parent=59 // pred_fallthru
          _
      $region60: #{tpu_custom_call.1} parent=5 // pred_fallthru
        _
      %p3543 = scmp.le.s32.totalorder 2, %s24
      // Predicated region
      $region69: #{tpu_custom_call.1} parent=5 // pred_check
        %p3544 = pneg %p3543
      $region70: #{tpu_custom_call.1} parent=5 // pred_check_branch
        %3546 = sbr.rel (%p3544) target = $region72
      $region71: #{tpu_custom_call.1} parent=5 // pred_region
        %s3547 = ssub.s32 %s24, 2
        // Predicated region
        $region73: #{tpu_custom_call.1} parent=71 // pred_check
          %p3548 = pneg %p315
        $region74: #{tpu_custom_call.1} parent=71 // pred_check_branch
          %3550 = sbr.rel (%p3548) target = $region76
        $region75: #{tpu_custom_call.1} parent=71 // pred_region
          %s3551 = sand.u32 %s300, 1
          %s3552 = scalar_lea.sflag [#allocation3], %s3551
          %s3553 = sand.u32 %s300, 1
          %s3554 = smul.addr %s3553, 8
          %s3555 = scalar_lea.vmem [#allocation2], %s3554
          %3556 = dma.done %s3552, 128
        $region76: #{tpu_custom_call.1} parent=71 // pred_fallthru
          _
        // Predicated region
        $region77: #{tpu_custom_call.1} parent=71 // pred_check
          %p3557 = pneg %p343
        $region78: #{tpu_custom_call.1} parent=71 // pred_check_branch
          %3559 = sbr.rel (%p3557) target = $region80
        $region79: #{tpu_custom_call.1} parent=71 // pred_region
          %s3560 = sand.u32 %s328, 1
          %s3561 = scalar_lea.sflag [#allocation5], %s3560
          %s3562 = sand.u32 %s328, 1
          %s3563 = smul.addr %s3562, 32
          %s3564 = scalar_lea.vmem [#allocation4], %s3563
          %3565 = dma.done %s3561, 512
        $region80: #{tpu_custom_call.1} parent=71 // pred_fallthru
          _
      $region72: #{tpu_custom_call.1} parent=5 // pred_fallthru
        _
    $region6: #{tpu_custom_call.1} parent=1 // loop_footer
      %s28 = sadd.s32 1, %s24
    $region7: #{tpu_custom_call.1} parent=1 // loop_footer_branch
      %23 = sbr.rel target = $region3
    $region8: #{tpu_custom_call.1} parent=1 // loop_exit
      _
    %3566 = vsyncpa [#allocation3], 1
    %s3567 = scalar_lea.sflag [#allocation3], 1
    %3568 = vsyncpa %s3567, 1
    %3569 = vsyncpa [#allocation5], 1
    %s3570 = scalar_lea.sflag [#allocation5], 1
    %3571 = vsyncpa %s3570, 1

</llo_original>
